<compile_context>
chip_gen: v7x
topology: tpu7x:2x2x1
jax: 0.10.0
libtpu: 0.0.40
codegen_flags: <defaults>
</compile_context>

<pallas_src>
import jax
import jax.numpy as jnp
import numpy as np
from jax import lax
from jax.experimental import pallas as pl
from jax.experimental.pallas import tpu as pltpu


def _sigmoid(x):
    # One EUP op (tanh) + two cheap VPU ops, instead of a possible exp+reciprocal.
    return 0.5 * jnp.tanh(0.5 * x) + 0.5


def bilstm_kernel(gx_ref, whh_f_ref, whh_b_ref, len_ref, out_ref, hid_ref):
    """Interleaved forward+backward LSTM recurrence for one batch chunk.

    gx_ref   : (T, Bc, 8*Hp) bf16  x @ [Wih_f | Wih_b] + bias, gate order i|f|g|o,
                                   each gate block zero-padded from H to Hp lanes.
    whh_*_ref: (Hp, 4*Hp)    bf16  fused recurrent weights per direction.
    len_ref  : (Bc, 1)       int32 sequence lengths (0 for padded batch rows).
    out_ref  : (T, Bc, 2*Hp) f32   [h_fwd | h_bwd] at each ORIGINAL time step
                                   (zeros on padded steps).
    hid_ref  : (Bc, 2*Hp)    f32   [h_fwd_final | h_bwd_final].
    """
    T, Bc, _ = gx_ref.shape
    Hp = whh_f_ref.shape[0]
    G = 4 * Hp

    # Hoisted loads: weights + lengths are read once per kernel invocation.
    whh_f = whh_f_ref[...]
    whh_b = whh_b_ref[...]
    lens = len_ref[...]                        # (Bc, 1) int32

    def cell(gates, c):
        i = _sigmoid(gates[:, 0 * Hp:1 * Hp])
        f = _sigmoid(gates[:, 1 * Hp:2 * Hp])
        g = jnp.tanh(gates[:, 2 * Hp:3 * Hp])
        o = _sigmoid(gates[:, 3 * Hp:4 * Hp])
        c_new = f * c + i * g
        h_new = o * jnp.tanh(c_new)
        return h_new, c_new

    def step(t, carry):
        h_f, c_f, h_b, c_b = carry
        tb = T - 1 - t                         # backward direction's original time

        # --- forward direction, original time t ------------------------------
        g_f = gx_ref[t, :, 0:G].astype(jnp.float32) + jnp.dot(
            h_f.astype(jnp.bfloat16), whh_f, preferred_element_type=jnp.float32)
        hn_f, cn_f = cell(g_f, c_f)
        v_f = lens > t                         # (Bc, 1) packed-sequence validity
        h_f = jnp.where(v_f, hn_f, h_f)        # state frozen past sequence end
        c_f = jnp.where(v_f, cn_f, c_f)
        out_ref[t, :, 0:Hp] = jnp.where(v_f, hn_f, 0.0)

        # --- backward direction, original time T-1-t -------------------------
        g_b = gx_ref[tb, :, G:2 * G].astype(jnp.float32) + jnp.dot(
            h_b.astype(jnp.bfloat16), whh_b, preferred_element_type=jnp.float32)
        hn_b, cn_b = cell(g_b, c_b)
        v_b = lens > tb
        h_b = jnp.where(v_b, hn_b, h_b)
        c_b = jnp.where(v_b, cn_b, c_b)
        out_ref[tb, :, Hp:2 * Hp] = jnp.where(v_b, hn_b, 0.0)

        return h_f, c_f, h_b, c_b

    zeros = jnp.zeros((Bc, Hp), jnp.float32)
    # Partial unroll so loads/stores of step t overlap the dependent matmul/EUP
    # of step t+1, capped by a rough vreg budget (live gate tiles per step).
    gate_vregs = max(1, (Bc // 8) * (G // 128))
    unroll = max(1, min(T, 8, 32 // gate_vregs))
    h_f, _, h_b, _ = lax.fori_loop(0, T, step, (zeros, zeros, zeros, zeros),
                                   unroll=unroll)
    hid_ref[...] = jnp.concatenate([h_f, h_b], axis=-1)


def init_lstm_params(key, input_size, hidden_size):
    """Same parameter shapes / init range as torch.nn.LSTM(bidirectional=True)."""
    k = 1.0 / np.sqrt(hidden_size)
    names = ["weight_ih_l0", "weight_hh_l0", "bias_ih_l0", "bias_hh_l0",
             "weight_ih_l0_reverse", "weight_hh_l0_reverse",
             "bias_ih_l0_reverse", "bias_hh_l0_reverse"]
    shapes = [(4 * hidden_size, input_size), (4 * hidden_size, hidden_size),
              (4 * hidden_size,), (4 * hidden_size,)] * 2
    keys = jax.random.split(key, len(names))
    return {n: jax.random.uniform(kk, s, jnp.float32, -k, k)
            for n, kk, s in zip(names, keys, shapes)}


def _pack_dir(w_ih, w_hh, b_ih, b_hh, hp):
    """torch layout (4H, D)/(4H, H)/(4H,)+(4H,) -> fused, gate-padded kernel layout
    (D, 4Hp)/(Hp, 4Hp)/(4Hp,).  Gate order i|f|g|o preserved; each gate block is
    zero-padded from H to Hp lanes (harmless: padded pre-activations are exactly 0,
    so padded h/c columns stay 0 through the recurrence)."""
    fourH, D = w_ih.shape
    H = fourH // 4
    pad = hp - H
    wih = jnp.transpose(w_ih.reshape(4, H, D), (2, 0, 1))        # (D, 4, H)
    wih = jnp.pad(wih, ((0, 0), (0, 0), (0, pad))).reshape(D, 4 * hp)
    whh = jnp.transpose(w_hh.reshape(4, H, H), (2, 0, 1))        # (H, 4, H)
    whh = jnp.pad(whh, ((0, pad), (0, 0), (0, pad))).reshape(hp, 4 * hp)
    b = jnp.pad((b_ih + b_hh).reshape(4, H), ((0, 0), (0, pad))).reshape(4 * hp)
    return wih, whh, b


def _pick_batch_chunk(bp, t, hp, budget_bytes):
    """Largest multiple-of-8 divisor of bp whose double-buffered gx/out chunk
    footprint fits the VMEM budget."""
    best = 8
    for bc in range(8, bp + 1, 8):
        if bp % bc:
            continue
        per_chunk = t * bc * (8 * hp * 2 + 2 * hp * 4)           # gx(bf16)+out(f32)
        if 2 * per_chunk <= budget_bytes:
            best = bc
    return best


def rnn_encoder_forward(inputs, lengths, params, hidden_size):
    """inputs: (B, T, D) f32 batch-first, lengths: (B,) int.
    Returns (outputs, hidden) matching RNNEncoder.forward (lstm, 1 layer, bidir):
      outputs: (B, max(lengths), 2H), hidden: (B, 2H) = [h_fwd_last | h_bwd_last]."""
    B, T, D = inputs.shape
    H = hidden_size
    Hp = ((H + 127) // 128) * 128             # lane-aligned gate width
    Bp = ((B + 7) // 8) * 8                   # sublane-aligned batch

    x_tm = jnp.transpose(inputs, (1, 0, 2)).astype(jnp.float32)   # (T, B, D)
    lengths = lengths.astype(jnp.int32)
    if Bp != B:
        x_tm = jnp.pad(x_tm, ((0, 0), (0, Bp - B), (0, 0)))
        lengths_p = jnp.pad(lengths, (0, Bp - B))                 # padded rows: len 0
    else:
        lengths_p = lengths

    wih_f, whh_f, b_f = _pack_dir(params["weight_ih_l0"], params["weight_hh_l0"],
                                  params["bias_ih_l0"], params["bias_hh_l0"], Hp)
    wih_b, whh_b, b_b = _pack_dir(params["weight_ih_l0_reverse"],
                                  params["weight_hh_l0_reverse"],
                                  params["bias_ih_l0_reverse"],
                                  params["bias_hh_l0_reverse"], Hp)

    # Hoisted non-recurrent input projection: one (T*Bp, D) x (D, 8Hp) GEMM for
    # both directions; stored bf16 so the dominant per-step buffer is half-size.
    wih = jnp.concatenate([wih_f, wih_b], axis=1)                 # (D, 8Hp)
    bias = jnp.concatenate([b_f, b_b], axis=0)                    # (8Hp,)
    gx = (jnp.einsum("tbd,dg->tbg", x_tm, wih,
                     preferred_element_type=jnp.float32) + bias
          ).astype(jnp.bfloat16)                                  # (T, Bp, 8Hp)

    whh_f16 = whh_f.astype(jnp.bfloat16)                          # (Hp, 4Hp)
    whh_b16 = whh_b.astype(jnp.bfloat16)
    len_col = lengths_p.reshape(Bp, 1)                            # (Bp, 1) int32

    # Stream over batch chunks; "parallel" lets v7x split chunks across its two
    # TensorCores and overlaps chunk i+1's gx DMA with chunk i's recurrence.
    Bc = _pick_batch_chunk(Bp, T, Hp, budget_bytes=20 << 20)
    grid = (Bp // Bc,)

    per_chunk = (T * Bc * (8 * Hp * 2 + 2 * Hp * 4)               # gx + out blocks
                 + 2 * Hp * 4 * Hp * 2                            # both Whh
                 + Bc * 2 * Hp * 4 + 4096)                        # hid + lengths
    vmem_limit = int(min(max(2 * per_chunk + (4 << 20), 32 << 20), 64 << 20))

    grid_spec = pltpu.PrefetchScalarGridSpec(
        num_scalar_prefetch=0,
        grid=grid,
        in_specs=[
            pl.BlockSpec((T, Bc, 8 * Hp), lambda b: (0, b, 0)),   # gx
            pl.BlockSpec((Hp, 4 * Hp),    lambda b: (0, 0)),      # Whh fwd (resident)
            pl.BlockSpec((Hp, 4 * Hp),    lambda b: (0, 0)),      # Whh bwd (resident)
            pl.BlockSpec((Bc, 1),         lambda b: (b, 0)),      # lengths
        ],
        out_specs=[
            pl.BlockSpec((T, Bc, 2 * Hp), lambda b: (0, b, 0)),   # [h_fwd | h_bwd]
            pl.BlockSpec((Bc, 2 * Hp),    lambda b: (b, 0)),      # final hidden
        ],
    )

    out, hid = pl.pallas_call(
        bilstm_kernel,
        out_shape=(
            jax.ShapeDtypeStruct((T, Bp, 2 * Hp), jnp.float32),
            jax.ShapeDtypeStruct((Bp, 2 * Hp), jnp.float32),
        ),
        grid_spec=grid_spec,
        compiler_params=pltpu.CompilerParams(
            dimension_semantics=("parallel",),
            vmem_limit_bytes=vmem_limit),
    )(gx, whh_f16, whh_b16, len_col)

    if Hp == H:                               # already lane-dense [h_fwd | h_bwd]
        out_c, hid_c = out, hid
    else:                                     # strip per-gate lane padding
        out_c = jnp.concatenate([out[..., :H], out[..., Hp:Hp + H]], axis=-1)
        hid_c = jnp.concatenate([hid[:, :H], hid[:, Hp:Hp + H]], axis=-1)

    outputs = jnp.transpose(out_c, (1, 0, 2))[:B]                 # (B, T, 2H)
    hidden = hid_c[:B]                                            # (B, 2H)

    # pad_packed_sequence (no total_length) trims to the longest sequence in the
    # batch — inherently data-dependent, so done host-side (matches PyTorch).
    t_out = int(np.max(np.asarray(lengths)))
    return outputs[:, :t_out], hidden


# ----- pure-JAX f32 reference (packed bi-LSTM semantics) for correctness check -----
def _ref_direction(x_tm, lengths, wih, whh, b, reverse):
    T, B, _ = x_tm.shape
    H = whh.shape[0]
    t_idx = jnp.arange(T)
    xs = (x_tm[::-1], t_idx[::-1]) if reverse else (x_tm, t_idx)

    def step(carry, inp):
        h, c = carry
        x, t = inp
        gates = x @ wih + h @ whh + b
        i = jax.nn.sigmoid(gates[:, :H])
        f = jax.nn.sigmoid(gates[:, H:2 * H])
        g = jnp.tanh(gates[:, 2 * H:3 * H])
        o = jax.nn.sigmoid(gates[:, 3 * H:])
        c_new = f * c + i * g
        h_new = o * jnp.tanh(c_new)
        valid = (t < lengths)[:, None]
        h = jnp.where(valid, h_new, h)
        c = jnp.where(valid, c_new, c)
        return (h, c), jnp.where(valid, h_new, 0.0)

    (h, _), outs = lax.scan(step, (jnp.zeros((B, H), jnp.float32),
                                   jnp.zeros((B, H), jnp.float32)), xs)
    if reverse:
        outs = outs[::-1]
    return outs, h


if __name__ == "__main__":
    B, T, D, H = 2, 8, 16, 32
    key = jax.random.PRNGKey(0)
    k_x, k_p = jax.random.split(key)
    inputs = jax.random.normal(k_x, (B, T, D), jnp.float32)
    lengths = jnp.array([8, 5], jnp.int32)
    params = init_lstm_params(k_p, D, H)

    outputs, hidden = rnn_encoder_forward(inputs, lengths, params, H)
    jax.block_until_ready((outputs, hidden))

    # f32 reference; the kernel uses bf16 MXU operands, so tolerances are relaxed.
    x_tm = jnp.transpose(inputs, (1, 0, 2))
    wih_f, whh_f, b_f = _pack_dir(params["weight_ih_l0"], params["weight_hh_l0"],
                                  params["bias_ih_l0"], params["bias_hh_l0"], H)
    wih_b, whh_b, b_b = _pack_dir(params["weight_ih_l0_reverse"],
                                  params["weight_hh_l0_reverse"],
                                  params["bias_ih_l0_reverse"],
                                  params["bias_hh_l0_reverse"], H)
    outs_f, hf_ref = _ref_direction(x_tm, lengths, wih_f, whh_f, b_f, reverse=False)
    outs_b, hb_ref = _ref_direction(x_tm, lengths, wih_b, whh_b, b_b, reverse=True)
    t_out = int(np.max(np.asarray(lengths)))
    ref_out = jnp.transpose(jnp.concatenate([outs_f, outs_b], -1), (1, 0, 2))[:, :t_out]
    ref_hid = jnp.concatenate([hf_ref, hb_ref], -1)

    np.testing.assert_allclose(np.asarray(outputs), np.asarray(ref_out),
                               rtol=5e-2, atol=5e-2)
    np.testing.assert_allclose(np.asarray(hidden), np.asarray(ref_hid),
                               rtol=5e-2, atol=5e-2)
    print("KERNEL_OK")
</pallas_src>

<mosaic_0001>
module attributes {stable_mosaic.version = 11 : i64} {
  func.func @bilstm_kernel(%arg0: i32, %arg1: memref<8x8x1024xbf16, #tpu.memory_space<vmem>>, %arg2: memref<128x512xbf16, #tpu.memory_space<vmem>>, %arg3: memref<128x512xbf16, #tpu.memory_space<vmem>>, %arg4: memref<8x1xi32, #tpu.memory_space<vmem>>, %arg5: memref<8x8x256xf32, #tpu.memory_space<vmem>>, %arg6: memref<8x256xf32, #tpu.memory_space<vmem>>) attributes {dimension_semantics = [#tpu.dimension_semantics<parallel>], iteration_bounds = array<i64: 1>, scalar_prefetch = 0 : i64, scratch_operands = 0 : i64, tpu.core_type = #tpu.core_type<tc>, window_params = [{transform_indices = @transform_0, window_bounds = array<i64: 8, 8, 1024>}, {pipeline_mode = #tpu.pipeline_mode<synchronous>, transform_indices = @transform_1, window_bounds = array<i64: 128, 512>}, {pipeline_mode = #tpu.pipeline_mode<synchronous>, transform_indices = @transform_2, window_bounds = array<i64: 128, 512>}, {transform_indices = @transform_3, window_bounds = array<i64: 8, 1>}, {transform_indices = @transform_4, window_bounds = array<i64: 8, 8, 256>}, {transform_indices = @transform_5, window_bounds = array<i64: 8, 256>}]} {
    %c0 = arith.constant 0 : index
    %c0_0 = arith.constant 0 : index
    %0 = vector.load %arg2[%c0, %c0_0] : memref<128x512xbf16, #tpu.memory_space<vmem>>, vector<128x512xbf16>
    %c0_1 = arith.constant 0 : index
    %c0_2 = arith.constant 0 : index
    %1 = vector.load %arg3[%c0_1, %c0_2] : memref<128x512xbf16, #tpu.memory_space<vmem>>, vector<128x512xbf16>
    %c0_3 = arith.constant 0 : index
    %c0_4 = arith.constant 0 : index
    %2 = vector.load %arg4[%c0_3, %c0_4] : memref<8x1xi32, #tpu.memory_space<vmem>>, vector<8x1xi32>
    %cst = arith.constant 0.000000e+00 : f32
    %3 = vector.broadcast %cst : f32 to vector<8x128xf32>
    %c0_i32 = arith.constant 0 : i32
    %c7_i32 = arith.constant 7 : i32
    %4 = arith.subi %c7_i32, %c0_i32 : i32
    %5 = arith.index_cast %c0_i32 : i32 to index
    %c0_5 = arith.constant 0 : index
    %c0_6 = arith.constant 0 : index
    %6 = vector.load %arg1[%5, %c0_5, %c0_6] : memref<8x8x1024xbf16, #tpu.memory_space<vmem>>, vector<1x8x512xbf16>
    %7 = vector.shape_cast %6 : vector<1x8x512xbf16> to vector<8x512xbf16>
    %8 = arith.extf %7 : vector<8x512xbf16> to vector<8x512xf32>
    %9 = arith.truncf %3 : vector<8x128xf32> to vector<8x128xbf16>
    %cst_7 = arith.constant dense<0.000000e+00> : vector<8x512xf32>
    %10 = tpu.matmul %9, %0, %cst_7 {dimension_numbers = #tpu.dot_dimension_numbers<[1], [0], [0], [1], [0, 0, 1, 1], [], []>} : vector<8x128xbf16>, vector<128x512xbf16>, vector<8x512xf32> -> vector<8x512xf32>
    %11 = arith.addf %8, %10 : vector<8x512xf32>
    %12 = vector.extract_strided_slice %11 {offsets = [0, 0], sizes = [8, 128], strides = [1, 1]} : vector<8x512xf32> to vector<8x128xf32>
    %cst_8 = arith.constant 5.000000e-01 : f32
    %13 = vector.broadcast %cst_8 : f32 to vector<8x128xf32>
    %14 = arith.mulf %13, %12 : vector<8x128xf32>
    %15 = math.tanh %14 : vector<8x128xf32>
    %cst_9 = arith.constant 5.000000e-01 : f32
    %16 = vector.broadcast %cst_9 : f32 to vector<8x128xf32>
    %17 = arith.mulf %16, %15 : vector<8x128xf32>
    %cst_10 = arith.constant 5.000000e-01 : f32
    %18 = vector.broadcast %cst_10 : f32 to vector<8x128xf32>
    %19 = arith.addf %17, %18 : vector<8x128xf32>
    %20 = vector.extract_strided_slice %11 {offsets = [0, 128], sizes = [8, 128], strides = [1, 1]} : vector<8x512xf32> to vector<8x128xf32>
    %cst_11 = arith.constant 5.000000e-01 : f32
    %21 = vector.broadcast %cst_11 : f32 to vector<8x128xf32>
    %22 = arith.mulf %21, %20 : vector<8x128xf32>
    %23 = math.tanh %22 : vector<8x128xf32>
    %cst_12 = arith.constant 5.000000e-01 : f32
    %24 = vector.broadcast %cst_12 : f32 to vector<8x128xf32>
    %25 = arith.mulf %24, %23 : vector<8x128xf32>
    %cst_13 = arith.constant 5.000000e-01 : f32
    %26 = vector.broadcast %cst_13 : f32 to vector<8x128xf32>
    %27 = arith.addf %25, %26 : vector<8x128xf32>
    %28 = vector.extract_strided_slice %11 {offsets = [0, 256], sizes = [8, 128], strides = [1, 1]} : vector<8x512xf32> to vector<8x128xf32>
    %29 = math.tanh %28 : vector<8x128xf32>
    %30 = vector.extract_strided_slice %11 {offsets = [0, 384], sizes = [8, 128], strides = [1, 1]} : vector<8x512xf32> to vector<8x128xf32>
    %cst_14 = arith.constant 5.000000e-01 : f32
    %31 = vector.broadcast %cst_14 : f32 to vector<8x128xf32>
    %32 = arith.mulf %31, %30 : vector<8x128xf32>
    %33 = math.tanh %32 : vector<8x128xf32>
    %cst_15 = arith.constant 5.000000e-01 : f32
    %34 = vector.broadcast %cst_15 : f32 to vector<8x128xf32>
    %35 = arith.mulf %34, %33 : vector<8x128xf32>
    %cst_16 = arith.constant 5.000000e-01 : f32
    %36 = vector.broadcast %cst_16 : f32 to vector<8x128xf32>
    %37 = arith.addf %35, %36 : vector<8x128xf32>
    %38 = arith.mulf %27, %3 : vector<8x128xf32>
    %39 = arith.mulf %19, %29 : vector<8x128xf32>
    %40 = arith.addf %38, %39 : vector<8x128xf32>
    %41 = math.tanh %40 : vector<8x128xf32>
    %42 = arith.mulf %37, %41 : vector<8x128xf32>
    %43 = vector.broadcast %c0_i32 : i32 to vector<8x1xi32>
    %44 = arith.cmpi sgt, %2, %43 : vector<8x1xi32>
    %45 = vector.shape_cast %44 : vector<8x1xi1> to vector<8x1xi1>
    %46 = vector.broadcast %45 : vector<8x1xi1> to vector<8x128xi1>
    %47 = arith.select %46, %42, %3 : vector<8x128xi1>, vector<8x128xf32>
    %48 = vector.shape_cast %44 : vector<8x1xi1> to vector<8x1xi1>
    %49 = vector.broadcast %48 : vector<8x1xi1> to vector<8x128xi1>
    %50 = arith.select %49, %40, %3 : vector<8x128xi1>, vector<8x128xf32>
    %cst_17 = arith.constant 0.000000e+00 : f32
    %51 = vector.shape_cast %44 : vector<8x1xi1> to vector<8x1xi1>
    %52 = vector.broadcast %51 : vector<8x1xi1> to vector<8x128xi1>
    %53 = vector.broadcast %cst_17 : f32 to vector<8x128xf32>
    %54 = arith.select %52, %42, %53 : vector<8x128xi1>, vector<8x128xf32>
    %55 = arith.index_cast %c0_i32 : i32 to index
    %c0_18 = arith.constant 0 : index
    %c0_19 = arith.constant 0 : index
    %56 = vector.load %arg5[%55, %c0_18, %c0_19] : memref<8x8x256xf32, #tpu.memory_space<vmem>>, vector<1x8x128xf32>
    %57 = vector.shape_cast %56 : vector<1x8x128xf32> to vector<8x128xf32>
    %58 = vector.shape_cast %54 : vector<8x128xf32> to vector<1x8x128xf32>
    tpu.vector_store %arg5[%55, %c0_18, %c0_19], %58 {strides = array<i32>} : memref<8x8x256xf32, #tpu.memory_space<vmem>>, vector<1x8x128xf32>,
    %59 = arith.index_cast %4 : i32 to index
    %c0_20 = arith.constant 0 : index
    %c512 = arith.constant 512 : index
    %60 = vector.load %arg1[%59, %c0_20, %c512] : memref<8x8x1024xbf16, #tpu.memory_space<vmem>>, vector<1x8x512xbf16>
    %61 = vector.shape_cast %60 : vector<1x8x512xbf16> to vector<8x512xbf16>
    %62 = arith.extf %61 : vector<8x512xbf16> to vector<8x512xf32>
    %63 = arith.truncf %3 : vector<8x128xf32> to vector<8x128xbf16>
    %cst_21 = arith.constant dense<0.000000e+00> : vector<8x512xf32>
    %64 = tpu.matmul %63, %1, %cst_21 {dimension_numbers = #tpu.dot_dimension_numbers<[1], [0], [0], [1], [0, 0, 1, 1], [], []>} : vector<8x128xbf16>, vector<128x512xbf16>, vector<8x512xf32> -> vector<8x512xf32>
    %65 = arith.addf %62, %64 : vector<8x512xf32>
    %66 = vector.extract_strided_slice %65 {offsets = [0, 0], sizes = [8, 128], strides = [1, 1]} : vector<8x512xf32> to vector<8x128xf32>
    %cst_22 = arith.constant 5.000000e-01 : f32
    %67 = vector.broadcast %cst_22 : f32 to vector<8x128xf32>
    %68 = arith.mulf %67, %66 : vector<8x128xf32>
    %69 = math.tanh %68 : vector<8x128xf32>
    %cst_23 = arith.constant 5.000000e-01 : f32
    %70 = vector.broadcast %cst_23 : f32 to vector<8x128xf32>
    %71 = arith.mulf %70, %69 : vector<8x128xf32>
    %cst_24 = arith.constant 5.000000e-01 : f32
    %72 = vector.broadcast %cst_24 : f32 to vector<8x128xf32>
    %73 = arith.addf %71, %72 : vector<8x128xf32>
    %74 = vector.extract_strided_slice %65 {offsets = [0, 128], sizes = [8, 128], strides = [1, 1]} : vector<8x512xf32> to vector<8x128xf32>
    %cst_25 = arith.constant 5.000000e-01 : f32
    %75 = vector.broadcast %cst_25 : f32 to vector<8x128xf32>
    %76 = arith.mulf %75, %74 : vector<8x128xf32>
    %77 = math.tanh %76 : vector<8x128xf32>
    %cst_26 = arith.constant 5.000000e-01 : f32
    %78 = vector.broadcast %cst_26 : f32 to vector<8x128xf32>
    %79 = arith.mulf %78, %77 : vector<8x128xf32>
    %cst_27 = arith.constant 5.000000e-01 : f32
    %80 = vector.broadcast %cst_27 : f32 to vector<8x128xf32>
    %81 = arith.addf %79, %80 : vector<8x128xf32>
    %82 = vector.extract_strided_slice %65 {offsets = [0, 256], sizes = [8, 128], strides = [1, 1]} : vector<8x512xf32> to vector<8x128xf32>
    %83 = math.tanh %82 : vector<8x128xf32>
    %84 = vector.extract_strided_slice %65 {offsets = [0, 384], sizes = [8, 128], strides = [1, 1]} : vector<8x512xf32> to vector<8x128xf32>
    %cst_28 = arith.constant 5.000000e-01 : f32
    %85 = vector.broadcast %cst_28 : f32 to vector<8x128xf32>
    %86 = arith.mulf %85, %84 : vector<8x128xf32>
    %87 = math.tanh %86 : vector<8x128xf32>
    %cst_29 = arith.constant 5.000000e-01 : f32
    %88 = vector.broadcast %cst_29 : f32 to vector<8x128xf32>
    %89 = arith.mulf %88, %87 : vector<8x128xf32>
    %cst_30 = arith.constant 5.000000e-01 : f32
    %90 = vector.broadcast %cst_30 : f32 to vector<8x128xf32>
    %91 = arith.addf %89, %90 : vector<8x128xf32>
    %92 = arith.mulf %81, %3 : vector<8x128xf32>
    %93 = arith.mulf %73, %83 : vector<8x128xf32>
    %94 = arith.addf %92, %93 : vector<8x128xf32>
    %95 = math.tanh %94 : vector<8x128xf32>
    %96 = arith.mulf %91, %95 : vector<8x128xf32>
    %97 = vector.broadcast %4 : i32 to vector<8x1xi32>
    %98 = arith.cmpi sgt, %2, %97 : vector<8x1xi32>
    %99 = vector.shape_cast %98 : vector<8x1xi1> to vector<8x1xi1>
    %100 = vector.broadcast %99 : vector<8x1xi1> to vector<8x128xi1>
    %101 = arith.select %100, %96, %3 : vector<8x128xi1>, vector<8x128xf32>
    %102 = vector.shape_cast %98 : vector<8x1xi1> to vector<8x1xi1>
    %103 = vector.broadcast %102 : vector<8x1xi1> to vector<8x128xi1>
    %104 = arith.select %103, %94, %3 : vector<8x128xi1>, vector<8x128xf32>
    %cst_31 = arith.constant 0.000000e+00 : f32
    %105 = vector.shape_cast %98 : vector<8x1xi1> to vector<8x1xi1>
    %106 = vector.broadcast %105 : vector<8x1xi1> to vector<8x128xi1>
    %107 = vector.broadcast %cst_31 : f32 to vector<8x128xf32>
    %108 = arith.select %106, %96, %107 : vector<8x128xi1>, vector<8x128xf32>
    %109 = arith.index_cast %4 : i32 to index
    %c0_32 = arith.constant 0 : index
    %c128 = arith.constant 128 : index
    %110 = vector.load %arg5[%109, %c0_32, %c128] : memref<8x8x256xf32, #tpu.memory_space<vmem>>, vector<1x8x128xf32>
    %111 = vector.shape_cast %110 : vector<1x8x128xf32> to vector<8x128xf32>
    %112 = vector.shape_cast %108 : vector<8x128xf32> to vector<1x8x128xf32>
    tpu.vector_store %arg5[%109, %c0_32, %c128], %112 {strides = array<i32>} : memref<8x8x256xf32, #tpu.memory_space<vmem>>, vector<1x8x128xf32>,
    %c1_i32 = arith.constant 1 : i32
    %c7_i32_33 = arith.constant 7 : i32
    %113 = arith.subi %c7_i32_33, %c1_i32 : i32
    %114 = arith.index_cast %c1_i32 : i32 to index
    %c0_34 = arith.constant 0 : index
    %c0_35 = arith.constant 0 : index
    %115 = vector.load %arg1[%114, %c0_34, %c0_35] : memref<8x8x1024xbf16, #tpu.memory_space<vmem>>, vector<1x8x512xbf16>
    %116 = vector.shape_cast %115 : vector<1x8x512xbf16> to vector<8x512xbf16>
    %117 = arith.extf %116 : vector<8x512xbf16> to vector<8x512xf32>
    %118 = arith.truncf %47 : vector<8x128xf32> to vector<8x128xbf16>
    %cst_36 = arith.constant dense<0.000000e+00> : vector<8x512xf32>
    %119 = tpu.matmul %118, %0, %cst_36 {dimension_numbers = #tpu.dot_dimension_numbers<[1], [0], [0], [1], [0, 0, 1, 1], [], []>} : vector<8x128xbf16>, vector<128x512xbf16>, vector<8x512xf32> -> vector<8x512xf32>
    %120 = arith.addf %117, %119 : vector<8x512xf32>
    %121 = vector.extract_strided_slice %120 {offsets = [0, 0], sizes = [8, 128], strides = [1, 1]} : vector<8x512xf32> to vector<8x128xf32>
    %cst_37 = arith.constant 5.000000e-01 : f32
    %122 = vector.broadcast %cst_37 : f32 to vector<8x128xf32>
    %123 = arith.mulf %122, %121 : vector<8x128xf32>
    %124 = math.tanh %123 : vector<8x128xf32>
    %cst_38 = arith.constant 5.000000e-01 : f32
    %125 = vector.broadcast %cst_38 : f32 to vector<8x128xf32>
    %126 = arith.mulf %125, %124 : vector<8x128xf32>
    %cst_39 = arith.constant 5.000000e-01 : f32
    %127 = vector.broadcast %cst_39 : f32 to vector<8x128xf32>
    %128 = arith.addf %126, %127 : vector<8x128xf32>
    %129 = vector.extract_strided_slice %120 {offsets = [0, 128], sizes = [8, 128], strides = [1, 1]} : vector<8x512xf32> to vector<8x128xf32>
    %cst_40 = arith.constant 5.000000e-01 : f32
    %130 = vector.broadcast %cst_40 : f32 to vector<8x128xf32>
    %131 = arith.mulf %130, %129 : vector<8x128xf32>
    %132 = math.tanh %131 : vector<8x128xf32>
    %cst_41 = arith.constant 5.000000e-01 : f32
    %133 = vector.broadcast %cst_41 : f32 to vector<8x128xf32>
    %134 = arith.mulf %133, %132 : vector<8x128xf32>
    %cst_42 = arith.constant 5.000000e-01 : f32
    %135 = vector.broadcast %cst_42 : f32 to vector<8x128xf32>
    %136 = arith.addf %134, %135 : vector<8x128xf32>
    %137 = vector.extract_strided_slice %120 {offsets = [0, 256], sizes = [8, 128], strides = [1, 1]} : vector<8x512xf32> to vector<8x128xf32>
    %138 = math.tanh %137 : vector<8x128xf32>
    %139 = vector.extract_strided_slice %120 {offsets = [0, 384], sizes = [8, 128], strides = [1, 1]} : vector<8x512xf32> to vector<8x128xf32>
    %cst_43 = arith.constant 5.000000e-01 : f32
    %140 = vector.broadcast %cst_43 : f32 to vector<8x128xf32>
    %141 = arith.mulf %140, %139 : vector<8x128xf32>
    %142 = math.tanh %141 : vector<8x128xf32>
    %cst_44 = arith.constant 5.000000e-01 : f32
    %143 = vector.broadcast %cst_44 : f32 to vector<8x128xf32>
    %144 = arith.mulf %143, %142 : vector<8x128xf32>
    %cst_45 = arith.constant 5.000000e-01 : f32
    %145 = vector.broadcast %cst_45 : f32 to vector<8x128xf32>
    %146 = arith.addf %144, %145 : vector<8x128xf32>
    %147 = arith.mulf %136, %50 : vector<8x128xf32>
    %148 = arith.mulf %128, %138 : vector<8x128xf32>
    %149 = arith.addf %147, %148 : vector<8x128xf32>
    %150 = math.tanh %149 : vector<8x128xf32>
    %151 = arith.mulf %146, %150 : vector<8x128xf32>
    %152 = vector.broadcast %c1_i32 : i32 to vector<8x1xi32>
    %153 = arith.cmpi sgt, %2, %152 : vector<8x1xi32>
    %154 = vector.shape_cast %153 : vector<8x1xi1> to vector<8x1xi1>
    %155 = vector.broadcast %154 : vector<8x1xi1> to vector<8x128xi1>
    %156 = arith.select %155, %151, %47 : vector<8x128xi1>, vector<8x128xf32>
    %157 = vector.shape_cast %153 : vector<8x1xi1> to vector<8x1xi1>
    %158 = vector.broadcast %157 : vector<8x1xi1> to vector<8x128xi1>
    %159 = arith.select %158, %149, %50 : vector<8x128xi1>, vector<8x128xf32>
    %cst_46 = arith.constant 0.000000e+00 : f32
    %160 = vector.shape_cast %153 : vector<8x1xi1> to vector<8x1xi1>
    %161 = vector.broadcast %160 : vector<8x1xi1> to vector<8x128xi1>
    %162 = vector.broadcast %cst_46 : f32 to vector<8x128xf32>
    %163 = arith.select %161, %151, %162 : vector<8x128xi1>, vector<8x128xf32>
    %164 = arith.index_cast %c1_i32 : i32 to index
    %c0_47 = arith.constant 0 : index
    %c0_48 = arith.constant 0 : index
    %165 = vector.load %arg5[%164, %c0_47, %c0_48] : memref<8x8x256xf32, #tpu.memory_space<vmem>>, vector<1x8x128xf32>
    %166 = vector.shape_cast %165 : vector<1x8x128xf32> to vector<8x128xf32>
    %167 = vector.shape_cast %163 : vector<8x128xf32> to vector<1x8x128xf32>
    tpu.vector_store %arg5[%164, %c0_47, %c0_48], %167 {strides = array<i32>} : memref<8x8x256xf32, #tpu.memory_space<vmem>>, vector<1x8x128xf32>,
    %168 = arith.index_cast %113 : i32 to index
    %c0_49 = arith.constant 0 : index
    %c512_50 = arith.constant 512 : index
    %169 = vector.load %arg1[%168, %c0_49, %c512_50] : memref<8x8x1024xbf16, #tpu.memory_space<vmem>>, vector<1x8x512xbf16>
    %170 = vector.shape_cast %169 : vector<1x8x512xbf16> to vector<8x512xbf16>
    %171 = arith.extf %170 : vector<8x512xbf16> to vector<8x512xf32>
    %172 = arith.truncf %101 : vector<8x128xf32> to vector<8x128xbf16>
    %cst_51 = arith.constant dense<0.000000e+00> : vector<8x512xf32>
    %173 = tpu.matmul %172, %1, %cst_51 {dimension_numbers = #tpu.dot_dimension_numbers<[1], [0], [0], [1], [0, 0, 1, 1], [], []>} : vector<8x128xbf16>, vector<128x512xbf16>, vector<8x512xf32> -> vector<8x512xf32>
    %174 = arith.addf %171, %173 : vector<8x512xf32>
    %175 = vector.extract_strided_slice %174 {offsets = [0, 0], sizes = [8, 128], strides = [1, 1]} : vector<8x512xf32> to vector<8x128xf32>
    %cst_52 = arith.constant 5.000000e-01 : f32
    %176 = vector.broadcast %cst_52 : f32 to vector<8x128xf32>
    %177 = arith.mulf %176, %175 : vector<8x128xf32>
    %178 = math.tanh %177 : vector<8x128xf32>
    %cst_53 = arith.constant 5.000000e-01 : f32
    %179 = vector.broadcast %cst_53 : f32 to vector<8x128xf32>
    %180 = arith.mulf %179, %178 : vector<8x128xf32>
    %cst_54 = arith.constant 5.000000e-01 : f32
    %181 = vector.broadcast %cst_54 : f32 to vector<8x128xf32>
    %182 = arith.addf %180, %181 : vector<8x128xf32>
    %183 = vector.extract_strided_slice %174 {offsets = [0, 128], sizes = [8, 128], strides = [1, 1]} : vector<8x512xf32> to vector<8x128xf32>
    %cst_55 = arith.constant 5.000000e-01 : f32
    %184 = vector.broadcast %cst_55 : f32 to vector<8x128xf32>
    %185 = arith.mulf %184, %183 : vector<8x128xf32>
    %186 = math.tanh %185 : vector<8x128xf32>
    %cst_56 = arith.constant 5.000000e-01 : f32
    %187 = vector.broadcast %cst_56 : f32 to vector<8x128xf32>
    %188 = arith.mulf %187, %186 : vector<8x128xf32>
    %cst_57 = arith.constant 5.000000e-01 : f32
    %189 = vector.broadcast %cst_57 : f32 to vector<8x128xf32>
    %190 = arith.addf %188, %189 : vector<8x128xf32>
    %191 = vector.extract_strided_slice %174 {offsets = [0, 256], sizes = [8, 128], strides = [1, 1]} : vector<8x512xf32> to vector<8x128xf32>
    %192 = math.tanh %191 : vector<8x128xf32>
    %193 = vector.extract_strided_slice %174 {offsets = [0, 384], sizes = [8, 128], strides = [1, 1]} : vector<8x512xf32> to vector<8x128xf32>
    %cst_58 = arith.constant 5.000000e-01 : f32
    %194 = vector.broadcast %cst_58 : f32 to vector<8x128xf32>
    %195 = arith.mulf %194, %193 : vector<8x128xf32>
    %196 = math.tanh %195 : vector<8x128xf32>
    %cst_59 = arith.constant 5.000000e-01 : f32
    %197 = vector.broadcast %cst_59 : f32 to vector<8x128xf32>
    %198 = arith.mulf %197, %196 : vector<8x128xf32>
    %cst_60 = arith.constant 5.000000e-01 : f32
    %199 = vector.broadcast %cst_60 : f32 to vector<8x128xf32>
    %200 = arith.addf %198, %199 : vector<8x128xf32>
    %201 = arith.mulf %190, %104 : vector<8x128xf32>
    %202 = arith.mulf %182, %192 : vector<8x128xf32>
    %203 = arith.addf %201, %202 : vector<8x128xf32>
    %204 = math.tanh %203 : vector<8x128xf32>
    %205 = arith.mulf %200, %204 : vector<8x128xf32>
    %206 = vector.broadcast %113 : i32 to vector<8x1xi32>
    %207 = arith.cmpi sgt, %2, %206 : vector<8x1xi32>
    %208 = vector.shape_cast %207 : vector<8x1xi1> to vector<8x1xi1>
    %209 = vector.broadcast %208 : vector<8x1xi1> to vector<8x128xi1>
    %210 = arith.select %209, %205, %101 : vector<8x128xi1>, vector<8x128xf32>
    %211 = vector.shape_cast %207 : vector<8x1xi1> to vector<8x1xi1>
    %212 = vector.broadcast %211 : vector<8x1xi1> to vector<8x128xi1>
    %213 = arith.select %212, %203, %104 : vector<8x128xi1>, vector<8x128xf32>
    %cst_61 = arith.constant 0.000000e+00 : f32
    %214 = vector.shape_cast %207 : vector<8x1xi1> to vector<8x1xi1>
    %215 = vector.broadcast %214 : vector<8x1xi1> to vector<8x128xi1>
    %216 = vector.broadcast %cst_61 : f32 to vector<8x128xf32>
    %217 = arith.select %215, %205, %216 : vector<8x128xi1>, vector<8x128xf32>
    %218 = arith.index_cast %113 : i32 to index
    %c0_62 = arith.constant 0 : index
    %c128_63 = arith.constant 128 : index
    %219 = vector.load %arg5[%218, %c0_62, %c128_63] : memref<8x8x256xf32, #tpu.memory_space<vmem>>, vector<1x8x128xf32>
    %220 = vector.shape_cast %219 : vector<1x8x128xf32> to vector<8x128xf32>
    %221 = vector.shape_cast %217 : vector<8x128xf32> to vector<1x8x128xf32>
    tpu.vector_store %arg5[%218, %c0_62, %c128_63], %221 {strides = array<i32>} : memref<8x8x256xf32, #tpu.memory_space<vmem>>, vector<1x8x128xf32>,
    %c2_i32 = arith.constant 2 : i32
    %c7_i32_64 = arith.constant 7 : i32
    %222 = arith.subi %c7_i32_64, %c2_i32 : i32
    %223 = arith.index_cast %c2_i32 : i32 to index
    %c0_65 = arith.constant 0 : index
    %c0_66 = arith.constant 0 : index
    %224 = vector.load %arg1[%223, %c0_65, %c0_66] : memref<8x8x1024xbf16, #tpu.memory_space<vmem>>, vector<1x8x512xbf16>
    %225 = vector.shape_cast %224 : vector<1x8x512xbf16> to vector<8x512xbf16>
    %226 = arith.extf %225 : vector<8x512xbf16> to vector<8x512xf32>
    %227 = arith.truncf %156 : vector<8x128xf32> to vector<8x128xbf16>
    %cst_67 = arith.constant dense<0.000000e+00> : vector<8x512xf32>
    %228 = tpu.matmul %227, %0, %cst_67 {dimension_numbers = #tpu.dot_dimension_numbers<[1], [0], [0], [1], [0, 0, 1, 1], [], []>} : vector<8x128xbf16>, vector<128x512xbf16>, vector<8x512xf32> -> vector<8x512xf32>
    %229 = arith.addf %226, %228 : vector<8x512xf32>
    %230 = vector.extract_strided_slice %229 {offsets = [0, 0], sizes = [8, 128], strides = [1, 1]} : vector<8x512xf32> to vector<8x128xf32>
    %cst_68 = arith.constant 5.000000e-01 : f32
    %231 = vector.broadcast %cst_68 : f32 to vector<8x128xf32>
    %232 = arith.mulf %231, %230 : vector<8x128xf32>
    %233 = math.tanh %232 : vector<8x128xf32>
    %cst_69 = arith.constant 5.000000e-01 : f32
    %234 = vector.broadcast %cst_69 : f32 to vector<8x128xf32>
    %235 = arith.mulf %234, %233 : vector<8x128xf32>
    %cst_70 = arith.constant 5.000000e-01 : f32
    %236 = vector.broadcast %cst_70 : f32 to vector<8x128xf32>
    %237 = arith.addf %235, %236 : vector<8x128xf32>
    %238 = vector.extract_strided_slice %229 {offsets = [0, 128], sizes = [8, 128], strides = [1, 1]} : vector<8x512xf32> to vector<8x128xf32>
    %cst_71 = arith.constant 5.000000e-01 : f32
    %239 = vector.broadcast %cst_71 : f32 to vector<8x128xf32>
    %240 = arith.mulf %239, %238 : vector<8x128xf32>
    %241 = math.tanh %240 : vector<8x128xf32>
    %cst_72 = arith.constant 5.000000e-01 : f32
    %242 = vector.broadcast %cst_72 : f32 to vector<8x128xf32>
    %243 = arith.mulf %242, %241 : vector<8x128xf32>
    %cst_73 = arith.constant 5.000000e-01 : f32
    %244 = vector.broadcast %cst_73 : f32 to vector<8x128xf32>
    %245 = arith.addf %243, %244 : vector<8x128xf32>
    %246 = vector.extract_strided_slice %229 {offsets = [0, 256], sizes = [8, 128], strides = [1, 1]} : vector<8x512xf32> to vector<8x128xf32>
    %247 = math.tanh %246 : vector<8x128xf32>
    %248 = vector.extract_strided_slice %229 {offsets = [0, 384], sizes = [8, 128], strides = [1, 1]} : vector<8x512xf32> to vector<8x128xf32>
    %cst_74 = arith.constant 5.000000e-01 : f32
    %249 = vector.broadcast %cst_74 : f32 to vector<8x128xf32>
    %250 = arith.mulf %249, %248 : vector<8x128xf32>
    %251 = math.tanh %250 : vector<8x128xf32>
    %cst_75 = arith.constant 5.000000e-01 : f32
    %252 = vector.broadcast %cst_75 : f32 to vector<8x128xf32>
    %253 = arith.mulf %252, %251 : vector<8x128xf32>
    %cst_76 = arith.constant 5.000000e-01 : f32
    %254 = vector.broadcast %cst_76 : f32 to vector<8x128xf32>
    %255 = arith.addf %253, %254 : vector<8x128xf32>
    %256 = arith.mulf %245, %159 : vector<8x128xf32>
    %257 = arith.mulf %237, %247 : vector<8x128xf32>
    %258 = arith.addf %256, %257 : vector<8x128xf32>
    %259 = math.tanh %258 : vector<8x128xf32>
    %260 = arith.mulf %255, %259 : vector<8x128xf32>
    %261 = vector.broadcast %c2_i32 : i32 to vector<8x1xi32>
    %262 = arith.cmpi sgt, %2, %261 : vector<8x1xi32>
    %263 = vector.shape_cast %262 : vector<8x1xi1> to vector<8x1xi1>
    %264 = vector.broadcast %263 : vector<8x1xi1> to vector<8x128xi1>
    %265 = arith.select %264, %260, %156 : vector<8x128xi1>, vector<8x128xf32>
    %266 = vector.shape_cast %262 : vector<8x1xi1> to vector<8x1xi1>
    %267 = vector.broadcast %266 : vector<8x1xi1> to vector<8x128xi1>
    %268 = arith.select %267, %258, %159 : vector<8x128xi1>, vector<8x128xf32>
    %cst_77 = arith.constant 0.000000e+00 : f32
    %269 = vector.shape_cast %262 : vector<8x1xi1> to vector<8x1xi1>
    %270 = vector.broadcast %269 : vector<8x1xi1> to vector<8x128xi1>
    %271 = vector.broadcast %cst_77 : f32 to vector<8x128xf32>
    %272 = arith.select %270, %260, %271 : vector<8x128xi1>, vector<8x128xf32>
    %273 = arith.index_cast %c2_i32 : i32 to index
    %c0_78 = arith.constant 0 : index
    %c0_79 = arith.constant 0 : index
    %274 = vector.load %arg5[%273, %c0_78, %c0_79] : memref<8x8x256xf32, #tpu.memory_space<vmem>>, vector<1x8x128xf32>
    %275 = vector.shape_cast %274 : vector<1x8x128xf32> to vector<8x128xf32>
    %276 = vector.shape_cast %272 : vector<8x128xf32> to vector<1x8x128xf32>
    tpu.vector_store %arg5[%273, %c0_78, %c0_79], %276 {strides = array<i32>} : memref<8x8x256xf32, #tpu.memory_space<vmem>>, vector<1x8x128xf32>,
    %277 = arith.index_cast %222 : i32 to index
    %c0_80 = arith.constant 0 : index
    %c512_81 = arith.constant 512 : index
    %278 = vector.load %arg1[%277, %c0_80, %c512_81] : memref<8x8x1024xbf16, #tpu.memory_space<vmem>>, vector<1x8x512xbf16>
    %279 = vector.shape_cast %278 : vector<1x8x512xbf16> to vector<8x512xbf16>
    %280 = arith.extf %279 : vector<8x512xbf16> to vector<8x512xf32>
    %281 = arith.truncf %210 : vector<8x128xf32> to vector<8x128xbf16>
    %cst_82 = arith.constant dense<0.000000e+00> : vector<8x512xf32>
    %282 = tpu.matmul %281, %1, %cst_82 {dimension_numbers = #tpu.dot_dimension_numbers<[1], [0], [0], [1], [0, 0, 1, 1], [], []>} : vector<8x128xbf16>, vector<128x512xbf16>, vector<8x512xf32> -> vector<8x512xf32>
    %283 = arith.addf %280, %282 : vector<8x512xf32>
    %284 = vector.extract_strided_slice %283 {offsets = [0, 0], sizes = [8, 128], strides = [1, 1]} : vector<8x512xf32> to vector<8x128xf32>
    %cst_83 = arith.constant 5.000000e-01 : f32
    %285 = vector.broadcast %cst_83 : f32 to vector<8x128xf32>
    %286 = arith.mulf %285, %284 : vector<8x128xf32>
    %287 = math.tanh %286 : vector<8x128xf32>
    %cst_84 = arith.constant 5.000000e-01 : f32
    %288 = vector.broadcast %cst_84 : f32 to vector<8x128xf32>
    %289 = arith.mulf %288, %287 : vector<8x128xf32>
    %cst_85 = arith.constant 5.000000e-01 : f32
    %290 = vector.broadcast %cst_85 : f32 to vector<8x128xf32>
    %291 = arith.addf %289, %290 : vector<8x128xf32>
    %292 = vector.extract_strided_slice %283 {offsets = [0, 128], sizes = [8, 128], strides = [1, 1]} : vector<8x512xf32> to vector<8x128xf32>
    %cst_86 = arith.constant 5.000000e-01 : f32
    %293 = vector.broadcast %cst_86 : f32 to vector<8x128xf32>
    %294 = arith.mulf %293, %292 : vector<8x128xf32>
    %295 = math.tanh %294 : vector<8x128xf32>
    %cst_87 = arith.constant 5.000000e-01 : f32
    %296 = vector.broadcast %cst_87 : f32 to vector<8x128xf32>
    %297 = arith.mulf %296, %295 : vector<8x128xf32>
    %cst_88 = arith.constant 5.000000e-01 : f32
    %298 = vector.broadcast %cst_88 : f32 to vector<8x128xf32>
    %299 = arith.addf %297, %298 : vector<8x128xf32>
    %300 = vector.extract_strided_slice %283 {offsets = [0, 256], sizes = [8, 128], strides = [1, 1]} : vector<8x512xf32> to vector<8x128xf32>
    %301 = math.tanh %300 : vector<8x128xf32>
    %302 = vector.extract_strided_slice %283 {offsets = [0, 384], sizes = [8, 128], strides = [1, 1]} : vector<8x512xf32> to vector<8x128xf32>
    %cst_89 = arith.constant 5.000000e-01 : f32
    %303 = vector.broadcast %cst_89 : f32 to vector<8x128xf32>
    %304 = arith.mulf %303, %302 : vector<8x128xf32>
    %305 = math.tanh %304 : vector<8x128xf32>
    %cst_90 = arith.constant 5.000000e-01 : f32
    %306 = vector.broadcast %cst_90 : f32 to vector<8x128xf32>
    %307 = arith.mulf %306, %305 : vector<8x128xf32>
    %cst_91 = arith.constant 5.000000e-01 : f32
    %308 = vector.broadcast %cst_91 : f32 to vector<8x128xf32>
    %309 = arith.addf %307, %308 : vector<8x128xf32>
    %310 = arith.mulf %299, %213 : vector<8x128xf32>
    %311 = arith.mulf %291, %301 : vector<8x128xf32>
    %312 = arith.addf %310, %311 : vector<8x128xf32>
    %313 = math.tanh %312 : vector<8x128xf32>
    %314 = arith.mulf %309, %313 : vector<8x128xf32>
    %315 = vector.broadcast %222 : i32 to vector<8x1xi32>
    %316 = arith.cmpi sgt, %2, %315 : vector<8x1xi32>
    %317 = vector.shape_cast %316 : vector<8x1xi1> to vector<8x1xi1>
    %318 = vector.broadcast %317 : vector<8x1xi1> to vector<8x128xi1>
    %319 = arith.select %318, %314, %210 : vector<8x128xi1>, vector<8x128xf32>
    %320 = vector.shape_cast %316 : vector<8x1xi1> to vector<8x1xi1>
    %321 = vector.broadcast %320 : vector<8x1xi1> to vector<8x128xi1>
    %322 = arith.select %321, %312, %213 : vector<8x128xi1>, vector<8x128xf32>
    %cst_92 = arith.constant 0.000000e+00 : f32
    %323 = vector.shape_cast %316 : vector<8x1xi1> to vector<8x1xi1>
    %324 = vector.broadcast %323 : vector<8x1xi1> to vector<8x128xi1>
    %325 = vector.broadcast %cst_92 : f32 to vector<8x128xf32>
    %326 = arith.select %324, %314, %325 : vector<8x128xi1>, vector<8x128xf32>
    %327 = arith.index_cast %222 : i32 to index
    %c0_93 = arith.constant 0 : index
    %c128_94 = arith.constant 128 : index
    %328 = vector.load %arg5[%327, %c0_93, %c128_94] : memref<8x8x256xf32, #tpu.memory_space<vmem>>, vector<1x8x128xf32>
    %329 = vector.shape_cast %328 : vector<1x8x128xf32> to vector<8x128xf32>
    %330 = vector.shape_cast %326 : vector<8x128xf32> to vector<1x8x128xf32>
    tpu.vector_store %arg5[%327, %c0_93, %c128_94], %330 {strides = array<i32>} : memref<8x8x256xf32, #tpu.memory_space<vmem>>, vector<1x8x128xf32>,
    %c3_i32 = arith.constant 3 : i32
    %c7_i32_95 = arith.constant 7 : i32
    %331 = arith.subi %c7_i32_95, %c3_i32 : i32
    %332 = arith.index_cast %c3_i32 : i32 to index
    %c0_96 = arith.constant 0 : index
    %c0_97 = arith.constant 0 : index
    %333 = vector.load %arg1[%332, %c0_96, %c0_97] : memref<8x8x1024xbf16, #tpu.memory_space<vmem>>, vector<1x8x512xbf16>
    %334 = vector.shape_cast %333 : vector<1x8x512xbf16> to vector<8x512xbf16>
    %335 = arith.extf %334 : vector<8x512xbf16> to vector<8x512xf32>
    %336 = arith.truncf %265 : vector<8x128xf32> to vector<8x128xbf16>
    %cst_98 = arith.constant dense<0.000000e+00> : vector<8x512xf32>
    %337 = tpu.matmul %336, %0, %cst_98 {dimension_numbers = #tpu.dot_dimension_numbers<[1], [0], [0], [1], [0, 0, 1, 1], [], []>} : vector<8x128xbf16>, vector<128x512xbf16>, vector<8x512xf32> -> vector<8x512xf32>
    %338 = arith.addf %335, %337 : vector<8x512xf32>
    %339 = vector.extract_strided_slice %338 {offsets = [0, 0], sizes = [8, 128], strides = [1, 1]} : vector<8x512xf32> to vector<8x128xf32>
    %cst_99 = arith.constant 5.000000e-01 : f32
    %340 = vector.broadcast %cst_99 : f32 to vector<8x128xf32>
    %341 = arith.mulf %340, %339 : vector<8x128xf32>
    %342 = math.tanh %341 : vector<8x128xf32>
    %cst_100 = arith.constant 5.000000e-01 : f32
    %343 = vector.broadcast %cst_100 : f32 to vector<8x128xf32>
    %344 = arith.mulf %343, %342 : vector<8x128xf32>
    %cst_101 = arith.constant 5.000000e-01 : f32
    %345 = vector.broadcast %cst_101 : f32 to vector<8x128xf32>
    %346 = arith.addf %344, %345 : vector<8x128xf32>
    %347 = vector.extract_strided_slice %338 {offsets = [0, 128], sizes = [8, 128], strides = [1, 1]} : vector<8x512xf32> to vector<8x128xf32>
    %cst_102 = arith.constant 5.000000e-01 : f32
    %348 = vector.broadcast %cst_102 : f32 to vector<8x128xf32>
    %349 = arith.mulf %348, %347 : vector<8x128xf32>
    %350 = math.tanh %349 : vector<8x128xf32>
    %cst_103 = arith.constant 5.000000e-01 : f32
    %351 = vector.broadcast %cst_103 : f32 to vector<8x128xf32>
    %352 = arith.mulf %351, %350 : vector<8x128xf32>
    %cst_104 = arith.constant 5.000000e-01 : f32
    %353 = vector.broadcast %cst_104 : f32 to vector<8x128xf32>
    %354 = arith.addf %352, %353 : vector<8x128xf32>
    %355 = vector.extract_strided_slice %338 {offsets = [0, 256], sizes = [8, 128], strides = [1, 1]} : vector<8x512xf32> to vector<8x128xf32>
    %356 = math.tanh %355 : vector<8x128xf32>
    %357 = vector.extract_strided_slice %338 {offsets = [0, 384], sizes = [8, 128], strides = [1, 1]} : vector<8x512xf32> to vector<8x128xf32>
    %cst_105 = arith.constant 5.000000e-01 : f32
    %358 = vector.broadcast %cst_105 : f32 to vector<8x128xf32>
    %359 = arith.mulf %358, %357 : vector<8x128xf32>
    %360 = math.tanh %359 : vector<8x128xf32>
    %cst_106 = arith.constant 5.000000e-01 : f32
    %361 = vector.broadcast %cst_106 : f32 to vector<8x128xf32>
    %362 = arith.mulf %361, %360 : vector<8x128xf32>
    %cst_107 = arith.constant 5.000000e-01 : f32
    %363 = vector.broadcast %cst_107 : f32 to vector<8x128xf32>
    %364 = arith.addf %362, %363 : vector<8x128xf32>
    %365 = arith.mulf %354, %268 : vector<8x128xf32>
    %366 = arith.mulf %346, %356 : vector<8x128xf32>
    %367 = arith.addf %365, %366 : vector<8x128xf32>
    %368 = math.tanh %367 : vector<8x128xf32>
    %369 = arith.mulf %364, %368 : vector<8x128xf32>
    %370 = vector.broadcast %c3_i32 : i32 to vector<8x1xi32>
    %371 = arith.cmpi sgt, %2, %370 : vector<8x1xi32>
    %372 = vector.shape_cast %371 : vector<8x1xi1> to vector<8x1xi1>
    %373 = vector.broadcast %372 : vector<8x1xi1> to vector<8x128xi1>
    %374 = arith.select %373, %369, %265 : vector<8x128xi1>, vector<8x128xf32>
    %375 = vector.shape_cast %371 : vector<8x1xi1> to vector<8x1xi1>
    %376 = vector.broadcast %375 : vector<8x1xi1> to vector<8x128xi1>
    %377 = arith.select %376, %367, %268 : vector<8x128xi1>, vector<8x128xf32>
    %cst_108 = arith.constant 0.000000e+00 : f32
    %378 = vector.shape_cast %371 : vector<8x1xi1> to vector<8x1xi1>
    %379 = vector.broadcast %378 : vector<8x1xi1> to vector<8x128xi1>
    %380 = vector.broadcast %cst_108 : f32 to vector<8x128xf32>
    %381 = arith.select %379, %369, %380 : vector<8x128xi1>, vector<8x128xf32>
    %382 = arith.index_cast %c3_i32 : i32 to index
    %c0_109 = arith.constant 0 : index
    %c0_110 = arith.constant 0 : index
    %383 = vector.load %arg5[%382, %c0_109, %c0_110] : memref<8x8x256xf32, #tpu.memory_space<vmem>>, vector<1x8x128xf32>
    %384 = vector.shape_cast %383 : vector<1x8x128xf32> to vector<8x128xf32>
    %385 = vector.shape_cast %381 : vector<8x128xf32> to vector<1x8x128xf32>
    tpu.vector_store %arg5[%382, %c0_109, %c0_110], %385 {strides = array<i32>} : memref<8x8x256xf32, #tpu.memory_space<vmem>>, vector<1x8x128xf32>,
    %386 = arith.index_cast %331 : i32 to index
    %c0_111 = arith.constant 0 : index
    %c512_112 = arith.constant 512 : index
    %387 = vector.load %arg1[%386, %c0_111, %c512_112] : memref<8x8x1024xbf16, #tpu.memory_space<vmem>>, vector<1x8x512xbf16>
    %388 = vector.shape_cast %387 : vector<1x8x512xbf16> to vector<8x512xbf16>
    %389 = arith.extf %388 : vector<8x512xbf16> to vector<8x512xf32>
    %390 = arith.truncf %319 : vector<8x128xf32> to vector<8x128xbf16>
    %cst_113 = arith.constant dense<0.000000e+00> : vector<8x512xf32>
    %391 = tpu.matmul %390, %1, %cst_113 {dimension_numbers = #tpu.dot_dimension_numbers<[1], [0], [0], [1], [0, 0, 1, 1], [], []>} : vector<8x128xbf16>, vector<128x512xbf16>, vector<8x512xf32> -> vector<8x512xf32>
    %392 = arith.addf %389, %391 : vector<8x512xf32>
    %393 = vector.extract_strided_slice %392 {offsets = [0, 0], sizes = [8, 128], strides = [1, 1]} : vector<8x512xf32> to vector<8x128xf32>
    %cst_114 = arith.constant 5.000000e-01 : f32
    %394 = vector.broadcast %cst_114 : f32 to vector<8x128xf32>
    %395 = arith.mulf %394, %393 : vector<8x128xf32>
    %396 = math.tanh %395 : vector<8x128xf32>
    %cst_115 = arith.constant 5.000000e-01 : f32
    %397 = vector.broadcast %cst_115 : f32 to vector<8x128xf32>
    %398 = arith.mulf %397, %396 : vector<8x128xf32>
    %cst_116 = arith.constant 5.000000e-01 : f32
    %399 = vector.broadcast %cst_116 : f32 to vector<8x128xf32>
    %400 = arith.addf %398, %399 : vector<8x128xf32>
    %401 = vector.extract_strided_slice %392 {offsets = [0, 128], sizes = [8, 128], strides = [1, 1]} : vector<8x512xf32> to vector<8x128xf32>
    %cst_117 = arith.constant 5.000000e-01 : f32
    %402 = vector.broadcast %cst_117 : f32 to vector<8x128xf32>
    %403 = arith.mulf %402, %401 : vector<8x128xf32>
    %404 = math.tanh %403 : vector<8x128xf32>
    %cst_118 = arith.constant 5.000000e-01 : f32
    %405 = vector.broadcast %cst_118 : f32 to vector<8x128xf32>
    %406 = arith.mulf %405, %404 : vector<8x128xf32>
    %cst_119 = arith.constant 5.000000e-01 : f32
    %407 = vector.broadcast %cst_119 : f32 to vector<8x128xf32>
    %408 = arith.addf %406, %407 : vector<8x128xf32>
    %409 = vector.extract_strided_slice %392 {offsets = [0, 256], sizes = [8, 128], strides = [1, 1]} : vector<8x512xf32> to vector<8x128xf32>
    %410 = math.tanh %409 : vector<8x128xf32>
    %411 = vector.extract_strided_slice %392 {offsets = [0, 384], sizes = [8, 128], strides = [1, 1]} : vector<8x512xf32> to vector<8x128xf32>
    %cst_120 = arith.constant 5.000000e-01 : f32
    %412 = vector.broadcast %cst_120 : f32 to vector<8x128xf32>
    %413 = arith.mulf %412, %411 : vector<8x128xf32>
    %414 = math.tanh %413 : vector<8x128xf32>
    %cst_121 = arith.constant 5.000000e-01 : f32
    %415 = vector.broadcast %cst_121 : f32 to vector<8x128xf32>
    %416 = arith.mulf %415, %414 : vector<8x128xf32>
    %cst_122 = arith.constant 5.000000e-01 : f32
    %417 = vector.broadcast %cst_122 : f32 to vector<8x128xf32>
    %418 = arith.addf %416, %417 : vector<8x128xf32>
    %419 = arith.mulf %408, %322 : vector<8x128xf32>
    %420 = arith.mulf %400, %410 : vector<8x128xf32>
    %421 = arith.addf %419, %420 : vector<8x128xf32>
    %422 = math.tanh %421 : vector<8x128xf32>
    %423 = arith.mulf %418, %422 : vector<8x128xf32>
    %424 = vector.broadcast %331 : i32 to vector<8x1xi32>
    %425 = arith.cmpi sgt, %2, %424 : vector<8x1xi32>
    %426 = vector.shape_cast %425 : vector<8x1xi1> to vector<8x1xi1>
    %427 = vector.broadcast %426 : vector<8x1xi1> to vector<8x128xi1>
    %428 = arith.select %427, %423, %319 : vector<8x128xi1>, vector<8x128xf32>
    %429 = vector.shape_cast %425 : vector<8x1xi1> to vector<8x1xi1>
    %430 = vector.broadcast %429 : vector<8x1xi1> to vector<8x128xi1>
    %431 = arith.select %430, %421, %322 : vector<8x128xi1>, vector<8x128xf32>
    %cst_123 = arith.constant 0.000000e+00 : f32
    %432 = vector.shape_cast %425 : vector<8x1xi1> to vector<8x1xi1>
    %433 = vector.broadcast %432 : vector<8x1xi1> to vector<8x128xi1>
    %434 = vector.broadcast %cst_123 : f32 to vector<8x128xf32>
    %435 = arith.select %433, %423, %434 : vector<8x128xi1>, vector<8x128xf32>
    %436 = arith.index_cast %331 : i32 to index
    %c0_124 = arith.constant 0 : index
    %c128_125 = arith.constant 128 : index
    %437 = vector.load %arg5[%436, %c0_124, %c128_125] : memref<8x8x256xf32, #tpu.memory_space<vmem>>, vector<1x8x128xf32>
    %438 = vector.shape_cast %437 : vector<1x8x128xf32> to vector<8x128xf32>
    %439 = vector.shape_cast %435 : vector<8x128xf32> to vector<1x8x128xf32>
    tpu.vector_store %arg5[%436, %c0_124, %c128_125], %439 {strides = array<i32>} : memref<8x8x256xf32, #tpu.memory_space<vmem>>, vector<1x8x128xf32>,
    %c4_i32 = arith.constant 4 : i32
    %c7_i32_126 = arith.constant 7 : i32
    %440 = arith.subi %c7_i32_126, %c4_i32 : i32
    %441 = arith.index_cast %c4_i32 : i32 to index
    %c0_127 = arith.constant 0 : index
    %c0_128 = arith.constant 0 : index
    %442 = vector.load %arg1[%441, %c0_127, %c0_128] : memref<8x8x1024xbf16, #tpu.memory_space<vmem>>, vector<1x8x512xbf16>
    %443 = vector.shape_cast %442 : vector<1x8x512xbf16> to vector<8x512xbf16>
    %444 = arith.extf %443 : vector<8x512xbf16> to vector<8x512xf32>
    %445 = arith.truncf %374 : vector<8x128xf32> to vector<8x128xbf16>
    %cst_129 = arith.constant dense<0.000000e+00> : vector<8x512xf32>
    %446 = tpu.matmul %445, %0, %cst_129 {dimension_numbers = #tpu.dot_dimension_numbers<[1], [0], [0], [1], [0, 0, 1, 1], [], []>} : vector<8x128xbf16>, vector<128x512xbf16>, vector<8x512xf32> -> vector<8x512xf32>
    %447 = arith.addf %444, %446 : vector<8x512xf32>
    %448 = vector.extract_strided_slice %447 {offsets = [0, 0], sizes = [8, 128], strides = [1, 1]} : vector<8x512xf32> to vector<8x128xf32>
    %cst_130 = arith.constant 5.000000e-01 : f32
    %449 = vector.broadcast %cst_130 : f32 to vector<8x128xf32>
    %450 = arith.mulf %449, %448 : vector<8x128xf32>
    %451 = math.tanh %450 : vector<8x128xf32>
    %cst_131 = arith.constant 5.000000e-01 : f32
    %452 = vector.broadcast %cst_131 : f32 to vector<8x128xf32>
    %453 = arith.mulf %452, %451 : vector<8x128xf32>
    %cst_132 = arith.constant 5.000000e-01 : f32
    %454 = vector.broadcast %cst_132 : f32 to vector<8x128xf32>
    %455 = arith.addf %453, %454 : vector<8x128xf32>
    %456 = vector.extract_strided_slice %447 {offsets = [0, 128], sizes = [8, 128], strides = [1, 1]} : vector<8x512xf32> to vector<8x128xf32>
    %cst_133 = arith.constant 5.000000e-01 : f32
    %457 = vector.broadcast %cst_133 : f32 to vector<8x128xf32>
    %458 = arith.mulf %457, %456 : vector<8x128xf32>
    %459 = math.tanh %458 : vector<8x128xf32>
    %cst_134 = arith.constant 5.000000e-01 : f32
    %460 = vector.broadcast %cst_134 : f32 to vector<8x128xf32>
    %461 = arith.mulf %460, %459 : vector<8x128xf32>
    %cst_135 = arith.constant 5.000000e-01 : f32
    %462 = vector.broadcast %cst_135 : f32 to vector<8x128xf32>
    %463 = arith.addf %461, %462 : vector<8x128xf32>
    %464 = vector.extract_strided_slice %447 {offsets = [0, 256], sizes = [8, 128], strides = [1, 1]} : vector<8x512xf32> to vector<8x128xf32>
    %465 = math.tanh %464 : vector<8x128xf32>
    %466 = vector.extract_strided_slice %447 {offsets = [0, 384], sizes = [8, 128], strides = [1, 1]} : vector<8x512xf32> to vector<8x128xf32>
    %cst_136 = arith.constant 5.000000e-01 : f32
    %467 = vector.broadcast %cst_136 : f32 to vector<8x128xf32>
    %468 = arith.mulf %467, %466 : vector<8x128xf32>
    %469 = math.tanh %468 : vector<8x128xf32>
    %cst_137 = arith.constant 5.000000e-01 : f32
    %470 = vector.broadcast %cst_137 : f32 to vector<8x128xf32>
    %471 = arith.mulf %470, %469 : vector<8x128xf32>
    %cst_138 = arith.constant 5.000000e-01 : f32
    %472 = vector.broadcast %cst_138 : f32 to vector<8x128xf32>
    %473 = arith.addf %471, %472 : vector<8x128xf32>
    %474 = arith.mulf %463, %377 : vector<8x128xf32>
    %475 = arith.mulf %455, %465 : vector<8x128xf32>
    %476 = arith.addf %474, %475 : vector<8x128xf32>
    %477 = math.tanh %476 : vector<8x128xf32>
    %478 = arith.mulf %473, %477 : vector<8x128xf32>
    %479 = vector.broadcast %c4_i32 : i32 to vector<8x1xi32>
    %480 = arith.cmpi sgt, %2, %479 : vector<8x1xi32>
    %481 = vector.shape_cast %480 : vector<8x1xi1> to vector<8x1xi1>
    %482 = vector.broadcast %481 : vector<8x1xi1> to vector<8x128xi1>
    %483 = arith.select %482, %478, %374 : vector<8x128xi1>, vector<8x128xf32>
    %484 = vector.shape_cast %480 : vector<8x1xi1> to vector<8x1xi1>
    %485 = vector.broadcast %484 : vector<8x1xi1> to vector<8x128xi1>
    %486 = arith.select %485, %476, %377 : vector<8x128xi1>, vector<8x128xf32>
    %cst_139 = arith.constant 0.000000e+00 : f32
    %487 = vector.shape_cast %480 : vector<8x1xi1> to vector<8x1xi1>
    %488 = vector.broadcast %487 : vector<8x1xi1> to vector<8x128xi1>
    %489 = vector.broadcast %cst_139 : f32 to vector<8x128xf32>
    %490 = arith.select %488, %478, %489 : vector<8x128xi1>, vector<8x128xf32>
    %491 = arith.index_cast %c4_i32 : i32 to index
    %c0_140 = arith.constant 0 : index
    %c0_141 = arith.constant 0 : index
    %492 = vector.load %arg5[%491, %c0_140, %c0_141] : memref<8x8x256xf32, #tpu.memory_space<vmem>>, vector<1x8x128xf32>
    %493 = vector.shape_cast %492 : vector<1x8x128xf32> to vector<8x128xf32>
    %494 = vector.shape_cast %490 : vector<8x128xf32> to vector<1x8x128xf32>
    tpu.vector_store %arg5[%491, %c0_140, %c0_141], %494 {strides = array<i32>} : memref<8x8x256xf32, #tpu.memory_space<vmem>>, vector<1x8x128xf32>,
    %495 = arith.index_cast %440 : i32 to index
    %c0_142 = arith.constant 0 : index
    %c512_143 = arith.constant 512 : index
    %496 = vector.load %arg1[%495, %c0_142, %c512_143] : memref<8x8x1024xbf16, #tpu.memory_space<vmem>>, vector<1x8x512xbf16>
    %497 = vector.shape_cast %496 : vector<1x8x512xbf16> to vector<8x512xbf16>
    %498 = arith.extf %497 : vector<8x512xbf16> to vector<8x512xf32>
    %499 = arith.truncf %428 : vector<8x128xf32> to vector<8x128xbf16>
    %cst_144 = arith.constant dense<0.000000e+00> : vector<8x512xf32>
    %500 = tpu.matmul %499, %1, %cst_144 {dimension_numbers = #tpu.dot_dimension_numbers<[1], [0], [0], [1], [0, 0, 1, 1], [], []>} : vector<8x128xbf16>, vector<128x512xbf16>, vector<8x512xf32> -> vector<8x512xf32>
    %501 = arith.addf %498, %500 : vector<8x512xf32>
    %502 = vector.extract_strided_slice %501 {offsets = [0, 0], sizes = [8, 128], strides = [1, 1]} : vector<8x512xf32> to vector<8x128xf32>
    %cst_145 = arith.constant 5.000000e-01 : f32
    %503 = vector.broadcast %cst_145 : f32 to vector<8x128xf32>
    %504 = arith.mulf %503, %502 : vector<8x128xf32>
    %505 = math.tanh %504 : vector<8x128xf32>
    %cst_146 = arith.constant 5.000000e-01 : f32
    %506 = vector.broadcast %cst_146 : f32 to vector<8x128xf32>
    %507 = arith.mulf %506, %505 : vector<8x128xf32>
    %cst_147 = arith.constant 5.000000e-01 : f32
    %508 = vector.broadcast %cst_147 : f32 to vector<8x128xf32>
    %509 = arith.addf %507, %508 : vector<8x128xf32>
    %510 = vector.extract_strided_slice %501 {offsets = [0, 128], sizes = [8, 128], strides = [1, 1]} : vector<8x512xf32> to vector<8x128xf32>
    %cst_148 = arith.constant 5.000000e-01 : f32
    %511 = vector.broadcast %cst_148 : f32 to vector<8x128xf32>
    %512 = arith.mulf %511, %510 : vector<8x128xf32>
    %513 = math.tanh %512 : vector<8x128xf32>
    %cst_149 = arith.constant 5.000000e-01 : f32
    %514 = vector.broadcast %cst_149 : f32 to vector<8x128xf32>
    %515 = arith.mulf %514, %513 : vector<8x128xf32>
    %cst_150 = arith.constant 5.000000e-01 : f32
    %516 = vector.broadcast %cst_150 : f32 to vector<8x128xf32>
    %517 = arith.addf %515, %516 : vector<8x128xf32>
    %518 = vector.extract_strided_slice %501 {offsets = [0, 256], sizes = [8, 128], strides = [1, 1]} : vector<8x512xf32> to vector<8x128xf32>
    %519 = math.tanh %518 : vector<8x128xf32>
    %520 = vector.extract_strided_slice %501 {offsets = [0, 384], sizes = [8, 128], strides = [1, 1]} : vector<8x512xf32> to vector<8x128xf32>
    %cst_151 = arith.constant 5.000000e-01 : f32
    %521 = vector.broadcast %cst_151 : f32 to vector<8x128xf32>
    %522 = arith.mulf %521, %520 : vector<8x128xf32>
    %523 = math.tanh %522 : vector<8x128xf32>
    %cst_152 = arith.constant 5.000000e-01 : f32
    %524 = vector.broadcast %cst_152 : f32 to vector<8x128xf32>
    %525 = arith.mulf %524, %523 : vector<8x128xf32>
    %cst_153 = arith.constant 5.000000e-01 : f32
    %526 = vector.broadcast %cst_153 : f32 to vector<8x128xf32>
    %527 = arith.addf %525, %526 : vector<8x128xf32>
    %528 = arith.mulf %517, %431 : vector<8x128xf32>
    %529 = arith.mulf %509, %519 : vector<8x128xf32>
    %530 = arith.addf %528, %529 : vector<8x128xf32>
    %531 = math.tanh %530 : vector<8x128xf32>
    %532 = arith.mulf %527, %531 : vector<8x128xf32>
    %533 = vector.broadcast %440 : i32 to vector<8x1xi32>
    %534 = arith.cmpi sgt, %2, %533 : vector<8x1xi32>
    %535 = vector.shape_cast %534 : vector<8x1xi1> to vector<8x1xi1>
    %536 = vector.broadcast %535 : vector<8x1xi1> to vector<8x128xi1>
    %537 = arith.select %536, %532, %428 : vector<8x128xi1>, vector<8x128xf32>
    %538 = vector.shape_cast %534 : vector<8x1xi1> to vector<8x1xi1>
    %539 = vector.broadcast %538 : vector<8x1xi1> to vector<8x128xi1>
    %540 = arith.select %539, %530, %431 : vector<8x128xi1>, vector<8x128xf32>
    %cst_154 = arith.constant 0.000000e+00 : f32
    %541 = vector.shape_cast %534 : vector<8x1xi1> to vector<8x1xi1>
    %542 = vector.broadcast %541 : vector<8x1xi1> to vector<8x128xi1>
    %543 = vector.broadcast %cst_154 : f32 to vector<8x128xf32>
    %544 = arith.select %542, %532, %543 : vector<8x128xi1>, vector<8x128xf32>
    %545 = arith.index_cast %440 : i32 to index
    %c0_155 = arith.constant 0 : index
    %c128_156 = arith.constant 128 : index
    %546 = vector.load %arg5[%545, %c0_155, %c128_156] : memref<8x8x256xf32, #tpu.memory_space<vmem>>, vector<1x8x128xf32>
    %547 = vector.shape_cast %546 : vector<1x8x128xf32> to vector<8x128xf32>
    %548 = vector.shape_cast %544 : vector<8x128xf32> to vector<1x8x128xf32>
    tpu.vector_store %arg5[%545, %c0_155, %c128_156], %548 {strides = array<i32>} : memref<8x8x256xf32, #tpu.memory_space<vmem>>, vector<1x8x128xf32>,
    %c5_i32 = arith.constant 5 : i32
    %c7_i32_157 = arith.constant 7 : i32
    %549 = arith.subi %c7_i32_157, %c5_i32 : i32
    %550 = arith.index_cast %c5_i32 : i32 to index
    %c0_158 = arith.constant 0 : index
    %c0_159 = arith.constant 0 : index
    %551 = vector.load %arg1[%550, %c0_158, %c0_159] : memref<8x8x1024xbf16, #tpu.memory_space<vmem>>, vector<1x8x512xbf16>
    %552 = vector.shape_cast %551 : vector<1x8x512xbf16> to vector<8x512xbf16>
    %553 = arith.extf %552 : vector<8x512xbf16> to vector<8x512xf32>
    %554 = arith.truncf %483 : vector<8x128xf32> to vector<8x128xbf16>
    %cst_160 = arith.constant dense<0.000000e+00> : vector<8x512xf32>
    %555 = tpu.matmul %554, %0, %cst_160 {dimension_numbers = #tpu.dot_dimension_numbers<[1], [0], [0], [1], [0, 0, 1, 1], [], []>} : vector<8x128xbf16>, vector<128x512xbf16>, vector<8x512xf32> -> vector<8x512xf32>
    %556 = arith.addf %553, %555 : vector<8x512xf32>
    %557 = vector.extract_strided_slice %556 {offsets = [0, 0], sizes = [8, 128], strides = [1, 1]} : vector<8x512xf32> to vector<8x128xf32>
    %cst_161 = arith.constant 5.000000e-01 : f32
    %558 = vector.broadcast %cst_161 : f32 to vector<8x128xf32>
    %559 = arith.mulf %558, %557 : vector<8x128xf32>
    %560 = math.tanh %559 : vector<8x128xf32>
    %cst_162 = arith.constant 5.000000e-01 : f32
    %561 = vector.broadcast %cst_162 : f32 to vector<8x128xf32>
    %562 = arith.mulf %561, %560 : vector<8x128xf32>
    %cst_163 = arith.constant 5.000000e-01 : f32
    %563 = vector.broadcast %cst_163 : f32 to vector<8x128xf32>
    %564 = arith.addf %562, %563 : vector<8x128xf32>
    %565 = vector.extract_strided_slice %556 {offsets = [0, 128], sizes = [8, 128], strides = [1, 1]} : vector<8x512xf32> to vector<8x128xf32>
    %cst_164 = arith.constant 5.000000e-01 : f32
    %566 = vector.broadcast %cst_164 : f32 to vector<8x128xf32>
    %567 = arith.mulf %566, %565 : vector<8x128xf32>
    %568 = math.tanh %567 : vector<8x128xf32>
    %cst_165 = arith.constant 5.000000e-01 : f32
    %569 = vector.broadcast %cst_165 : f32 to vector<8x128xf32>
    %570 = arith.mulf %569, %568 : vector<8x128xf32>
    %cst_166 = arith.constant 5.000000e-01 : f32
    %571 = vector.broadcast %cst_166 : f32 to vector<8x128xf32>
    %572 = arith.addf %570, %571 : vector<8x128xf32>
    %573 = vector.extract_strided_slice %556 {offsets = [0, 256], sizes = [8, 128], strides = [1, 1]} : vector<8x512xf32> to vector<8x128xf32>
    %574 = math.tanh %573 : vector<8x128xf32>
    %575 = vector.extract_strided_slice %556 {offsets = [0, 384], sizes = [8, 128], strides = [1, 1]} : vector<8x512xf32> to vector<8x128xf32>
    %cst_167 = arith.constant 5.000000e-01 : f32
    %576 = vector.broadcast %cst_167 : f32 to vector<8x128xf32>
    %577 = arith.mulf %576, %575 : vector<8x128xf32>
    %578 = math.tanh %577 : vector<8x128xf32>
    %cst_168 = arith.constant 5.000000e-01 : f32
    %579 = vector.broadcast %cst_168 : f32 to vector<8x128xf32>
    %580 = arith.mulf %579, %578 : vector<8x128xf32>
    %cst_169 = arith.constant 5.000000e-01 : f32
    %581 = vector.broadcast %cst_169 : f32 to vector<8x128xf32>
    %582 = arith.addf %580, %581 : vector<8x128xf32>
    %583 = arith.mulf %572, %486 : vector<8x128xf32>
    %584 = arith.mulf %564, %574 : vector<8x128xf32>
    %585 = arith.addf %583, %584 : vector<8x128xf32>
    %586 = math.tanh %585 : vector<8x128xf32>
    %587 = arith.mulf %582, %586 : vector<8x128xf32>
    %588 = vector.broadcast %c5_i32 : i32 to vector<8x1xi32>
    %589 = arith.cmpi sgt, %2, %588 : vector<8x1xi32>
    %590 = vector.shape_cast %589 : vector<8x1xi1> to vector<8x1xi1>
    %591 = vector.broadcast %590 : vector<8x1xi1> to vector<8x128xi1>
    %592 = arith.select %591, %587, %483 : vector<8x128xi1>, vector<8x128xf32>
    %593 = vector.shape_cast %589 : vector<8x1xi1> to vector<8x1xi1>
    %594 = vector.broadcast %593 : vector<8x1xi1> to vector<8x128xi1>
    %595 = arith.select %594, %585, %486 : vector<8x128xi1>, vector<8x128xf32>
    %cst_170 = arith.constant 0.000000e+00 : f32
    %596 = vector.shape_cast %589 : vector<8x1xi1> to vector<8x1xi1>
    %597 = vector.broadcast %596 : vector<8x1xi1> to vector<8x128xi1>
    %598 = vector.broadcast %cst_170 : f32 to vector<8x128xf32>
    %599 = arith.select %597, %587, %598 : vector<8x128xi1>, vector<8x128xf32>
    %600 = arith.index_cast %c5_i32 : i32 to index
    %c0_171 = arith.constant 0 : index
    %c0_172 = arith.constant 0 : index
    %601 = vector.load %arg5[%600, %c0_171, %c0_172] : memref<8x8x256xf32, #tpu.memory_space<vmem>>, vector<1x8x128xf32>
    %602 = vector.shape_cast %601 : vector<1x8x128xf32> to vector<8x128xf32>
    %603 = vector.shape_cast %599 : vector<8x128xf32> to vector<1x8x128xf32>
    tpu.vector_store %arg5[%600, %c0_171, %c0_172], %603 {strides = array<i32>} : memref<8x8x256xf32, #tpu.memory_space<vmem>>, vector<1x8x128xf32>,
    %604 = arith.index_cast %549 : i32 to index
    %c0_173 = arith.constant 0 : index
    %c512_174 = arith.constant 512 : index
    %605 = vector.load %arg1[%604, %c0_173, %c512_174] : memref<8x8x1024xbf16, #tpu.memory_space<vmem>>, vector<1x8x512xbf16>
    %606 = vector.shape_cast %605 : vector<1x8x512xbf16> to vector<8x512xbf16>
    %607 = arith.extf %606 : vector<8x512xbf16> to vector<8x512xf32>
    %608 = arith.truncf %537 : vector<8x128xf32> to vector<8x128xbf16>
    %cst_175 = arith.constant dense<0.000000e+00> : vector<8x512xf32>
    %609 = tpu.matmul %608, %1, %cst_175 {dimension_numbers = #tpu.dot_dimension_numbers<[1], [0], [0], [1], [0, 0, 1, 1], [], []>} : vector<8x128xbf16>, vector<128x512xbf16>, vector<8x512xf32> -> vector<8x512xf32>
    %610 = arith.addf %607, %609 : vector<8x512xf32>
    %611 = vector.extract_strided_slice %610 {offsets = [0, 0], sizes = [8, 128], strides = [1, 1]} : vector<8x512xf32> to vector<8x128xf32>
    %cst_176 = arith.constant 5.000000e-01 : f32
    %612 = vector.broadcast %cst_176 : f32 to vector<8x128xf32>
    %613 = arith.mulf %612, %611 : vector<8x128xf32>
    %614 = math.tanh %613 : vector<8x128xf32>
    %cst_177 = arith.constant 5.000000e-01 : f32
    %615 = vector.broadcast %cst_177 : f32 to vector<8x128xf32>
    %616 = arith.mulf %615, %614 : vector<8x128xf32>
    %cst_178 = arith.constant 5.000000e-01 : f32
    %617 = vector.broadcast %cst_178 : f32 to vector<8x128xf32>
    %618 = arith.addf %616, %617 : vector<8x128xf32>
    %619 = vector.extract_strided_slice %610 {offsets = [0, 128], sizes = [8, 128], strides = [1, 1]} : vector<8x512xf32> to vector<8x128xf32>
    %cst_179 = arith.constant 5.000000e-01 : f32
    %620 = vector.broadcast %cst_179 : f32 to vector<8x128xf32>
    %621 = arith.mulf %620, %619 : vector<8x128xf32>
    %622 = math.tanh %621 : vector<8x128xf32>
    %cst_180 = arith.constant 5.000000e-01 : f32
    %623 = vector.broadcast %cst_180 : f32 to vector<8x128xf32>
    %624 = arith.mulf %623, %622 : vector<8x128xf32>
    %cst_181 = arith.constant 5.000000e-01 : f32
    %625 = vector.broadcast %cst_181 : f32 to vector<8x128xf32>
    %626 = arith.addf %624, %625 : vector<8x128xf32>
    %627 = vector.extract_strided_slice %610 {offsets = [0, 256], sizes = [8, 128], strides = [1, 1]} : vector<8x512xf32> to vector<8x128xf32>
    %628 = math.tanh %627 : vector<8x128xf32>
    %629 = vector.extract_strided_slice %610 {offsets = [0, 384], sizes = [8, 128], strides = [1, 1]} : vector<8x512xf32> to vector<8x128xf32>
    %cst_182 = arith.constant 5.000000e-01 : f32
    %630 = vector.broadcast %cst_182 : f32 to vector<8x128xf32>
    %631 = arith.mulf %630, %629 : vector<8x128xf32>
    %632 = math.tanh %631 : vector<8x128xf32>
    %cst_183 = arith.constant 5.000000e-01 : f32
    %633 = vector.broadcast %cst_183 : f32 to vector<8x128xf32>
    %634 = arith.mulf %633, %632 : vector<8x128xf32>
    %cst_184 = arith.constant 5.000000e-01 : f32
    %635 = vector.broadcast %cst_184 : f32 to vector<8x128xf32>
    %636 = arith.addf %634, %635 : vector<8x128xf32>
    %637 = arith.mulf %626, %540 : vector<8x128xf32>
    %638 = arith.mulf %618, %628 : vector<8x128xf32>
    %639 = arith.addf %637, %638 : vector<8x128xf32>
    %640 = math.tanh %639 : vector<8x128xf32>
    %641 = arith.mulf %636, %640 : vector<8x128xf32>
    %642 = vector.broadcast %549 : i32 to vector<8x1xi32>
    %643 = arith.cmpi sgt, %2, %642 : vector<8x1xi32>
    %644 = vector.shape_cast %643 : vector<8x1xi1> to vector<8x1xi1>
    %645 = vector.broadcast %644 : vector<8x1xi1> to vector<8x128xi1>
    %646 = arith.select %645, %641, %537 : vector<8x128xi1>, vector<8x128xf32>
    %647 = vector.shape_cast %643 : vector<8x1xi1> to vector<8x1xi1>
    %648 = vector.broadcast %647 : vector<8x1xi1> to vector<8x128xi1>
    %649 = arith.select %648, %639, %540 : vector<8x128xi1>, vector<8x128xf32>
    %cst_185 = arith.constant 0.000000e+00 : f32
    %650 = vector.shape_cast %643 : vector<8x1xi1> to vector<8x1xi1>
    %651 = vector.broadcast %650 : vector<8x1xi1> to vector<8x128xi1>
    %652 = vector.broadcast %cst_185 : f32 to vector<8x128xf32>
    %653 = arith.select %651, %641, %652 : vector<8x128xi1>, vector<8x128xf32>
    %654 = arith.index_cast %549 : i32 to index
    %c0_186 = arith.constant 0 : index
    %c128_187 = arith.constant 128 : index
    %655 = vector.load %arg5[%654, %c0_186, %c128_187] : memref<8x8x256xf32, #tpu.memory_space<vmem>>, vector<1x8x128xf32>
    %656 = vector.shape_cast %655 : vector<1x8x128xf32> to vector<8x128xf32>
    %657 = vector.shape_cast %653 : vector<8x128xf32> to vector<1x8x128xf32>
    tpu.vector_store %arg5[%654, %c0_186, %c128_187], %657 {strides = array<i32>} : memref<8x8x256xf32, #tpu.memory_space<vmem>>, vector<1x8x128xf32>,
    %c6_i32 = arith.constant 6 : i32
    %c7_i32_188 = arith.constant 7 : i32
    %658 = arith.subi %c7_i32_188, %c6_i32 : i32
    %659 = arith.index_cast %c6_i32 : i32 to index
    %c0_189 = arith.constant 0 : index
    %c0_190 = arith.constant 0 : index
    %660 = vector.load %arg1[%659, %c0_189, %c0_190] : memref<8x8x1024xbf16, #tpu.memory_space<vmem>>, vector<1x8x512xbf16>
    %661 = vector.shape_cast %660 : vector<1x8x512xbf16> to vector<8x512xbf16>
    %662 = arith.extf %661 : vector<8x512xbf16> to vector<8x512xf32>
    %663 = arith.truncf %592 : vector<8x128xf32> to vector<8x128xbf16>
    %cst_191 = arith.constant dense<0.000000e+00> : vector<8x512xf32>
    %664 = tpu.matmul %663, %0, %cst_191 {dimension_numbers = #tpu.dot_dimension_numbers<[1], [0], [0], [1], [0, 0, 1, 1], [], []>} : vector<8x128xbf16>, vector<128x512xbf16>, vector<8x512xf32> -> vector<8x512xf32>
    %665 = arith.addf %662, %664 : vector<8x512xf32>
    %666 = vector.extract_strided_slice %665 {offsets = [0, 0], sizes = [8, 128], strides = [1, 1]} : vector<8x512xf32> to vector<8x128xf32>
    %cst_192 = arith.constant 5.000000e-01 : f32
    %667 = vector.broadcast %cst_192 : f32 to vector<8x128xf32>
    %668 = arith.mulf %667, %666 : vector<8x128xf32>
    %669 = math.tanh %668 : vector<8x128xf32>
    %cst_193 = arith.constant 5.000000e-01 : f32
    %670 = vector.broadcast %cst_193 : f32 to vector<8x128xf32>
    %671 = arith.mulf %670, %669 : vector<8x128xf32>
    %cst_194 = arith.constant 5.000000e-01 : f32
    %672 = vector.broadcast %cst_194 : f32 to vector<8x128xf32>
    %673 = arith.addf %671, %672 : vector<8x128xf32>
    %674 = vector.extract_strided_slice %665 {offsets = [0, 128], sizes = [8, 128], strides = [1, 1]} : vector<8x512xf32> to vector<8x128xf32>
    %cst_195 = arith.constant 5.000000e-01 : f32
    %675 = vector.broadcast %cst_195 : f32 to vector<8x128xf32>
    %676 = arith.mulf %675, %674 : vector<8x128xf32>
    %677 = math.tanh %676 : vector<8x128xf32>
    %cst_196 = arith.constant 5.000000e-01 : f32
    %678 = vector.broadcast %cst_196 : f32 to vector<8x128xf32>
    %679 = arith.mulf %678, %677 : vector<8x128xf32>
    %cst_197 = arith.constant 5.000000e-01 : f32
    %680 = vector.broadcast %cst_197 : f32 to vector<8x128xf32>
    %681 = arith.addf %679, %680 : vector<8x128xf32>
    %682 = vector.extract_strided_slice %665 {offsets = [0, 256], sizes = [8, 128], strides = [1, 1]} : vector<8x512xf32> to vector<8x128xf32>
    %683 = math.tanh %682 : vector<8x128xf32>
    %684 = vector.extract_strided_slice %665 {offsets = [0, 384], sizes = [8, 128], strides = [1, 1]} : vector<8x512xf32> to vector<8x128xf32>
    %cst_198 = arith.constant 5.000000e-01 : f32
    %685 = vector.broadcast %cst_198 : f32 to vector<8x128xf32>
    %686 = arith.mulf %685, %684 : vector<8x128xf32>
    %687 = math.tanh %686 : vector<8x128xf32>
    %cst_199 = arith.constant 5.000000e-01 : f32
    %688 = vector.broadcast %cst_199 : f32 to vector<8x128xf32>
    %689 = arith.mulf %688, %687 : vector<8x128xf32>
    %cst_200 = arith.constant 5.000000e-01 : f32
    %690 = vector.broadcast %cst_200 : f32 to vector<8x128xf32>
    %691 = arith.addf %689, %690 : vector<8x128xf32>
    %692 = arith.mulf %681, %595 : vector<8x128xf32>
    %693 = arith.mulf %673, %683 : vector<8x128xf32>
    %694 = arith.addf %692, %693 : vector<8x128xf32>
    %695 = math.tanh %694 : vector<8x128xf32>
    %696 = arith.mulf %691, %695 : vector<8x128xf32>
    %697 = vector.broadcast %c6_i32 : i32 to vector<8x1xi32>
    %698 = arith.cmpi sgt, %2, %697 : vector<8x1xi32>
    %699 = vector.shape_cast %698 : vector<8x1xi1> to vector<8x1xi1>
    %700 = vector.broadcast %699 : vector<8x1xi1> to vector<8x128xi1>
    %701 = arith.select %700, %696, %592 : vector<8x128xi1>, vector<8x128xf32>
    %702 = vector.shape_cast %698 : vector<8x1xi1> to vector<8x1xi1>
    %703 = vector.broadcast %702 : vector<8x1xi1> to vector<8x128xi1>
    %704 = arith.select %703, %694, %595 : vector<8x128xi1>, vector<8x128xf32>
    %cst_201 = arith.constant 0.000000e+00 : f32
    %705 = vector.shape_cast %698 : vector<8x1xi1> to vector<8x1xi1>
    %706 = vector.broadcast %705 : vector<8x1xi1> to vector<8x128xi1>
    %707 = vector.broadcast %cst_201 : f32 to vector<8x128xf32>
    %708 = arith.select %706, %696, %707 : vector<8x128xi1>, vector<8x128xf32>
    %709 = arith.index_cast %c6_i32 : i32 to index
    %c0_202 = arith.constant 0 : index
    %c0_203 = arith.constant 0 : index
    %710 = vector.load %arg5[%709, %c0_202, %c0_203] : memref<8x8x256xf32, #tpu.memory_space<vmem>>, vector<1x8x128xf32>
    %711 = vector.shape_cast %710 : vector<1x8x128xf32> to vector<8x128xf32>
    %712 = vector.shape_cast %708 : vector<8x128xf32> to vector<1x8x128xf32>
    tpu.vector_store %arg5[%709, %c0_202, %c0_203], %712 {strides = array<i32>} : memref<8x8x256xf32, #tpu.memory_space<vmem>>, vector<1x8x128xf32>,
    %713 = arith.index_cast %658 : i32 to index
    %c0_204 = arith.constant 0 : index
    %c512_205 = arith.constant 512 : index
    %714 = vector.load %arg1[%713, %c0_204, %c512_205] : memref<8x8x1024xbf16, #tpu.memory_space<vmem>>, vector<1x8x512xbf16>
    %715 = vector.shape_cast %714 : vector<1x8x512xbf16> to vector<8x512xbf16>
    %716 = arith.extf %715 : vector<8x512xbf16> to vector<8x512xf32>
    %717 = arith.truncf %646 : vector<8x128xf32> to vector<8x128xbf16>
    %cst_206 = arith.constant dense<0.000000e+00> : vector<8x512xf32>
    %718 = tpu.matmul %717, %1, %cst_206 {dimension_numbers = #tpu.dot_dimension_numbers<[1], [0], [0], [1], [0, 0, 1, 1], [], []>} : vector<8x128xbf16>, vector<128x512xbf16>, vector<8x512xf32> -> vector<8x512xf32>
    %719 = arith.addf %716, %718 : vector<8x512xf32>
    %720 = vector.extract_strided_slice %719 {offsets = [0, 0], sizes = [8, 128], strides = [1, 1]} : vector<8x512xf32> to vector<8x128xf32>
    %cst_207 = arith.constant 5.000000e-01 : f32
    %721 = vector.broadcast %cst_207 : f32 to vector<8x128xf32>
    %722 = arith.mulf %721, %720 : vector<8x128xf32>
    %723 = math.tanh %722 : vector<8x128xf32>
    %cst_208 = arith.constant 5.000000e-01 : f32
    %724 = vector.broadcast %cst_208 : f32 to vector<8x128xf32>
    %725 = arith.mulf %724, %723 : vector<8x128xf32>
    %cst_209 = arith.constant 5.000000e-01 : f32
    %726 = vector.broadcast %cst_209 : f32 to vector<8x128xf32>
    %727 = arith.addf %725, %726 : vector<8x128xf32>
    %728 = vector.extract_strided_slice %719 {offsets = [0, 128], sizes = [8, 128], strides = [1, 1]} : vector<8x512xf32> to vector<8x128xf32>
    %cst_210 = arith.constant 5.000000e-01 : f32
    %729 = vector.broadcast %cst_210 : f32 to vector<8x128xf32>
    %730 = arith.mulf %729, %728 : vector<8x128xf32>
    %731 = math.tanh %730 : vector<8x128xf32>
    %cst_211 = arith.constant 5.000000e-01 : f32
    %732 = vector.broadcast %cst_211 : f32 to vector<8x128xf32>
    %733 = arith.mulf %732, %731 : vector<8x128xf32>
    %cst_212 = arith.constant 5.000000e-01 : f32
    %734 = vector.broadcast %cst_212 : f32 to vector<8x128xf32>
    %735 = arith.addf %733, %734 : vector<8x128xf32>
    %736 = vector.extract_strided_slice %719 {offsets = [0, 256], sizes = [8, 128], strides = [1, 1]} : vector<8x512xf32> to vector<8x128xf32>
    %737 = math.tanh %736 : vector<8x128xf32>
    %738 = vector.extract_strided_slice %719 {offsets = [0, 384], sizes = [8, 128], strides = [1, 1]} : vector<8x512xf32> to vector<8x128xf32>
    %cst_213 = arith.constant 5.000000e-01 : f32
    %739 = vector.broadcast %cst_213 : f32 to vector<8x128xf32>
    %740 = arith.mulf %739, %738 : vector<8x128xf32>
    %741 = math.tanh %740 : vector<8x128xf32>
    %cst_214 = arith.constant 5.000000e-01 : f32
    %742 = vector.broadcast %cst_214 : f32 to vector<8x128xf32>
    %743 = arith.mulf %742, %741 : vector<8x128xf32>
    %cst_215 = arith.constant 5.000000e-01 : f32
    %744 = vector.broadcast %cst_215 : f32 to vector<8x128xf32>
    %745 = arith.addf %743, %744 : vector<8x128xf32>
    %746 = arith.mulf %735, %649 : vector<8x128xf32>
    %747 = arith.mulf %727, %737 : vector<8x128xf32>
    %748 = arith.addf %746, %747 : vector<8x128xf32>
    %749 = math.tanh %748 : vector<8x128xf32>
    %750 = arith.mulf %745, %749 : vector<8x128xf32>
    %751 = vector.broadcast %658 : i32 to vector<8x1xi32>
    %752 = arith.cmpi sgt, %2, %751 : vector<8x1xi32>
    %753 = vector.shape_cast %752 : vector<8x1xi1> to vector<8x1xi1>
    %754 = vector.broadcast %753 : vector<8x1xi1> to vector<8x128xi1>
    %755 = arith.select %754, %750, %646 : vector<8x128xi1>, vector<8x128xf32>
    %756 = vector.shape_cast %752 : vector<8x1xi1> to vector<8x1xi1>
    %757 = vector.broadcast %756 : vector<8x1xi1> to vector<8x128xi1>
    %758 = arith.select %757, %748, %649 : vector<8x128xi1>, vector<8x128xf32>
    %cst_216 = arith.constant 0.000000e+00 : f32
    %759 = vector.shape_cast %752 : vector<8x1xi1> to vector<8x1xi1>
    %760 = vector.broadcast %759 : vector<8x1xi1> to vector<8x128xi1>
    %761 = vector.broadcast %cst_216 : f32 to vector<8x128xf32>
    %762 = arith.select %760, %750, %761 : vector<8x128xi1>, vector<8x128xf32>
    %763 = arith.index_cast %658 : i32 to index
    %c0_217 = arith.constant 0 : index
    %c128_218 = arith.constant 128 : index
    %764 = vector.load %arg5[%763, %c0_217, %c128_218] : memref<8x8x256xf32, #tpu.memory_space<vmem>>, vector<1x8x128xf32>
    %765 = vector.shape_cast %764 : vector<1x8x128xf32> to vector<8x128xf32>
    %766 = vector.shape_cast %762 : vector<8x128xf32> to vector<1x8x128xf32>
    tpu.vector_store %arg5[%763, %c0_217, %c128_218], %766 {strides = array<i32>} : memref<8x8x256xf32, #tpu.memory_space<vmem>>, vector<1x8x128xf32>,
    %c7_i32_219 = arith.constant 7 : i32
    %c7_i32_220 = arith.constant 7 : i32
    %767 = arith.subi %c7_i32_220, %c7_i32_219 : i32
    %768 = arith.index_cast %c7_i32_219 : i32 to index
    %c0_221 = arith.constant 0 : index
    %c0_222 = arith.constant 0 : index
    %769 = vector.load %arg1[%768, %c0_221, %c0_222] : memref<8x8x1024xbf16, #tpu.memory_space<vmem>>, vector<1x8x512xbf16>
    %770 = vector.shape_cast %769 : vector<1x8x512xbf16> to vector<8x512xbf16>
    %771 = arith.extf %770 : vector<8x512xbf16> to vector<8x512xf32>
    %772 = arith.truncf %701 : vector<8x128xf32> to vector<8x128xbf16>
    %cst_223 = arith.constant dense<0.000000e+00> : vector<8x512xf32>
    %773 = tpu.matmul %772, %0, %cst_223 {dimension_numbers = #tpu.dot_dimension_numbers<[1], [0], [0], [1], [0, 0, 1, 1], [], []>} : vector<8x128xbf16>, vector<128x512xbf16>, vector<8x512xf32> -> vector<8x512xf32>
    %774 = arith.addf %771, %773 : vector<8x512xf32>
    %775 = vector.extract_strided_slice %774 {offsets = [0, 0], sizes = [8, 128], strides = [1, 1]} : vector<8x512xf32> to vector<8x128xf32>
    %cst_224 = arith.constant 5.000000e-01 : f32
    %776 = vector.broadcast %cst_224 : f32 to vector<8x128xf32>
    %777 = arith.mulf %776, %775 : vector<8x128xf32>
    %778 = math.tanh %777 : vector<8x128xf32>
    %cst_225 = arith.constant 5.000000e-01 : f32
    %779 = vector.broadcast %cst_225 : f32 to vector<8x128xf32>
    %780 = arith.mulf %779, %778 : vector<8x128xf32>
    %cst_226 = arith.constant 5.000000e-01 : f32
    %781 = vector.broadcast %cst_226 : f32 to vector<8x128xf32>
    %782 = arith.addf %780, %781 : vector<8x128xf32>
    %783 = vector.extract_strided_slice %774 {offsets = [0, 128], sizes = [8, 128], strides = [1, 1]} : vector<8x512xf32> to vector<8x128xf32>
    %cst_227 = arith.constant 5.000000e-01 : f32
    %784 = vector.broadcast %cst_227 : f32 to vector<8x128xf32>
    %785 = arith.mulf %784, %783 : vector<8x128xf32>
    %786 = math.tanh %785 : vector<8x128xf32>
    %cst_228 = arith.constant 5.000000e-01 : f32
    %787 = vector.broadcast %cst_228 : f32 to vector<8x128xf32>
    %788 = arith.mulf %787, %786 : vector<8x128xf32>
    %cst_229 = arith.constant 5.000000e-01 : f32
    %789 = vector.broadcast %cst_229 : f32 to vector<8x128xf32>
    %790 = arith.addf %788, %789 : vector<8x128xf32>
    %791 = vector.extract_strided_slice %774 {offsets = [0, 256], sizes = [8, 128], strides = [1, 1]} : vector<8x512xf32> to vector<8x128xf32>
    %792 = math.tanh %791 : vector<8x128xf32>
    %793 = vector.extract_strided_slice %774 {offsets = [0, 384], sizes = [8, 128], strides = [1, 1]} : vector<8x512xf32> to vector<8x128xf32>
    %cst_230 = arith.constant 5.000000e-01 : f32
    %794 = vector.broadcast %cst_230 : f32 to vector<8x128xf32>
    %795 = arith.mulf %794, %793 : vector<8x128xf32>
    %796 = math.tanh %795 : vector<8x128xf32>
    %cst_231 = arith.constant 5.000000e-01 : f32
    %797 = vector.broadcast %cst_231 : f32 to vector<8x128xf32>
    %798 = arith.mulf %797, %796 : vector<8x128xf32>
    %cst_232 = arith.constant 5.000000e-01 : f32
    %799 = vector.broadcast %cst_232 : f32 to vector<8x128xf32>
    %800 = arith.addf %798, %799 : vector<8x128xf32>
    %801 = arith.mulf %790, %704 : vector<8x128xf32>
    %802 = arith.mulf %782, %792 : vector<8x128xf32>
    %803 = arith.addf %801, %802 : vector<8x128xf32>
    %804 = math.tanh %803 : vector<8x128xf32>
    %805 = arith.mulf %800, %804 : vector<8x128xf32>
    %806 = vector.broadcast %c7_i32_219 : i32 to vector<8x1xi32>
    %807 = arith.cmpi sgt, %2, %806 : vector<8x1xi32>
    %808 = vector.shape_cast %807 : vector<8x1xi1> to vector<8x1xi1>
    %809 = vector.broadcast %808 : vector<8x1xi1> to vector<8x128xi1>
    %810 = arith.select %809, %805, %701 : vector<8x128xi1>, vector<8x128xf32>
    %811 = vector.shape_cast %807 : vector<8x1xi1> to vector<8x1xi1>
    %812 = vector.broadcast %811 : vector<8x1xi1> to vector<8x128xi1>
    %813 = arith.select %812, %803, %704 : vector<8x128xi1>, vector<8x128xf32>
    %cst_233 = arith.constant 0.000000e+00 : f32
    %814 = vector.shape_cast %807 : vector<8x1xi1> to vector<8x1xi1>
    %815 = vector.broadcast %814 : vector<8x1xi1> to vector<8x128xi1>
    %816 = vector.broadcast %cst_233 : f32 to vector<8x128xf32>
    %817 = arith.select %815, %805, %816 : vector<8x128xi1>, vector<8x128xf32>
    %818 = arith.index_cast %c7_i32_219 : i32 to index
    %c0_234 = arith.constant 0 : index
    %c0_235 = arith.constant 0 : index
    %819 = vector.load %arg5[%818, %c0_234, %c0_235] : memref<8x8x256xf32, #tpu.memory_space<vmem>>, vector<1x8x128xf32>
    %820 = vector.shape_cast %819 : vector<1x8x128xf32> to vector<8x128xf32>
    %821 = vector.shape_cast %817 : vector<8x128xf32> to vector<1x8x128xf32>
    tpu.vector_store %arg5[%818, %c0_234, %c0_235], %821 {strides = array<i32>} : memref<8x8x256xf32, #tpu.memory_space<vmem>>, vector<1x8x128xf32>,
    %822 = arith.index_cast %767 : i32 to index
    %c0_236 = arith.constant 0 : index
    %c512_237 = arith.constant 512 : index
    %823 = vector.load %arg1[%822, %c0_236, %c512_237] : memref<8x8x1024xbf16, #tpu.memory_space<vmem>>, vector<1x8x512xbf16>
    %824 = vector.shape_cast %823 : vector<1x8x512xbf16> to vector<8x512xbf16>
    %825 = arith.extf %824 : vector<8x512xbf16> to vector<8x512xf32>
    %826 = arith.truncf %755 : vector<8x128xf32> to vector<8x128xbf16>
    %cst_238 = arith.constant dense<0.000000e+00> : vector<8x512xf32>
    %827 = tpu.matmul %826, %1, %cst_238 {dimension_numbers = #tpu.dot_dimension_numbers<[1], [0], [0], [1], [0, 0, 1, 1], [], []>} : vector<8x128xbf16>, vector<128x512xbf16>, vector<8x512xf32> -> vector<8x512xf32>
    %828 = arith.addf %825, %827 : vector<8x512xf32>
    %829 = vector.extract_strided_slice %828 {offsets = [0, 0], sizes = [8, 128], strides = [1, 1]} : vector<8x512xf32> to vector<8x128xf32>
    %cst_239 = arith.constant 5.000000e-01 : f32
    %830 = vector.broadcast %cst_239 : f32 to vector<8x128xf32>
    %831 = arith.mulf %830, %829 : vector<8x128xf32>
    %832 = math.tanh %831 : vector<8x128xf32>
    %cst_240 = arith.constant 5.000000e-01 : f32
    %833 = vector.broadcast %cst_240 : f32 to vector<8x128xf32>
    %834 = arith.mulf %833, %832 : vector<8x128xf32>
    %cst_241 = arith.constant 5.000000e-01 : f32
    %835 = vector.broadcast %cst_241 : f32 to vector<8x128xf32>
    %836 = arith.addf %834, %835 : vector<8x128xf32>
    %837 = vector.extract_strided_slice %828 {offsets = [0, 128], sizes = [8, 128], strides = [1, 1]} : vector<8x512xf32> to vector<8x128xf32>
    %cst_242 = arith.constant 5.000000e-01 : f32
    %838 = vector.broadcast %cst_242 : f32 to vector<8x128xf32>
    %839 = arith.mulf %838, %837 : vector<8x128xf32>
    %840 = math.tanh %839 : vector<8x128xf32>
    %cst_243 = arith.constant 5.000000e-01 : f32
    %841 = vector.broadcast %cst_243 : f32 to vector<8x128xf32>
    %842 = arith.mulf %841, %840 : vector<8x128xf32>
    %cst_244 = arith.constant 5.000000e-01 : f32
    %843 = vector.broadcast %cst_244 : f32 to vector<8x128xf32>
    %844 = arith.addf %842, %843 : vector<8x128xf32>
    %845 = vector.extract_strided_slice %828 {offsets = [0, 256], sizes = [8, 128], strides = [1, 1]} : vector<8x512xf32> to vector<8x128xf32>
    %846 = math.tanh %845 : vector<8x128xf32>
    %847 = vector.extract_strided_slice %828 {offsets = [0, 384], sizes = [8, 128], strides = [1, 1]} : vector<8x512xf32> to vector<8x128xf32>
    %cst_245 = arith.constant 5.000000e-01 : f32
    %848 = vector.broadcast %cst_245 : f32 to vector<8x128xf32>
    %849 = arith.mulf %848, %847 : vector<8x128xf32>
    %850 = math.tanh %849 : vector<8x128xf32>
    %cst_246 = arith.constant 5.000000e-01 : f32
    %851 = vector.broadcast %cst_246 : f32 to vector<8x128xf32>
    %852 = arith.mulf %851, %850 : vector<8x128xf32>
    %cst_247 = arith.constant 5.000000e-01 : f32
    %853 = vector.broadcast %cst_247 : f32 to vector<8x128xf32>
    %854 = arith.addf %852, %853 : vector<8x128xf32>
    %855 = arith.mulf %844, %758 : vector<8x128xf32>
    %856 = arith.mulf %836, %846 : vector<8x128xf32>
    %857 = arith.addf %855, %856 : vector<8x128xf32>
    %858 = math.tanh %857 : vector<8x128xf32>
    %859 = arith.mulf %854, %858 : vector<8x128xf32>
    %860 = vector.broadcast %767 : i32 to vector<8x1xi32>
    %861 = arith.cmpi sgt, %2, %860 : vector<8x1xi32>
    %862 = vector.shape_cast %861 : vector<8x1xi1> to vector<8x1xi1>
    %863 = vector.broadcast %862 : vector<8x1xi1> to vector<8x128xi1>
    %864 = arith.select %863, %859, %755 : vector<8x128xi1>, vector<8x128xf32>
    %865 = vector.shape_cast %861 : vector<8x1xi1> to vector<8x1xi1>
    %866 = vector.broadcast %865 : vector<8x1xi1> to vector<8x128xi1>
    %867 = arith.select %866, %857, %758 : vector<8x128xi1>, vector<8x128xf32>
    %cst_248 = arith.constant 0.000000e+00 : f32
    %868 = vector.shape_cast %861 : vector<8x1xi1> to vector<8x1xi1>
    %869 = vector.broadcast %868 : vector<8x1xi1> to vector<8x128xi1>
    %870 = vector.broadcast %cst_248 : f32 to vector<8x128xf32>
    %871 = arith.select %869, %859, %870 : vector<8x128xi1>, vector<8x128xf32>
    %872 = arith.index_cast %767 : i32 to index
    %c0_249 = arith.constant 0 : index
    %c128_250 = arith.constant 128 : index
    %873 = vector.load %arg5[%872, %c0_249, %c128_250] : memref<8x8x256xf32, #tpu.memory_space<vmem>>, vector<1x8x128xf32>
    %874 = vector.shape_cast %873 : vector<1x8x128xf32> to vector<8x128xf32>
    %875 = vector.shape_cast %871 : vector<8x128xf32> to vector<1x8x128xf32>
    tpu.vector_store %arg5[%872, %c0_249, %c128_250], %875 {strides = array<i32>} : memref<8x8x256xf32, #tpu.memory_space<vmem>>, vector<1x8x128xf32>,
    %c8_i32 = arith.constant 8 : i32
    %876 = tpu.concatenate %810, %864 in 1 : vector<8x128xf32>, vector<8x128xf32> -> vector<8x256xf32>
    %c0_251 = arith.constant 0 : index
    %c0_252 = arith.constant 0 : index
    %877 = vector.load %arg6[%c0_251, %c0_252] : memref<8x256xf32, #tpu.memory_space<vmem>>, vector<8x256xf32>
    tpu.vector_store %arg6[%c0_251, %c0_252], %876 {strides = array<i32>} : memref<8x256xf32, #tpu.memory_space<vmem>>, vector<8x256xf32>,
    return
  }
  func.func @transform_0(%arg0: i32) -> (i32, i32, i32) {
    %c0_i32 = arith.constant 0 : i32
    %c0_i32_0 = arith.constant 0 : i32
    %c0_i32_1 = arith.constant 0 : i32
    return %c0_i32, %arg0, %c0_i32_0 : i32, i32, i32
  }
  func.func @transform_1(%arg0: i32) -> (i32, i32) {
    %c0_i32 = arith.constant 0 : i32
    %c0_i32_0 = arith.constant 0 : i32
    %c0_i32_1 = arith.constant 0 : i32
    return %c0_i32, %c0_i32_0 : i32, i32
  }
  func.func @transform_2(%arg0: i32) -> (i32, i32) {
    %c0_i32 = arith.constant 0 : i32
    %c0_i32_0 = arith.constant 0 : i32
    %c0_i32_1 = arith.constant 0 : i32
    return %c0_i32, %c0_i32_0 : i32, i32
  }
  func.func @transform_3(%arg0: i32) -> (i32, i32) {
    %c0_i32 = arith.constant 0 : i32
    %c0_i32_0 = arith.constant 0 : i32
    return %arg0, %c0_i32 : i32, i32
  }
  func.func @transform_4(%arg0: i32) -> (i32, i32, i32) {
    %c0_i32 = arith.constant 0 : i32
    %c0_i32_0 = arith.constant 0 : i32
    %c0_i32_1 = arith.constant 0 : i32
    return %c0_i32, %arg0, %c0_i32_0 : i32, i32, i32
  }
  func.func @transform_5(%arg0: i32) -> (i32, i32) {
    %c0_i32 = arith.constant 0 : i32
    %c0_i32_0 = arith.constant 0 : i32
    return %arg0, %c0_i32 : i32, i32
  }
}

</mosaic_0001>

<llo_original>
// kernel: tpu_custom_call.1
$region0: #{tpu_custom_call.1}
  #allocation0 [shape = 'u32[]', space=smem, size = 0x4, offset = 0x4, fixed_abs, tag = 'smem constant byte address 0x4 - core index']
  #allocation1 [shape = 'u32[144,128]{1,0:T(1,128)}', space=vmem, size = 0x12000, scoped, tag = 'internal scratch']
  %s0 = inlined_call_operand.hbm [shape: bf16[8,8,1024], index: 0, kind: input, shape index: {}]
  %s1 = inlined_call_operand.hbm [shape: bf16[128,512], index: 1, kind: input, shape index: {}]
  %s2 = inlined_call_operand.hbm [shape: bf16[128,512], index: 2, kind: input, shape index: {}]
  %s3 = inlined_call_operand.vmem [shape: s32[8,1], index: 3, kind: input, shape index: {}]
  %s4 = inlined_call_operand.hbm [shape: f32[8,8,256], index: 4, kind: output, shape index: {0}]
  %s5 = inlined_call_operand.hbm [shape: f32[8,256], index: 5, kind: output, shape index: {1}]
  %6 = xla_tuple %s4, %s5
  %s7 = sld [smem:[#allocation0]]
  $region46: #{tpu_custom_call.1} parent=0
    _
  %s9 = ssub.s32 1, %s7
  %s10 = scalar_select 0, %s9, %s7
  $region1: #{tpu_custom_call.1} parent=0
    #allocation2 [shape = 'u8[131072]{0}', space=vmem, size = 0x20000, scoped, tag = 'input window, operand 0, single buffered']
    #allocation3 [shape = 's32[1]{0}', space=sflag, size = 0x4, scoped, tag = 'scoped memory for tpu_custom_call.1']
    #allocation4 [shape = 's32[1]{0}', space=sflag, size = 0x4, scoped, tag = 'scoped memory for tpu_custom_call.1']
    #allocation5 [shape = 'u8[131072]{0}', space=vmem, size = 0x20000, scoped, tag = 'input window, operand 1, single buffered']
    #allocation6 [shape = 's32[1]{0}', space=sflag, size = 0x4, scoped, tag = 'scoped memory for tpu_custom_call.1']
    #allocation7 [shape = 'u8[131072]{0}', space=vmem, size = 0x20000, scoped, tag = 'input window, operand 2, single buffered']
    #allocation8 [shape = 'u8[65536]{0}', space=vmem, size = 0x10000, scoped, tag = 'output window, operand 0, single buffered']
    #allocation9 [shape = 'u8[8192]{0}', space=vmem, size = 0x2000, scoped, tag = 'output window, operand 1, single buffered']
    #allocation10 [shape = 's32[1]{0}', space=sflag, size = 0x4, scoped, tag = 'scoped memory for tpu_custom_call.1']
    %11 = vsyncpa [#allocation3], 0
    %12 = vsyncpa [#allocation6], 0
    %13 = vsyncpa [#allocation4], 0
    %14 = vsyncpa [#allocation10], 0
    // Predicated region
    $region2: #{tpu_custom_call.1} parent=1 // pred_check
      _
    $region3: #{tpu_custom_call.1} parent=1 // pred_check_branch
      %16 = sbr.rel (0) target = $region5
    $region4: #{tpu_custom_call.1} parent=1 // pred_region
      %s18 = ssub.s32 4096, 4096
      %19 = vsyncadd [#allocation3], %s18
      %s20 = sshll.u32 [#allocation2], 4
      %s21 = int_to_ptr.vmem [resolvable:$true] %s20
      %26 = dma.hbm_to_vmem [thread:$0]  %s0, 4096, %s21, [#allocation3], 512, 512, 32
    $region5: #{tpu_custom_call.1} parent=1 // pred_fallthru
      _
    // Predicated region
    $region6: #{tpu_custom_call.1} parent=1 // pred_check
      _
    $region7: #{tpu_custom_call.1} parent=1 // pred_check_branch
      %28 = sbr.rel (0) target = $region9
    $region8: #{tpu_custom_call.1} parent=1 // pred_region
      %s30 = ssub.s32 4096, 4096
      %31 = vsyncadd [#allocation6], %s30
      %s32 = sshll.u32 [#allocation5], 4
      %s33 = int_to_ptr.vmem [resolvable:$true] %s32
      %38 = dma.hbm_to_vmem [thread:$0]  %s1, 4096, %s33, [#allocation6], 256, 256, 16
    $region9: #{tpu_custom_call.1} parent=1 // pred_fallthru
      _
    // Predicated region
    $region10: #{tpu_custom_call.1} parent=1 // pred_check
      _
    $region11: #{tpu_custom_call.1} parent=1 // pred_check_branch
      %40 = sbr.rel (0) target = $region13
    $region12: #{tpu_custom_call.1} parent=1 // pred_region
      %s42 = ssub.s32 4096, 4096
      %43 = vsyncadd [#allocation6], %s42
      %s44 = sshll.u32 [#allocation7], 4
      %s45 = int_to_ptr.vmem [resolvable:$true] %s44
      %50 = dma.hbm_to_vmem [thread:$0]  %s2, 4096, %s45, [#allocation6], 256, 256, 16
    $region13: #{tpu_custom_call.1} parent=1 // pred_fallthru
      _
    // Predicated region
    $region14: #{tpu_custom_call.1} parent=1 // pred_check
      _
    $region15: #{tpu_custom_call.1} parent=1 // pred_check_branch
      %52 = sbr.rel (0) target = $region17
    $region16: #{tpu_custom_call.1} parent=1 // pred_region
      _
    $region17: #{tpu_custom_call.1} parent=1 // pred_fallthru
      _
    // Predicated region
    $region18: #{tpu_custom_call.1} parent=1 // pred_check
      _
    $region19: #{tpu_custom_call.1} parent=1 // pred_check_branch
      %54 = sbr.rel (0) target = $region21
    $region20: #{tpu_custom_call.1} parent=1 // pred_region
      %55 = dma.done [#allocation3], 4096
    $region21: #{tpu_custom_call.1} parent=1 // pred_fallthru
      _
    // Predicated region
    $region22: #{tpu_custom_call.1} parent=1 // pred_check
      _
    $region23: #{tpu_custom_call.1} parent=1 // pred_check_branch
      %57 = sbr.rel (0) target = $region25
    $region24: #{tpu_custom_call.1} parent=1 // pred_region
      %58 = dma.done [#allocation6], 4096
    $region25: #{tpu_custom_call.1} parent=1 // pred_fallthru
      _
    // Predicated region
    $region26: #{tpu_custom_call.1} parent=1 // pred_check
      _
    $region27: #{tpu_custom_call.1} parent=1 // pred_check_branch
      %60 = sbr.rel (0) target = $region29
    $region28: #{tpu_custom_call.1} parent=1 // pred_region
      %61 = dma.done [#allocation6], 4096
    $region29: #{tpu_custom_call.1} parent=1 // pred_fallthru
      _
    %v63 = vld [vmem:[#allocation5] sm:$0xff]
    %v64 = vld [vmem:[#allocation5 + $0x8] sm:$0xff]
    %v65 = vld [vmem:[#allocation5 + $0x10] sm:$0xff]
    %v66 = vld [vmem:[#allocation5 + $0x18] sm:$0xff]
    %v67 = vld [vmem:[#allocation5 + $0x20] sm:$0xff]
    %v68 = vld [vmem:[#allocation5 + $0x28] sm:$0xff]
    %v69 = vld [vmem:[#allocation5 + $0x30] sm:$0xff]
    %v70 = vld [vmem:[#allocation5 + $0x38] sm:$0xff]
    %v71 = vld [vmem:[#allocation5 + $0x40] sm:$0xff]
    %v72 = vld [vmem:[#allocation5 + $0x48] sm:$0xff]
    %v73 = vld [vmem:[#allocation5 + $0x50] sm:$0xff]
    %v74 = vld [vmem:[#allocation5 + $0x58] sm:$0xff]
    %v75 = vld [vmem:[#allocation5 + $0x60] sm:$0xff]
    %v76 = vld [vmem:[#allocation5 + $0x68] sm:$0xff]
    %v77 = vld [vmem:[#allocation5 + $0x70] sm:$0xff]
    %v78 = vld [vmem:[#allocation5 + $0x78] sm:$0xff]
    %v79 = vld [vmem:[#allocation5 + $0x80] sm:$0xff]
    %v80 = vld [vmem:[#allocation5 + $0x88] sm:$0xff]
    %v81 = vld [vmem:[#allocation5 + $0x90] sm:$0xff]
    %v82 = vld [vmem:[#allocation5 + $0x98] sm:$0xff]
    %v83 = vld [vmem:[#allocation5 + $0xa0] sm:$0xff]
    %v84 = vld [vmem:[#allocation5 + $0xa8] sm:$0xff]
    %v85 = vld [vmem:[#allocation5 + $0xb0] sm:$0xff]
    %v86 = vld [vmem:[#allocation5 + $0xb8] sm:$0xff]
    %v87 = vld [vmem:[#allocation5 + $0xc0] sm:$0xff]
    %v88 = vld [vmem:[#allocation5 + $0xc8] sm:$0xff]
    %v89 = vld [vmem:[#allocation5 + $0xd0] sm:$0xff]
    %v90 = vld [vmem:[#allocation5 + $0xd8] sm:$0xff]
    %v91 = vld [vmem:[#allocation5 + $0xe0] sm:$0xff]
    %v92 = vld [vmem:[#allocation5 + $0xe8] sm:$0xff]
    %v93 = vld [vmem:[#allocation5 + $0xf0] sm:$0xff]
    %v94 = vld [vmem:[#allocation5 + $0xf8] sm:$0xff]
    %v95 = vld [vmem:[#allocation7] sm:$0xff]
    %v96 = vld [vmem:[#allocation7 + $0x8] sm:$0xff]
    %v97 = vld [vmem:[#allocation7 + $0x10] sm:$0xff]
    %v98 = vld [vmem:[#allocation7 + $0x18] sm:$0xff]
    %v99 = vld [vmem:[#allocation7 + $0x20] sm:$0xff]
    %v100 = vld [vmem:[#allocation7 + $0x28] sm:$0xff]
    %v101 = vld [vmem:[#allocation7 + $0x30] sm:$0xff]
    %v102 = vld [vmem:[#allocation7 + $0x38] sm:$0xff]
    %v103 = vld [vmem:[#allocation7 + $0x40] sm:$0xff]
    %v104 = vld [vmem:[#allocation7 + $0x48] sm:$0xff]
    %v105 = vld [vmem:[#allocation7 + $0x50] sm:$0xff]
    %v106 = vld [vmem:[#allocation7 + $0x58] sm:$0xff]
    %v107 = vld [vmem:[#allocation7 + $0x60] sm:$0xff]
    %v108 = vld [vmem:[#allocation7 + $0x68] sm:$0xff]
    %v109 = vld [vmem:[#allocation7 + $0x70] sm:$0xff]
    %v110 = vld [vmem:[#allocation7 + $0x78] sm:$0xff]
    %v111 = vld [vmem:[#allocation7 + $0x80] sm:$0xff]
    %v112 = vld [vmem:[#allocation7 + $0x88] sm:$0xff]
    %v113 = vld [vmem:[#allocation7 + $0x90] sm:$0xff]
    %v114 = vld [vmem:[#allocation7 + $0x98] sm:$0xff]
    %v115 = vld [vmem:[#allocation7 + $0xa0] sm:$0xff]
    %v116 = vld [vmem:[#allocation7 + $0xa8] sm:$0xff]
    %v117 = vld [vmem:[#allocation7 + $0xb0] sm:$0xff]
    %v118 = vld [vmem:[#allocation7 + $0xb8] sm:$0xff]
    %v119 = vld [vmem:[#allocation7 + $0xc0] sm:$0xff]
    %v120 = vld [vmem:[#allocation7 + $0xc8] sm:$0xff]
    %v121 = vld [vmem:[#allocation7 + $0xd0] sm:$0xff]
    %v122 = vld [vmem:[#allocation7 + $0xd8] sm:$0xff]
    %v123 = vld [vmem:[#allocation7 + $0xe0] sm:$0xff]
    %v124 = vld [vmem:[#allocation7 + $0xe8] sm:$0xff]
    %v125 = vld [vmem:[#allocation7 + $0xf0] sm:$0xff]
    %v126 = vld [vmem:[#allocation7 + $0xf8] sm:$0xff]
    %v127 = vld [vmem:[%s3] sm:$0xff]
    %v128 = vld [vmem:[#allocation2] sm:$0xff]
    %v129 = vld [vmem:[#allocation2 + $0x8] sm:$0xff]
    %v130 = vunpack.c.l.bf16 %v128
    %v131 = vunpack.c.h.bf16 %v128
    %v132 = vunpack.c.l.bf16 %v129
    %v133 = vunpack.c.h.bf16 %v129
    %v166 = vunpack.c.l.b16 %v63
    %v167 = vunpack.c.h.b16 %v63
    %v168 = vunpack.c.l.b16 %v64
    %v169 = vunpack.c.h.b16 %v64
    %v170 = vunpack.c.l.b16 %v65
    %v171 = vunpack.c.h.b16 %v65
    %v172 = vunpack.c.l.b16 %v66
    %v173 = vunpack.c.h.b16 %v66
    %v174 = vunpack.c.l.b16 %v67
    %v175 = vunpack.c.h.b16 %v67
    %v176 = vunpack.c.l.b16 %v68
    %v177 = vunpack.c.h.b16 %v68
    %v178 = vunpack.c.l.b16 %v69
    %v179 = vunpack.c.h.b16 %v69
    %v180 = vunpack.c.l.b16 %v70
    %v181 = vunpack.c.h.b16 %v70
    %v182 = vunpack.c.l.b16 %v71
    %v183 = vunpack.c.h.b16 %v71
    %v184 = vunpack.c.l.b16 %v72
    %v185 = vunpack.c.h.b16 %v72
    %v186 = vunpack.c.l.b16 %v73
    %v187 = vunpack.c.h.b16 %v73
    %v188 = vunpack.c.l.b16 %v74
    %v189 = vunpack.c.h.b16 %v74
    %v190 = vunpack.c.l.b16 %v75
    %v191 = vunpack.c.h.b16 %v75
    %v192 = vunpack.c.l.b16 %v76
    %v193 = vunpack.c.h.b16 %v76
    %v194 = vunpack.c.l.b16 %v77
    %v195 = vunpack.c.h.b16 %v77
    %v196 = vunpack.c.l.b16 %v78
    %v197 = vunpack.c.h.b16 %v78
    %v198 = vunpack.c.l.b16 %v79
    %v199 = vunpack.c.h.b16 %v79
    %v200 = vunpack.c.l.b16 %v80
    %v201 = vunpack.c.h.b16 %v80
    %v202 = vunpack.c.l.b16 %v81
    %v203 = vunpack.c.h.b16 %v81
    %v204 = vunpack.c.l.b16 %v82
    %v205 = vunpack.c.h.b16 %v82
    %v206 = vunpack.c.l.b16 %v83
    %v207 = vunpack.c.h.b16 %v83
    %v208 = vunpack.c.l.b16 %v84
    %v209 = vunpack.c.h.b16 %v84
    %v210 = vunpack.c.l.b16 %v85
    %v211 = vunpack.c.h.b16 %v85
    %v212 = vunpack.c.l.b16 %v86
    %v213 = vunpack.c.h.b16 %v86
    %v214 = vunpack.c.l.b16 %v87
    %v215 = vunpack.c.h.b16 %v87
    %v216 = vunpack.c.l.b16 %v88
    %v217 = vunpack.c.h.b16 %v88
    %v218 = vunpack.c.l.b16 %v89
    %v219 = vunpack.c.h.b16 %v89
    %v220 = vunpack.c.l.b16 %v90
    %v221 = vunpack.c.h.b16 %v90
    %v222 = vunpack.c.l.b16 %v91
    %v223 = vunpack.c.h.b16 %v91
    %v224 = vunpack.c.l.b16 %v92
    %v225 = vunpack.c.h.b16 %v92
    %v226 = vunpack.c.l.b16 %v93
    %v227 = vunpack.c.h.b16 %v93
    %v228 = vunpack.c.l.b16 %v94
    %v229 = vunpack.c.h.b16 %v94
    %v230 = vpack.c.b16 %v170, %v166
    %v231 = vpack.c.b16 %v171, %v167
    %v232 = vpack.c.b16 %v172, %v168
    %v233 = vpack.c.b16 %v173, %v169
    %v234 = vpack.c.b16 %v178, %v174
    %v235 = vpack.c.b16 %v179, %v175
    %v236 = vpack.c.b16 %v180, %v176
    %v237 = vpack.c.b16 %v181, %v177
    %v238 = vpack.c.b16 %v186, %v182
    %v239 = vpack.c.b16 %v187, %v183
    %v240 = vpack.c.b16 %v188, %v184
    %v241 = vpack.c.b16 %v189, %v185
    %v242 = vpack.c.b16 %v194, %v190
    %v243 = vpack.c.b16 %v195, %v191
    %v244 = vpack.c.b16 %v196, %v192
    %v245 = vpack.c.b16 %v197, %v193
    %v246 = vpack.c.b16 %v202, %v198
    %v247 = vpack.c.b16 %v203, %v199
    %v248 = vpack.c.b16 %v204, %v200
    %v249 = vpack.c.b16 %v205, %v201
    %v250 = vpack.c.b16 %v210, %v206
    %v251 = vpack.c.b16 %v211, %v207
    %v252 = vpack.c.b16 %v212, %v208
    %v253 = vpack.c.b16 %v213, %v209
    %v254 = vpack.c.b16 %v218, %v214
    %v255 = vpack.c.b16 %v219, %v215
    %v256 = vpack.c.b16 %v220, %v216
    %v257 = vpack.c.b16 %v221, %v217
    %v258 = vpack.c.b16 %v226, %v222
    %v259 = vpack.c.b16 %v227, %v223
    %v260 = vpack.c.b16 %v228, %v224
    %v261 = vpack.c.b16 %v229, %v225
    %294 = vmatprep.subr.bf16.mxu0 %v231
    %295 = vmatpush1.bf16.msra.mxu0 %v230
    %296 = vmatprep.subr.bf16.mxu0 %v235
    %297 = vmatpush1.bf16.msra.mxu0 %v234
    %298 = vmatprep.subr.bf16.mxu0 %v239
    %299 = vmatpush1.bf16.msra.mxu0 %v238
    %300 = vmatprep.subr.bf16.mxu0 %v243
    %301 = vmatpush1.bf16.msra.mxu0 %v242
    %302 = vmatprep.subr.bf16.mxu0 %v247
    %303 = vmatpush1.bf16.msra.mxu0 %v246
    %304 = vmatprep.subr.bf16.mxu0 %v251
    %305 = vmatpush1.bf16.msra.mxu0 %v250
    %306 = vmatprep.subr.bf16.mxu0 %v255
    %307 = vmatpush1.bf16.msra.mxu0 %v254
    %308 = vmatprep.subr.bf16.mxu0 %v259
    %309 = vmatpush1.bf16.msra.mxu0 %v258
    %310 = vmatprep.subr.bf16.mxu0 0
    %311 = vmatpush1.bf16.msra.mxu0 0
    %312 = vmatprep.subr.bf16.mxu0 0
    %313 = vmatpush1.bf16.msra.mxu0 0
    %314 = vmatprep.subr.bf16.mxu0 0
    %315 = vmatpush1.bf16.msra.mxu0 0
    %316 = vmatprep.subr.bf16.mxu0 0
    %317 = vmatpush1.bf16.msra.mxu0 0
    %318 = vmatprep.subr.bf16.mxu0 0
    %319 = vmatpush1.bf16.msra.mxu0 0
    %320 = vmatprep.subr.bf16.mxu0 0
    %321 = vmatpush1.bf16.msra.mxu0 0
    %322 = vmatprep.subr.bf16.mxu0 0
    %323 = vmatpush1.bf16.msra.mxu0 0
    %324 = vmatprep.subr.bf16.mxu0 0
    %325 = vmatpush1.bf16.msra.mxu0 0
    %326 = vmatprep.mubr.bf16.mxu0 0
    %327 = vmatmul.mubr.bf16.gmra.mrb[0].mxu0 0
    %v328 = vpop.f32.mrb[0].mxu0
    %v329 = vadd.f32 0.0, %v328
    %v330 = vpop.f32.mrb[0].mxu0
    %v331 = vadd.f32 0.0, %v330
    %v332 = vpop.f32.mrb[0].mxu0
    %v333 = vpop.f32.mrb[0].mxu0
    %334 = vdwg.mxu0
    %335 = vmatprep.subr.bf16.mxu0 %v233
    %336 = vmatpush1.bf16.msra.mxu0 %v232
    %337 = vmatprep.subr.bf16.mxu0 %v237
    %338 = vmatpush1.bf16.msra.mxu0 %v236
    %339 = vmatprep.subr.bf16.mxu0 %v241
    %340 = vmatpush1.bf16.msra.mxu0 %v240
    %341 = vmatprep.subr.bf16.mxu0 %v245
    %342 = vmatpush1.bf16.msra.mxu0 %v244
    %343 = vmatprep.subr.bf16.mxu0 %v249
    %344 = vmatpush1.bf16.msra.mxu0 %v248
    %345 = vmatprep.subr.bf16.mxu0 %v253
    %346 = vmatpush1.bf16.msra.mxu0 %v252
    %347 = vmatprep.subr.bf16.mxu0 %v257
    %348 = vmatpush1.bf16.msra.mxu0 %v256
    %349 = vmatprep.subr.bf16.mxu0 %v261
    %350 = vmatpush1.bf16.msra.mxu0 %v260
    %351 = vmatprep.subr.bf16.mxu0 0
    %352 = vmatpush1.bf16.msra.mxu0 0
    %353 = vmatprep.subr.bf16.mxu0 0
    %354 = vmatpush1.bf16.msra.mxu0 0
    %355 = vmatprep.subr.bf16.mxu0 0
    %356 = vmatpush1.bf16.msra.mxu0 0
    %357 = vmatprep.subr.bf16.mxu0 0
    %358 = vmatpush1.bf16.msra.mxu0 0
    %359 = vmatprep.subr.bf16.mxu0 0
    %360 = vmatpush1.bf16.msra.mxu0 0
    %361 = vmatprep.subr.bf16.mxu0 0
    %362 = vmatpush1.bf16.msra.mxu0 0
    %363 = vmatprep.subr.bf16.mxu0 0
    %364 = vmatpush1.bf16.msra.mxu0 0
    %365 = vmatprep.subr.bf16.mxu0 0
    %366 = vmatpush1.bf16.msra.mxu0 0
    %367 = vmatprep.mubr.bf16.mxu0 0
    %368 = vmatmul.mubr.bf16.gmra.mrb[0].mxu0 0
    %v369 = vpop.f32.mrb[0].mxu0
    %v370 = vadd.f32 0.0, %v369
    %v371 = vpop.f32.mrb[0].mxu0
    %v372 = vadd.f32 0.0, %v371
    %v373 = vpop.f32.mrb[0].mxu0
    %v374 = vpop.f32.mrb[0].mxu0
    %375 = vdwg.mxu0
    %v376 = vadd.f32 %v130, %v329
    %v377 = vadd.f32 %v131, %v331
    %v378 = vadd.f32 %v132, %v370
    %v379 = vadd.f32 %v133, %v372
    %v380 = vmul.f32 %v376, 0.5
    %v381 = vtanh.pop %v380
    %v382 = vmul.f32 %v381, 0.5
    %v383 = vadd.f32 %v382, 0.5
    %v384 = vmul.f32 %v377, 0.5
    %v385 = vtanh.pop %v384
    %v386 = vmul.f32 %v385, 0.5
    %v387 = vadd.f32 %v386, 0.5
    %v388 = vtanh.pop %v378
    %v389 = vmul.f32 %v379, 0.5
    %v390 = vtanh.pop %v389
    %v391 = vmul.f32 %v390, 0.5
    %v392 = vadd.f32 %v391, 0.5
    %v393 = vmul.f32 %v387, 0.0
    %v394 = vmul.f32 %v383, %v388
    %v395 = vadd.f32 %v393, %v394
    %v396 = vtanh.pop %v395
    %v397 = vmul.f32 %v392, %v396
    %vm398 = vcmp.gt.s32.totalorder %v127, 0
    %v399 = vsel %vm398, 1, 0
    %400 = vset.pattern.permute.xlu0 0
    %401 = vperm.xlu0 %400, %v399
    %v402 = vpop.permute.xlu0 %401
    %vm403 = vcmp.eq.s32.totalorder %v402, 1
    %v404 = vsel %vm403, %v397, 0.0
    %v405 = vsel %vm403, %v395, 0.0
    %406 = vst [vmem:[#allocation8] sm:$0xff] %v404
    %s407 = scalar_lea.vmem [#allocation2], 224
    %v408 = vld [vmem:[%s407 + $0x10] sm:$0xff]
    %v409 = vld [vmem:[%s407 + $0x18] sm:$0xff]
    %v410 = vunpack.c.l.bf16 %v408
    %v411 = vunpack.c.h.bf16 %v408
    %v412 = vunpack.c.l.bf16 %v409
    %v413 = vunpack.c.h.bf16 %v409
    %v446 = vunpack.c.l.b16 %v95
    %v447 = vunpack.c.h.b16 %v95
    %v448 = vunpack.c.l.b16 %v96
    %v449 = vunpack.c.h.b16 %v96
    %v450 = vunpack.c.l.b16 %v97
    %v451 = vunpack.c.h.b16 %v97
    %v452 = vunpack.c.l.b16 %v98
    %v453 = vunpack.c.h.b16 %v98
    %v454 = vunpack.c.l.b16 %v99
    %v455 = vunpack.c.h.b16 %v99
    %v456 = vunpack.c.l.b16 %v100
    %v457 = vunpack.c.h.b16 %v100
    %v458 = vunpack.c.l.b16 %v101
    %v459 = vunpack.c.h.b16 %v101
    %v460 = vunpack.c.l.b16 %v102
    %v461 = vunpack.c.h.b16 %v102
    %v462 = vunpack.c.l.b16 %v103
    %v463 = vunpack.c.h.b16 %v103
    %v464 = vunpack.c.l.b16 %v104
    %v465 = vunpack.c.h.b16 %v104
    %v466 = vunpack.c.l.b16 %v105
    %v467 = vunpack.c.h.b16 %v105
    %v468 = vunpack.c.l.b16 %v106
    %v469 = vunpack.c.h.b16 %v106
    %v470 = vunpack.c.l.b16 %v107
    %v471 = vunpack.c.h.b16 %v107
    %v472 = vunpack.c.l.b16 %v108
    %v473 = vunpack.c.h.b16 %v108
    %v474 = vunpack.c.l.b16 %v109
    %v475 = vunpack.c.h.b16 %v109
    %v476 = vunpack.c.l.b16 %v110
    %v477 = vunpack.c.h.b16 %v110
    %v478 = vunpack.c.l.b16 %v111
    %v479 = vunpack.c.h.b16 %v111
    %v480 = vunpack.c.l.b16 %v112
    %v481 = vunpack.c.h.b16 %v112
    %v482 = vunpack.c.l.b16 %v113
    %v483 = vunpack.c.h.b16 %v113
    %v484 = vunpack.c.l.b16 %v114
    %v485 = vunpack.c.h.b16 %v114
    %v486 = vunpack.c.l.b16 %v115
    %v487 = vunpack.c.h.b16 %v115
    %v488 = vunpack.c.l.b16 %v116
    %v489 = vunpack.c.h.b16 %v116
    %v490 = vunpack.c.l.b16 %v117
    %v491 = vunpack.c.h.b16 %v117
    %v492 = vunpack.c.l.b16 %v118
    %v493 = vunpack.c.h.b16 %v118
    %v494 = vunpack.c.l.b16 %v119
    %v495 = vunpack.c.h.b16 %v119
    %v496 = vunpack.c.l.b16 %v120
    %v497 = vunpack.c.h.b16 %v120
    %v498 = vunpack.c.l.b16 %v121
    %v499 = vunpack.c.h.b16 %v121
    %v500 = vunpack.c.l.b16 %v122
    %v501 = vunpack.c.h.b16 %v122
    %v502 = vunpack.c.l.b16 %v123
    %v503 = vunpack.c.h.b16 %v123
    %v504 = vunpack.c.l.b16 %v124
    %v505 = vunpack.c.h.b16 %v124
    %v506 = vunpack.c.l.b16 %v125
    %v507 = vunpack.c.h.b16 %v125
    %v508 = vunpack.c.l.b16 %v126
    %v509 = vunpack.c.h.b16 %v126
    %v510 = vpack.c.b16 %v450, %v446
    %v511 = vpack.c.b16 %v451, %v447
    %v512 = vpack.c.b16 %v452, %v448
    %v513 = vpack.c.b16 %v453, %v449
    %v514 = vpack.c.b16 %v458, %v454
    %v515 = vpack.c.b16 %v459, %v455
    %v516 = vpack.c.b16 %v460, %v456
    %v517 = vpack.c.b16 %v461, %v457
    %v518 = vpack.c.b16 %v466, %v462
    %v519 = vpack.c.b16 %v467, %v463
    %v520 = vpack.c.b16 %v468, %v464
    %v521 = vpack.c.b16 %v469, %v465
    %v522 = vpack.c.b16 %v474, %v470
    %v523 = vpack.c.b16 %v475, %v471
    %v524 = vpack.c.b16 %v476, %v472
    %v525 = vpack.c.b16 %v477, %v473
    %v526 = vpack.c.b16 %v482, %v478
    %v527 = vpack.c.b16 %v483, %v479
    %v528 = vpack.c.b16 %v484, %v480
    %v529 = vpack.c.b16 %v485, %v481
    %v530 = vpack.c.b16 %v490, %v486
    %v531 = vpack.c.b16 %v491, %v487
    %v532 = vpack.c.b16 %v492, %v488
    %v533 = vpack.c.b16 %v493, %v489
    %v534 = vpack.c.b16 %v498, %v494
    %v535 = vpack.c.b16 %v499, %v495
    %v536 = vpack.c.b16 %v500, %v496
    %v537 = vpack.c.b16 %v501, %v497
    %v538 = vpack.c.b16 %v506, %v502
    %v539 = vpack.c.b16 %v507, %v503
    %v540 = vpack.c.b16 %v508, %v504
    %v541 = vpack.c.b16 %v509, %v505
    %574 = vmatprep.subr.bf16.mxu0 %v511
    %575 = vmatpush1.bf16.msra.mxu0 %v510
    %576 = vmatprep.subr.bf16.mxu0 %v515
    %577 = vmatpush1.bf16.msra.mxu0 %v514
    %578 = vmatprep.subr.bf16.mxu0 %v519
    %579 = vmatpush1.bf16.msra.mxu0 %v518
    %580 = vmatprep.subr.bf16.mxu0 %v523
    %581 = vmatpush1.bf16.msra.mxu0 %v522
    %582 = vmatprep.subr.bf16.mxu0 %v527
    %583 = vmatpush1.bf16.msra.mxu0 %v526
    %584 = vmatprep.subr.bf16.mxu0 %v531
    %585 = vmatpush1.bf16.msra.mxu0 %v530
    %586 = vmatprep.subr.bf16.mxu0 %v535
    %587 = vmatpush1.bf16.msra.mxu0 %v534
    %588 = vmatprep.subr.bf16.mxu0 %v539
    %589 = vmatpush1.bf16.msra.mxu0 %v538
    %590 = vmatprep.subr.bf16.mxu0 0
    %591 = vmatpush1.bf16.msra.mxu0 0
    %592 = vmatprep.subr.bf16.mxu0 0
    %593 = vmatpush1.bf16.msra.mxu0 0
    %594 = vmatprep.subr.bf16.mxu0 0
    %595 = vmatpush1.bf16.msra.mxu0 0
    %596 = vmatprep.subr.bf16.mxu0 0
    %597 = vmatpush1.bf16.msra.mxu0 0
    %598 = vmatprep.subr.bf16.mxu0 0
    %599 = vmatpush1.bf16.msra.mxu0 0
    %600 = vmatprep.subr.bf16.mxu0 0
    %601 = vmatpush1.bf16.msra.mxu0 0
    %602 = vmatprep.subr.bf16.mxu0 0
    %603 = vmatpush1.bf16.msra.mxu0 0
    %604 = vmatprep.subr.bf16.mxu0 0
    %605 = vmatpush1.bf16.msra.mxu0 0
    %606 = vmatprep.mubr.bf16.mxu0 0
    %607 = vmatmul.mubr.bf16.gmra.mrb[0].mxu0 0
    %v608 = vpop.f32.mrb[0].mxu0
    %v609 = vadd.f32 0.0, %v608
    %v610 = vpop.f32.mrb[0].mxu0
    %v611 = vadd.f32 0.0, %v610
    %v612 = vpop.f32.mrb[0].mxu0
    %v613 = vpop.f32.mrb[0].mxu0
    %614 = vdwg.mxu0
    %615 = vmatprep.subr.bf16.mxu0 %v513
    %616 = vmatpush1.bf16.msra.mxu0 %v512
    %617 = vmatprep.subr.bf16.mxu0 %v517
    %618 = vmatpush1.bf16.msra.mxu0 %v516
    %619 = vmatprep.subr.bf16.mxu0 %v521
    %620 = vmatpush1.bf16.msra.mxu0 %v520
    %621 = vmatprep.subr.bf16.mxu0 %v525
    %622 = vmatpush1.bf16.msra.mxu0 %v524
    %623 = vmatprep.subr.bf16.mxu0 %v529
    %624 = vmatpush1.bf16.msra.mxu0 %v528
    %625 = vmatprep.subr.bf16.mxu0 %v533
    %626 = vmatpush1.bf16.msra.mxu0 %v532
    %627 = vmatprep.subr.bf16.mxu0 %v537
    %628 = vmatpush1.bf16.msra.mxu0 %v536
    %629 = vmatprep.subr.bf16.mxu0 %v541
    %630 = vmatpush1.bf16.msra.mxu0 %v540
    %631 = vmatprep.subr.bf16.mxu0 0
    %632 = vmatpush1.bf16.msra.mxu0 0
    %633 = vmatprep.subr.bf16.mxu0 0
    %634 = vmatpush1.bf16.msra.mxu0 0
    %635 = vmatprep.subr.bf16.mxu0 0
    %636 = vmatpush1.bf16.msra.mxu0 0
    %637 = vmatprep.subr.bf16.mxu0 0
    %638 = vmatpush1.bf16.msra.mxu0 0
    %639 = vmatprep.subr.bf16.mxu0 0
    %640 = vmatpush1.bf16.msra.mxu0 0
    %641 = vmatprep.subr.bf16.mxu0 0
    %642 = vmatpush1.bf16.msra.mxu0 0
    %643 = vmatprep.subr.bf16.mxu0 0
    %644 = vmatpush1.bf16.msra.mxu0 0
    %645 = vmatprep.subr.bf16.mxu0 0
    %646 = vmatpush1.bf16.msra.mxu0 0
    %647 = vmatprep.mubr.bf16.mxu0 0
    %648 = vmatmul.mubr.bf16.gmra.mrb[0].mxu0 0
    %v649 = vpop.f32.mrb[0].mxu0
    %v650 = vadd.f32 0.0, %v649
    %v651 = vpop.f32.mrb[0].mxu0
    %v652 = vadd.f32 0.0, %v651
    %v653 = vpop.f32.mrb[0].mxu0
    %v654 = vpop.f32.mrb[0].mxu0
    %655 = vdwg.mxu0
    %v656 = vadd.f32 %v410, %v609
    %v657 = vadd.f32 %v411, %v611
    %v658 = vadd.f32 %v412, %v650
    %v659 = vadd.f32 %v413, %v652
    %v660 = vmul.f32 %v656, 0.5
    %v661 = vtanh.pop %v660
    %v662 = vmul.f32 %v661, 0.5
    %v663 = vadd.f32 %v662, 0.5
    %v664 = vmul.f32 %v657, 0.5
    %v665 = vtanh.pop %v664
    %v666 = vmul.f32 %v665, 0.5
    %v667 = vadd.f32 %v666, 0.5
    %v668 = vtanh.pop %v658
    %v669 = vmul.f32 %v659, 0.5
    %v670 = vtanh.pop %v669
    %v671 = vmul.f32 %v670, 0.5
    %v672 = vadd.f32 %v671, 0.5
    %v673 = vmul.f32 %v667, 0.0
    %v674 = vmul.f32 %v663, %v668
    %v675 = vadd.f32 %v673, %v674
    %v676 = vtanh.pop %v675
    %v677 = vmul.f32 %v672, %v676
    %vm678 = vcmp.gt.s32.totalorder %v127, 7
    %v679 = vsel %vm678, 1, 0
    %680 = vset.pattern.permute.xlu0 0
    %681 = vperm.xlu0 %680, %v679
    %v682 = vpop.permute.xlu0 %681
    %vm683 = vcmp.eq.s32.totalorder %v682, 1
    %v684 = vsel %vm683, %v677, 0.0
    %v685 = vsel %vm683, %v675, 0.0
    %s686 = scalar_lea.vmem [#allocation8], 112
    %687 = vst [vmem:[%s686 + $0x8] sm:$0xff] %v684
    %s688 = scalar_lea.vmem [#allocation2], 32
    %v689 = vld [vmem:[%s688] sm:$0xff]
    %v690 = vld [vmem:[%s688 + $0x8] sm:$0xff]
    %v691 = vunpack.c.l.bf16 %v689
    %v692 = vunpack.c.h.bf16 %v689
    %v693 = vunpack.c.l.bf16 %v690
    %v694 = vunpack.c.h.bf16 %v690
    %v695 = vpack.c.bf16 %v404, %v404
    %696 = vmatprep.subr.bf16.mxu0 %v231
    %697 = vmatpush1.bf16.msra.mxu0 %v230
    %698 = vmatprep.subr.bf16.mxu0 %v235
    %699 = vmatpush1.bf16.msra.mxu0 %v234
    %700 = vmatprep.subr.bf16.mxu0 %v239
    %701 = vmatpush1.bf16.msra.mxu0 %v238
    %702 = vmatprep.subr.bf16.mxu0 %v243
    %703 = vmatpush1.bf16.msra.mxu0 %v242
    %704 = vmatprep.subr.bf16.mxu0 %v247
    %705 = vmatpush1.bf16.msra.mxu0 %v246
    %706 = vmatprep.subr.bf16.mxu0 %v251
    %707 = vmatpush1.bf16.msra.mxu0 %v250
    %708 = vmatprep.subr.bf16.mxu0 %v255
    %709 = vmatpush1.bf16.msra.mxu0 %v254
    %710 = vmatprep.subr.bf16.mxu0 %v259
    %711 = vmatpush1.bf16.msra.mxu0 %v258
    %712 = vmatprep.subr.bf16.mxu0 0
    %713 = vmatpush1.bf16.msra.mxu0 0
    %714 = vmatprep.subr.bf16.mxu0 0
    %715 = vmatpush1.bf16.msra.mxu0 0
    %716 = vmatprep.subr.bf16.mxu0 0
    %717 = vmatpush1.bf16.msra.mxu0 0
    %718 = vmatprep.subr.bf16.mxu0 0
    %719 = vmatpush1.bf16.msra.mxu0 0
    %720 = vmatprep.subr.bf16.mxu0 0
    %721 = vmatpush1.bf16.msra.mxu0 0
    %722 = vmatprep.subr.bf16.mxu0 0
    %723 = vmatpush1.bf16.msra.mxu0 0
    %724 = vmatprep.subr.bf16.mxu0 0
    %725 = vmatpush1.bf16.msra.mxu0 0
    %726 = vmatprep.subr.bf16.mxu0 0
    %727 = vmatpush1.bf16.msra.mxu0 0
    %728 = vmatprep.mubr.bf16.mxu0 0
    %729 = vmatmul.mubr.bf16.gmra.mrb[0].mxu0 %v695
    %v730 = vpop.f32.mrb[0].mxu0
    %v731 = vadd.f32 0.0, %v730
    %v732 = vpop.f32.mrb[0].mxu0
    %v733 = vadd.f32 0.0, %v732
    %v734 = vpop.f32.mrb[0].mxu0
    %v735 = vpop.f32.mrb[0].mxu0
    %736 = vdwg.mxu0
    %737 = vmatprep.subr.bf16.mxu0 %v233
    %738 = vmatpush1.bf16.msra.mxu0 %v232
    %739 = vmatprep.subr.bf16.mxu0 %v237
    %740 = vmatpush1.bf16.msra.mxu0 %v236
    %741 = vmatprep.subr.bf16.mxu0 %v241
    %742 = vmatpush1.bf16.msra.mxu0 %v240
    %743 = vmatprep.subr.bf16.mxu0 %v245
    %744 = vmatpush1.bf16.msra.mxu0 %v244
    %745 = vmatprep.subr.bf16.mxu0 %v249
    %746 = vmatpush1.bf16.msra.mxu0 %v248
    %747 = vmatprep.subr.bf16.mxu0 %v253
    %748 = vmatpush1.bf16.msra.mxu0 %v252
    %749 = vmatprep.subr.bf16.mxu0 %v257
    %750 = vmatpush1.bf16.msra.mxu0 %v256
    %751 = vmatprep.subr.bf16.mxu0 %v261
    %752 = vmatpush1.bf16.msra.mxu0 %v260
    %753 = vmatprep.subr.bf16.mxu0 0
    %754 = vmatpush1.bf16.msra.mxu0 0
    %755 = vmatprep.subr.bf16.mxu0 0
    %756 = vmatpush1.bf16.msra.mxu0 0
    %757 = vmatprep.subr.bf16.mxu0 0
    %758 = vmatpush1.bf16.msra.mxu0 0
    %759 = vmatprep.subr.bf16.mxu0 0
    %760 = vmatpush1.bf16.msra.mxu0 0
    %761 = vmatprep.subr.bf16.mxu0 0
    %762 = vmatpush1.bf16.msra.mxu0 0
    %763 = vmatprep.subr.bf16.mxu0 0
    %764 = vmatpush1.bf16.msra.mxu0 0
    %765 = vmatprep.subr.bf16.mxu0 0
    %766 = vmatpush1.bf16.msra.mxu0 0
    %767 = vmatprep.subr.bf16.mxu0 0
    %768 = vmatpush1.bf16.msra.mxu0 0
    %769 = vmatprep.mubr.bf16.mxu0 0
    %770 = vmatmul.mubr.bf16.gmra.mrb[0].mxu0 %v695
    %v771 = vpop.f32.mrb[0].mxu0
    %v772 = vadd.f32 0.0, %v771
    %v773 = vpop.f32.mrb[0].mxu0
    %v774 = vadd.f32 0.0, %v773
    %v775 = vpop.f32.mrb[0].mxu0
    %v776 = vpop.f32.mrb[0].mxu0
    %777 = vdwg.mxu0
    %v778 = vadd.f32 %v691, %v731
    %v779 = vadd.f32 %v692, %v733
    %v780 = vadd.f32 %v693, %v772
    %v781 = vadd.f32 %v694, %v774
    %v782 = vmul.f32 %v778, 0.5
    %v783 = vtanh.pop %v782
    %v784 = vmul.f32 %v783, 0.5
    %v785 = vadd.f32 %v784, 0.5
    %v786 = vmul.f32 %v779, 0.5
    %v787 = vtanh.pop %v786
    %v788 = vmul.f32 %v787, 0.5
    %v789 = vadd.f32 %v788, 0.5
    %v790 = vtanh.pop %v780
    %v791 = vmul.f32 %v781, 0.5
    %v792 = vtanh.pop %v791
    %v793 = vmul.f32 %v792, 0.5
    %v794 = vadd.f32 %v793, 0.5
    %v795 = vmul.f32 %v789, %v405
    %v796 = vmul.f32 %v785, %v790
    %v797 = vadd.f32 %v795, %v796
    %v798 = vtanh.pop %v797
    %v799 = vmul.f32 %v794, %v798
    %vm800 = vcmp.gt.s32.totalorder %v127, 1
    %v801 = vsel %vm800, 1, 0
    %802 = vset.pattern.permute.xlu0 0
    %803 = vperm.xlu0 %802, %v801
    %v804 = vpop.permute.xlu0 %803
    %vm805 = vcmp.eq.s32.totalorder %v804, 1
    %v806 = vsel %vm805, %v799, %v404
    %v807 = vsel %vm805, %v797, %v405
    %v808 = vsel %vm805, %v799, 0.0
    %s809 = scalar_lea.vmem [#allocation8], 16
    %810 = vst [vmem:[%s809] sm:$0xff] %v808
    %s811 = scalar_lea.vmem [#allocation2], 192
    %v812 = vld [vmem:[%s811 + $0x10] sm:$0xff]
    %v813 = vld [vmem:[%s811 + $0x18] sm:$0xff]
    %v814 = vunpack.c.l.bf16 %v812
    %v815 = vunpack.c.h.bf16 %v812
    %v816 = vunpack.c.l.bf16 %v813
    %v817 = vunpack.c.h.bf16 %v813
    %v818 = vpack.c.bf16 %v684, %v684
    %819 = vmatprep.subr.bf16.mxu0 %v511
    %820 = vmatpush1.bf16.msra.mxu0 %v510
    %821 = vmatprep.subr.bf16.mxu0 %v515
    %822 = vmatpush1.bf16.msra.mxu0 %v514
    %823 = vmatprep.subr.bf16.mxu0 %v519
    %824 = vmatpush1.bf16.msra.mxu0 %v518
    %825 = vmatprep.subr.bf16.mxu0 %v523
    %826 = vmatpush1.bf16.msra.mxu0 %v522
    %827 = vmatprep.subr.bf16.mxu0 %v527
    %828 = vmatpush1.bf16.msra.mxu0 %v526
    %829 = vmatprep.subr.bf16.mxu0 %v531
    %830 = vmatpush1.bf16.msra.mxu0 %v530
    %831 = vmatprep.subr.bf16.mxu0 %v535
    %832 = vmatpush1.bf16.msra.mxu0 %v534
    %833 = vmatprep.subr.bf16.mxu0 %v539
    %834 = vmatpush1.bf16.msra.mxu0 %v538
    %835 = vmatprep.subr.bf16.mxu0 0
    %836 = vmatpush1.bf16.msra.mxu0 0
    %837 = vmatprep.subr.bf16.mxu0 0
    %838 = vmatpush1.bf16.msra.mxu0 0
    %839 = vmatprep.subr.bf16.mxu0 0
    %840 = vmatpush1.bf16.msra.mxu0 0
    %841 = vmatprep.subr.bf16.mxu0 0
    %842 = vmatpush1.bf16.msra.mxu0 0
    %843 = vmatprep.subr.bf16.mxu0 0
    %844 = vmatpush1.bf16.msra.mxu0 0
    %845 = vmatprep.subr.bf16.mxu0 0
    %846 = vmatpush1.bf16.msra.mxu0 0
    %847 = vmatprep.subr.bf16.mxu0 0
    %848 = vmatpush1.bf16.msra.mxu0 0
    %849 = vmatprep.subr.bf16.mxu0 0
    %850 = vmatpush1.bf16.msra.mxu0 0
    %851 = vmatprep.mubr.bf16.mxu0 0
    %852 = vmatmul.mubr.bf16.gmra.mrb[0].mxu0 %v818
    %v853 = vpop.f32.mrb[0].mxu0
    %v854 = vadd.f32 0.0, %v853
    %v855 = vpop.f32.mrb[0].mxu0
    %v856 = vadd.f32 0.0, %v855
    %v857 = vpop.f32.mrb[0].mxu0
    %v858 = vpop.f32.mrb[0].mxu0
    %859 = vdwg.mxu0
    %860 = vmatprep.subr.bf16.mxu0 %v513
    %861 = vmatpush1.bf16.msra.mxu0 %v512
    %862 = vmatprep.subr.bf16.mxu0 %v517
    %863 = vmatpush1.bf16.msra.mxu0 %v516
    %864 = vmatprep.subr.bf16.mxu0 %v521
    %865 = vmatpush1.bf16.msra.mxu0 %v520
    %866 = vmatprep.subr.bf16.mxu0 %v525
    %867 = vmatpush1.bf16.msra.mxu0 %v524
    %868 = vmatprep.subr.bf16.mxu0 %v529
    %869 = vmatpush1.bf16.msra.mxu0 %v528
    %870 = vmatprep.subr.bf16.mxu0 %v533
    %871 = vmatpush1.bf16.msra.mxu0 %v532
    %872 = vmatprep.subr.bf16.mxu0 %v537
    %873 = vmatpush1.bf16.msra.mxu0 %v536
    %874 = vmatprep.subr.bf16.mxu0 %v541
    %875 = vmatpush1.bf16.msra.mxu0 %v540
    %876 = vmatprep.subr.bf16.mxu0 0
    %877 = vmatpush1.bf16.msra.mxu0 0
    %878 = vmatprep.subr.bf16.mxu0 0
    %879 = vmatpush1.bf16.msra.mxu0 0
    %880 = vmatprep.subr.bf16.mxu0 0
    %881 = vmatpush1.bf16.msra.mxu0 0
    %882 = vmatprep.subr.bf16.mxu0 0
    %883 = vmatpush1.bf16.msra.mxu0 0
    %884 = vmatprep.subr.bf16.mxu0 0
    %885 = vmatpush1.bf16.msra.mxu0 0
    %886 = vmatprep.subr.bf16.mxu0 0
    %887 = vmatpush1.bf16.msra.mxu0 0
    %888 = vmatprep.subr.bf16.mxu0 0
    %889 = vmatpush1.bf16.msra.mxu0 0
    %890 = vmatprep.subr.bf16.mxu0 0
    %891 = vmatpush1.bf16.msra.mxu0 0
    %892 = vmatprep.mubr.bf16.mxu0 0
    %893 = vmatmul.mubr.bf16.gmra.mrb[0].mxu0 %v818
    %v894 = vpop.f32.mrb[0].mxu0
    %v895 = vadd.f32 0.0, %v894
    %v896 = vpop.f32.mrb[0].mxu0
    %v897 = vadd.f32 0.0, %v896
    %v898 = vpop.f32.mrb[0].mxu0
    %v899 = vpop.f32.mrb[0].mxu0
    %900 = vdwg.mxu0
    %v901 = vadd.f32 %v814, %v854
    %v902 = vadd.f32 %v815, %v856
    %v903 = vadd.f32 %v816, %v895
    %v904 = vadd.f32 %v817, %v897
    %v905 = vmul.f32 %v901, 0.5
    %v906 = vtanh.pop %v905
    %v907 = vmul.f32 %v906, 0.5
    %v908 = vadd.f32 %v907, 0.5
    %v909 = vmul.f32 %v902, 0.5
    %v910 = vtanh.pop %v909
    %v911 = vmul.f32 %v910, 0.5
    %v912 = vadd.f32 %v911, 0.5
    %v913 = vtanh.pop %v903
    %v914 = vmul.f32 %v904, 0.5
    %v915 = vtanh.pop %v914
    %v916 = vmul.f32 %v915, 0.5
    %v917 = vadd.f32 %v916, 0.5
    %v918 = vmul.f32 %v912, %v685
    %v919 = vmul.f32 %v908, %v913
    %v920 = vadd.f32 %v918, %v919
    %v921 = vtanh.pop %v920
    %v922 = vmul.f32 %v917, %v921
    %vm923 = vcmp.gt.s32.totalorder %v127, 6
    %v924 = vsel %vm923, 1, 0
    %925 = vset.pattern.permute.xlu0 0
    %926 = vperm.xlu0 %925, %v924
    %v927 = vpop.permute.xlu0 %926
    %vm928 = vcmp.eq.s32.totalorder %v927, 1
    %v929 = vsel %vm928, %v922, %v684
    %v930 = vsel %vm928, %v920, %v685
    %v931 = vsel %vm928, %v922, 0.0
    %s932 = scalar_lea.vmem [#allocation8], 96
    %933 = vst [vmem:[%s932 + $0x8] sm:$0xff] %v931
    %s934 = scalar_lea.vmem [#allocation2], 64
    %v935 = vld [vmem:[%s934] sm:$0xff]
    %v936 = vld [vmem:[%s934 + $0x8] sm:$0xff]
    %v937 = vunpack.c.l.bf16 %v935
    %v938 = vunpack.c.h.bf16 %v935
    %v939 = vunpack.c.l.bf16 %v936
    %v940 = vunpack.c.h.bf16 %v936
    %v941 = vpack.c.bf16 %v806, %v806
    %942 = vmatprep.subr.bf16.mxu0 %v231
    %943 = vmatpush1.bf16.msra.mxu0 %v230
    %944 = vmatprep.subr.bf16.mxu0 %v235
    %945 = vmatpush1.bf16.msra.mxu0 %v234
    %946 = vmatprep.subr.bf16.mxu0 %v239
    %947 = vmatpush1.bf16.msra.mxu0 %v238
    %948 = vmatprep.subr.bf16.mxu0 %v243
    %949 = vmatpush1.bf16.msra.mxu0 %v242
    %950 = vmatprep.subr.bf16.mxu0 %v247
    %951 = vmatpush1.bf16.msra.mxu0 %v246
    %952 = vmatprep.subr.bf16.mxu0 %v251
    %953 = vmatpush1.bf16.msra.mxu0 %v250
    %954 = vmatprep.subr.bf16.mxu0 %v255
    %955 = vmatpush1.bf16.msra.mxu0 %v254
    %956 = vmatprep.subr.bf16.mxu0 %v259
    %957 = vmatpush1.bf16.msra.mxu0 %v258
    %958 = vmatprep.subr.bf16.mxu0 0
    %959 = vmatpush1.bf16.msra.mxu0 0
    %960 = vmatprep.subr.bf16.mxu0 0
    %961 = vmatpush1.bf16.msra.mxu0 0
    %962 = vmatprep.subr.bf16.mxu0 0
    %963 = vmatpush1.bf16.msra.mxu0 0
    %964 = vmatprep.subr.bf16.mxu0 0
    %965 = vmatpush1.bf16.msra.mxu0 0
    %966 = vmatprep.subr.bf16.mxu0 0
    %967 = vmatpush1.bf16.msra.mxu0 0
    %968 = vmatprep.subr.bf16.mxu0 0
    %969 = vmatpush1.bf16.msra.mxu0 0
    %970 = vmatprep.subr.bf16.mxu0 0
    %971 = vmatpush1.bf16.msra.mxu0 0
    %972 = vmatprep.subr.bf16.mxu0 0
    %973 = vmatpush1.bf16.msra.mxu0 0
    %974 = vmatprep.mubr.bf16.mxu0 0
    %975 = vmatmul.mubr.bf16.gmra.mrb[0].mxu0 %v941
    %v976 = vpop.f32.mrb[0].mxu0
    %v977 = vadd.f32 0.0, %v976
    %v978 = vpop.f32.mrb[0].mxu0
    %v979 = vadd.f32 0.0, %v978
    %v980 = vpop.f32.mrb[0].mxu0
    %v981 = vpop.f32.mrb[0].mxu0
    %982 = vdwg.mxu0
    %983 = vmatprep.subr.bf16.mxu0 %v233
    %984 = vmatpush1.bf16.msra.mxu0 %v232
    %985 = vmatprep.subr.bf16.mxu0 %v237
    %986 = vmatpush1.bf16.msra.mxu0 %v236
    %987 = vmatprep.subr.bf16.mxu0 %v241
    %988 = vmatpush1.bf16.msra.mxu0 %v240
    %989 = vmatprep.subr.bf16.mxu0 %v245
    %990 = vmatpush1.bf16.msra.mxu0 %v244
    %991 = vmatprep.subr.bf16.mxu0 %v249
    %992 = vmatpush1.bf16.msra.mxu0 %v248
    %993 = vmatprep.subr.bf16.mxu0 %v253
    %994 = vmatpush1.bf16.msra.mxu0 %v252
    %995 = vmatprep.subr.bf16.mxu0 %v257
    %996 = vmatpush1.bf16.msra.mxu0 %v256
    %997 = vmatprep.subr.bf16.mxu0 %v261
    %998 = vmatpush1.bf16.msra.mxu0 %v260
    %999 = vmatprep.subr.bf16.mxu0 0
    %1000 = vmatpush1.bf16.msra.mxu0 0
    %1001 = vmatprep.subr.bf16.mxu0 0
    %1002 = vmatpush1.bf16.msra.mxu0 0
    %1003 = vmatprep.subr.bf16.mxu0 0
    %1004 = vmatpush1.bf16.msra.mxu0 0
    %1005 = vmatprep.subr.bf16.mxu0 0
    %1006 = vmatpush1.bf16.msra.mxu0 0
    %1007 = vmatprep.subr.bf16.mxu0 0
    %1008 = vmatpush1.bf16.msra.mxu0 0
    %1009 = vmatprep.subr.bf16.mxu0 0
    %1010 = vmatpush1.bf16.msra.mxu0 0
    %1011 = vmatprep.subr.bf16.mxu0 0
    %1012 = vmatpush1.bf16.msra.mxu0 0
    %1013 = vmatprep.subr.bf16.mxu0 0
    %1014 = vmatpush1.bf16.msra.mxu0 0
    %1015 = vmatprep.mubr.bf16.mxu0 0
    %1016 = vmatmul.mubr.bf16.gmra.mrb[0].mxu0 %v941
    %v1017 = vpop.f32.mrb[0].mxu0
    %v1018 = vadd.f32 0.0, %v1017
    %v1019 = vpop.f32.mrb[0].mxu0
    %v1020 = vadd.f32 0.0, %v1019
    %v1021 = vpop.f32.mrb[0].mxu0
    %v1022 = vpop.f32.mrb[0].mxu0
    %1023 = vdwg.mxu0
    %v1024 = vadd.f32 %v937, %v977
    %v1025 = vadd.f32 %v938, %v979
    %v1026 = vadd.f32 %v939, %v1018
    %v1027 = vadd.f32 %v940, %v1020
    %v1028 = vmul.f32 %v1024, 0.5
    %v1029 = vtanh.pop %v1028
    %v1030 = vmul.f32 %v1029, 0.5
    %v1031 = vadd.f32 %v1030, 0.5
    %v1032 = vmul.f32 %v1025, 0.5
    %v1033 = vtanh.pop %v1032
    %v1034 = vmul.f32 %v1033, 0.5
    %v1035 = vadd.f32 %v1034, 0.5
    %v1036 = vtanh.pop %v1026
    %v1037 = vmul.f32 %v1027, 0.5
    %v1038 = vtanh.pop %v1037
    %v1039 = vmul.f32 %v1038, 0.5
    %v1040 = vadd.f32 %v1039, 0.5
    %v1041 = vmul.f32 %v1035, %v807
    %v1042 = vmul.f32 %v1031, %v1036
    %v1043 = vadd.f32 %v1041, %v1042
    %v1044 = vtanh.pop %v1043
    %v1045 = vmul.f32 %v1040, %v1044
    %vm1046 = vcmp.gt.s32.totalorder %v127, 2
    %v1047 = vsel %vm1046, 1, 0
    %1048 = vset.pattern.permute.xlu0 0
    %1049 = vperm.xlu0 %1048, %v1047
    %v1050 = vpop.permute.xlu0 %1049
    %vm1051 = vcmp.eq.s32.totalorder %v1050, 1
    %v1052 = vsel %vm1051, %v1045, %v806
    %v1053 = vsel %vm1051, %v1043, %v807
    %v1054 = vsel %vm1051, %v1045, 0.0
    %s1055 = scalar_lea.vmem [#allocation8], 32
    %1056 = vst [vmem:[%s1055] sm:$0xff] %v1054
    %s1057 = scalar_lea.vmem [#allocation2], 160
    %v1058 = vld [vmem:[%s1057 + $0x10] sm:$0xff]
    %v1059 = vld [vmem:[%s1057 + $0x18] sm:$0xff]
    %v1060 = vunpack.c.l.bf16 %v1058
    %v1061 = vunpack.c.h.bf16 %v1058
    %v1062 = vunpack.c.l.bf16 %v1059
    %v1063 = vunpack.c.h.bf16 %v1059
    %v1064 = vpack.c.bf16 %v929, %v929
    %1065 = vmatprep.subr.bf16.mxu0 %v511
    %1066 = vmatpush1.bf16.msra.mxu0 %v510
    %1067 = vmatprep.subr.bf16.mxu0 %v515
    %1068 = vmatpush1.bf16.msra.mxu0 %v514
    %1069 = vmatprep.subr.bf16.mxu0 %v519
    %1070 = vmatpush1.bf16.msra.mxu0 %v518
    %1071 = vmatprep.subr.bf16.mxu0 %v523
    %1072 = vmatpush1.bf16.msra.mxu0 %v522
    %1073 = vmatprep.subr.bf16.mxu0 %v527
    %1074 = vmatpush1.bf16.msra.mxu0 %v526
    %1075 = vmatprep.subr.bf16.mxu0 %v531
    %1076 = vmatpush1.bf16.msra.mxu0 %v530
    %1077 = vmatprep.subr.bf16.mxu0 %v535
    %1078 = vmatpush1.bf16.msra.mxu0 %v534
    %1079 = vmatprep.subr.bf16.mxu0 %v539
    %1080 = vmatpush1.bf16.msra.mxu0 %v538
    %1081 = vmatprep.subr.bf16.mxu0 0
    %1082 = vmatpush1.bf16.msra.mxu0 0
    %1083 = vmatprep.subr.bf16.mxu0 0
    %1084 = vmatpush1.bf16.msra.mxu0 0
    %1085 = vmatprep.subr.bf16.mxu0 0
    %1086 = vmatpush1.bf16.msra.mxu0 0
    %1087 = vmatprep.subr.bf16.mxu0 0
    %1088 = vmatpush1.bf16.msra.mxu0 0
    %1089 = vmatprep.subr.bf16.mxu0 0
    %1090 = vmatpush1.bf16.msra.mxu0 0
    %1091 = vmatprep.subr.bf16.mxu0 0
    %1092 = vmatpush1.bf16.msra.mxu0 0
    %1093 = vmatprep.subr.bf16.mxu0 0
    %1094 = vmatpush1.bf16.msra.mxu0 0
    %1095 = vmatprep.subr.bf16.mxu0 0
    %1096 = vmatpush1.bf16.msra.mxu0 0
    %1097 = vmatprep.mubr.bf16.mxu0 0
    %1098 = vmatmul.mubr.bf16.gmra.mrb[0].mxu0 %v1064
    %v1099 = vpop.f32.mrb[0].mxu0
    %v1100 = vadd.f32 0.0, %v1099
    %v1101 = vpop.f32.mrb[0].mxu0
    %v1102 = vadd.f32 0.0, %v1101
    %v1103 = vpop.f32.mrb[0].mxu0
    %v1104 = vpop.f32.mrb[0].mxu0
    %1105 = vdwg.mxu0
    %1106 = vmatprep.subr.bf16.mxu0 %v513
    %1107 = vmatpush1.bf16.msra.mxu0 %v512
    %1108 = vmatprep.subr.bf16.mxu0 %v517
    %1109 = vmatpush1.bf16.msra.mxu0 %v516
    %1110 = vmatprep.subr.bf16.mxu0 %v521
    %1111 = vmatpush1.bf16.msra.mxu0 %v520
    %1112 = vmatprep.subr.bf16.mxu0 %v525
    %1113 = vmatpush1.bf16.msra.mxu0 %v524
    %1114 = vmatprep.subr.bf16.mxu0 %v529
    %1115 = vmatpush1.bf16.msra.mxu0 %v528
    %1116 = vmatprep.subr.bf16.mxu0 %v533
    %1117 = vmatpush1.bf16.msra.mxu0 %v532
    %1118 = vmatprep.subr.bf16.mxu0 %v537
    %1119 = vmatpush1.bf16.msra.mxu0 %v536
    %1120 = vmatprep.subr.bf16.mxu0 %v541
    %1121 = vmatpush1.bf16.msra.mxu0 %v540
    %1122 = vmatprep.subr.bf16.mxu0 0
    %1123 = vmatpush1.bf16.msra.mxu0 0
    %1124 = vmatprep.subr.bf16.mxu0 0
    %1125 = vmatpush1.bf16.msra.mxu0 0
    %1126 = vmatprep.subr.bf16.mxu0 0
    %1127 = vmatpush1.bf16.msra.mxu0 0
    %1128 = vmatprep.subr.bf16.mxu0 0
    %1129 = vmatpush1.bf16.msra.mxu0 0
    %1130 = vmatprep.subr.bf16.mxu0 0
    %1131 = vmatpush1.bf16.msra.mxu0 0
    %1132 = vmatprep.subr.bf16.mxu0 0
    %1133 = vmatpush1.bf16.msra.mxu0 0
    %1134 = vmatprep.subr.bf16.mxu0 0
    %1135 = vmatpush1.bf16.msra.mxu0 0
    %1136 = vmatprep.subr.bf16.mxu0 0
    %1137 = vmatpush1.bf16.msra.mxu0 0
    %1138 = vmatprep.mubr.bf16.mxu0 0
    %1139 = vmatmul.mubr.bf16.gmra.mrb[0].mxu0 %v1064
    %v1140 = vpop.f32.mrb[0].mxu0
    %v1141 = vadd.f32 0.0, %v1140
    %v1142 = vpop.f32.mrb[0].mxu0
    %v1143 = vadd.f32 0.0, %v1142
    %v1144 = vpop.f32.mrb[0].mxu0
    %v1145 = vpop.f32.mrb[0].mxu0
    %1146 = vdwg.mxu0
    %v1147 = vadd.f32 %v1060, %v1100
    %v1148 = vadd.f32 %v1061, %v1102
    %v1149 = vadd.f32 %v1062, %v1141
    %v1150 = vadd.f32 %v1063, %v1143
    %v1151 = vmul.f32 %v1147, 0.5
    %v1152 = vtanh.pop %v1151
    %v1153 = vmul.f32 %v1152, 0.5
    %v1154 = vadd.f32 %v1153, 0.5
    %v1155 = vmul.f32 %v1148, 0.5
    %v1156 = vtanh.pop %v1155
    %v1157 = vmul.f32 %v1156, 0.5
    %v1158 = vadd.f32 %v1157, 0.5
    %v1159 = vtanh.pop %v1149
    %v1160 = vmul.f32 %v1150, 0.5
    %v1161 = vtanh.pop %v1160
    %v1162 = vmul.f32 %v1161, 0.5
    %v1163 = vadd.f32 %v1162, 0.5
    %v1164 = vmul.f32 %v1158, %v930
    %v1165 = vmul.f32 %v1154, %v1159
    %v1166 = vadd.f32 %v1164, %v1165
    %v1167 = vtanh.pop %v1166
    %v1168 = vmul.f32 %v1163, %v1167
    %vm1169 = vcmp.gt.s32.totalorder %v127, 5
    %v1170 = vsel %vm1169, 1, 0
    %1171 = vset.pattern.permute.xlu0 0
    %1172 = vperm.xlu0 %1171, %v1170
    %v1173 = vpop.permute.xlu0 %1172
    %vm1174 = vcmp.eq.s32.totalorder %v1173, 1
    %v1175 = vsel %vm1174, %v1168, %v929
    %v1176 = vsel %vm1174, %v1166, %v930
    %v1177 = vsel %vm1174, %v1168, 0.0
    %s1178 = scalar_lea.vmem [#allocation8], 80
    %1179 = vst [vmem:[%s1178 + $0x8] sm:$0xff] %v1177
    %s1180 = scalar_lea.vmem [#allocation2], 96
    %v1181 = vld [vmem:[%s1180] sm:$0xff]
    %v1182 = vld [vmem:[%s1180 + $0x8] sm:$0xff]
    %v1183 = vunpack.c.l.bf16 %v1181
    %v1184 = vunpack.c.h.bf16 %v1181
    %v1185 = vunpack.c.l.bf16 %v1182
    %v1186 = vunpack.c.h.bf16 %v1182
    %v1187 = vpack.c.bf16 %v1052, %v1052
    %1188 = vmatprep.subr.bf16.mxu0 %v231
    %1189 = vmatpush1.bf16.msra.mxu0 %v230
    %1190 = vmatprep.subr.bf16.mxu0 %v235
    %1191 = vmatpush1.bf16.msra.mxu0 %v234
    %1192 = vmatprep.subr.bf16.mxu0 %v239
    %1193 = vmatpush1.bf16.msra.mxu0 %v238
    %1194 = vmatprep.subr.bf16.mxu0 %v243
    %1195 = vmatpush1.bf16.msra.mxu0 %v242
    %1196 = vmatprep.subr.bf16.mxu0 %v247
    %1197 = vmatpush1.bf16.msra.mxu0 %v246
    %1198 = vmatprep.subr.bf16.mxu0 %v251
    %1199 = vmatpush1.bf16.msra.mxu0 %v250
    %1200 = vmatprep.subr.bf16.mxu0 %v255
    %1201 = vmatpush1.bf16.msra.mxu0 %v254
    %1202 = vmatprep.subr.bf16.mxu0 %v259
    %1203 = vmatpush1.bf16.msra.mxu0 %v258
    %1204 = vmatprep.subr.bf16.mxu0 0
    %1205 = vmatpush1.bf16.msra.mxu0 0
    %1206 = vmatprep.subr.bf16.mxu0 0
    %1207 = vmatpush1.bf16.msra.mxu0 0
    %1208 = vmatprep.subr.bf16.mxu0 0
    %1209 = vmatpush1.bf16.msra.mxu0 0
    %1210 = vmatprep.subr.bf16.mxu0 0
    %1211 = vmatpush1.bf16.msra.mxu0 0
    %1212 = vmatprep.subr.bf16.mxu0 0
    %1213 = vmatpush1.bf16.msra.mxu0 0
    %1214 = vmatprep.subr.bf16.mxu0 0
    %1215 = vmatpush1.bf16.msra.mxu0 0
    %1216 = vmatprep.subr.bf16.mxu0 0
    %1217 = vmatpush1.bf16.msra.mxu0 0
    %1218 = vmatprep.subr.bf16.mxu0 0
    %1219 = vmatpush1.bf16.msra.mxu0 0
    %1220 = vmatprep.mubr.bf16.mxu0 0
    %1221 = vmatmul.mubr.bf16.gmra.mrb[0].mxu0 %v1187
    %v1222 = vpop.f32.mrb[0].mxu0
    %v1223 = vadd.f32 0.0, %v1222
    %v1224 = vpop.f32.mrb[0].mxu0
    %v1225 = vadd.f32 0.0, %v1224
    %v1226 = vpop.f32.mrb[0].mxu0
    %v1227 = vpop.f32.mrb[0].mxu0
    %1228 = vdwg.mxu0
    %1229 = vmatprep.subr.bf16.mxu0 %v233
    %1230 = vmatpush1.bf16.msra.mxu0 %v232
    %1231 = vmatprep.subr.bf16.mxu0 %v237
    %1232 = vmatpush1.bf16.msra.mxu0 %v236
    %1233 = vmatprep.subr.bf16.mxu0 %v241
    %1234 = vmatpush1.bf16.msra.mxu0 %v240
    %1235 = vmatprep.subr.bf16.mxu0 %v245
    %1236 = vmatpush1.bf16.msra.mxu0 %v244
    %1237 = vmatprep.subr.bf16.mxu0 %v249
    %1238 = vmatpush1.bf16.msra.mxu0 %v248
    %1239 = vmatprep.subr.bf16.mxu0 %v253
    %1240 = vmatpush1.bf16.msra.mxu0 %v252
    %1241 = vmatprep.subr.bf16.mxu0 %v257
    %1242 = vmatpush1.bf16.msra.mxu0 %v256
    %1243 = vmatprep.subr.bf16.mxu0 %v261
    %1244 = vmatpush1.bf16.msra.mxu0 %v260
    %1245 = vmatprep.subr.bf16.mxu0 0
    %1246 = vmatpush1.bf16.msra.mxu0 0
    %1247 = vmatprep.subr.bf16.mxu0 0
    %1248 = vmatpush1.bf16.msra.mxu0 0
    %1249 = vmatprep.subr.bf16.mxu0 0
    %1250 = vmatpush1.bf16.msra.mxu0 0
    %1251 = vmatprep.subr.bf16.mxu0 0
    %1252 = vmatpush1.bf16.msra.mxu0 0
    %1253 = vmatprep.subr.bf16.mxu0 0
    %1254 = vmatpush1.bf16.msra.mxu0 0
    %1255 = vmatprep.subr.bf16.mxu0 0
    %1256 = vmatpush1.bf16.msra.mxu0 0
    %1257 = vmatprep.subr.bf16.mxu0 0
    %1258 = vmatpush1.bf16.msra.mxu0 0
    %1259 = vmatprep.subr.bf16.mxu0 0
    %1260 = vmatpush1.bf16.msra.mxu0 0
    %1261 = vmatprep.mubr.bf16.mxu0 0
    %1262 = vmatmul.mubr.bf16.gmra.mrb[0].mxu0 %v1187
    %v1263 = vpop.f32.mrb[0].mxu0
    %v1264 = vadd.f32 0.0, %v1263
    %v1265 = vpop.f32.mrb[0].mxu0
    %v1266 = vadd.f32 0.0, %v1265
    %v1267 = vpop.f32.mrb[0].mxu0
    %v1268 = vpop.f32.mrb[0].mxu0
    %1269 = vdwg.mxu0
    %v1270 = vadd.f32 %v1183, %v1223
    %v1271 = vadd.f32 %v1184, %v1225
    %v1272 = vadd.f32 %v1185, %v1264
    %v1273 = vadd.f32 %v1186, %v1266
    %v1274 = vmul.f32 %v1270, 0.5
    %v1275 = vtanh.pop %v1274
    %v1276 = vmul.f32 %v1275, 0.5
    %v1277 = vadd.f32 %v1276, 0.5
    %v1278 = vmul.f32 %v1271, 0.5
    %v1279 = vtanh.pop %v1278
    %v1280 = vmul.f32 %v1279, 0.5
    %v1281 = vadd.f32 %v1280, 0.5
    %v1282 = vtanh.pop %v1272
    %v1283 = vmul.f32 %v1273, 0.5
    %v1284 = vtanh.pop %v1283
    %v1285 = vmul.f32 %v1284, 0.5
    %v1286 = vadd.f32 %v1285, 0.5
    %v1287 = vmul.f32 %v1281, %v1053
    %v1288 = vmul.f32 %v1277, %v1282
    %v1289 = vadd.f32 %v1287, %v1288
    %v1290 = vtanh.pop %v1289
    %v1291 = vmul.f32 %v1286, %v1290
    %vm1292 = vcmp.gt.s32.totalorder %v127, 3
    %v1293 = vsel %vm1292, 1, 0
    %1294 = vset.pattern.permute.xlu0 0
    %1295 = vperm.xlu0 %1294, %v1293
    %v1296 = vpop.permute.xlu0 %1295
    %vm1297 = vcmp.eq.s32.totalorder %v1296, 1
    %v1298 = vsel %vm1297, %v1291, %v1052
    %v1299 = vsel %vm1297, %v1289, %v1053
    %v1300 = vsel %vm1297, %v1291, 0.0
    %s1301 = scalar_lea.vmem [#allocation8], 48
    %1302 = vst [vmem:[%s1301] sm:$0xff] %v1300
    %s1303 = scalar_lea.vmem [#allocation2], 128
    %v1304 = vld [vmem:[%s1303 + $0x10] sm:$0xff]
    %v1305 = vld [vmem:[%s1303 + $0x18] sm:$0xff]
    %v1306 = vunpack.c.l.bf16 %v1304
    %v1307 = vunpack.c.h.bf16 %v1304
    %v1308 = vunpack.c.l.bf16 %v1305
    %v1309 = vunpack.c.h.bf16 %v1305
    %v1310 = vpack.c.bf16 %v1175, %v1175
    %1311 = vmatprep.subr.bf16.mxu0 %v511
    %1312 = vmatpush1.bf16.msra.mxu0 %v510
    %1313 = vmatprep.subr.bf16.mxu0 %v515
    %1314 = vmatpush1.bf16.msra.mxu0 %v514
    %1315 = vmatprep.subr.bf16.mxu0 %v519
    %1316 = vmatpush1.bf16.msra.mxu0 %v518
    %1317 = vmatprep.subr.bf16.mxu0 %v523
    %1318 = vmatpush1.bf16.msra.mxu0 %v522
    %1319 = vmatprep.subr.bf16.mxu0 %v527
    %1320 = vmatpush1.bf16.msra.mxu0 %v526
    %1321 = vmatprep.subr.bf16.mxu0 %v531
    %1322 = vmatpush1.bf16.msra.mxu0 %v530
    %1323 = vmatprep.subr.bf16.mxu0 %v535
    %1324 = vmatpush1.bf16.msra.mxu0 %v534
    %1325 = vmatprep.subr.bf16.mxu0 %v539
    %1326 = vmatpush1.bf16.msra.mxu0 %v538
    %1327 = vmatprep.subr.bf16.mxu0 0
    %1328 = vmatpush1.bf16.msra.mxu0 0
    %1329 = vmatprep.subr.bf16.mxu0 0
    %1330 = vmatpush1.bf16.msra.mxu0 0
    %1331 = vmatprep.subr.bf16.mxu0 0
    %1332 = vmatpush1.bf16.msra.mxu0 0
    %1333 = vmatprep.subr.bf16.mxu0 0
    %1334 = vmatpush1.bf16.msra.mxu0 0
    %1335 = vmatprep.subr.bf16.mxu0 0
    %1336 = vmatpush1.bf16.msra.mxu0 0
    %1337 = vmatprep.subr.bf16.mxu0 0
    %1338 = vmatpush1.bf16.msra.mxu0 0
    %1339 = vmatprep.subr.bf16.mxu0 0
    %1340 = vmatpush1.bf16.msra.mxu0 0
    %1341 = vmatprep.subr.bf16.mxu0 0
    %1342 = vmatpush1.bf16.msra.mxu0 0
    %1343 = vmatprep.mubr.bf16.mxu0 0
    %1344 = vmatmul.mubr.bf16.gmra.mrb[0].mxu0 %v1310
    %v1345 = vpop.f32.mrb[0].mxu0
    %v1346 = vadd.f32 0.0, %v1345
    %v1347 = vpop.f32.mrb[0].mxu0
    %v1348 = vadd.f32 0.0, %v1347
    %v1349 = vpop.f32.mrb[0].mxu0
    %v1350 = vpop.f32.mrb[0].mxu0
    %1351 = vdwg.mxu0
    %1352 = vmatprep.subr.bf16.mxu0 %v513
    %1353 = vmatpush1.bf16.msra.mxu0 %v512
    %1354 = vmatprep.subr.bf16.mxu0 %v517
    %1355 = vmatpush1.bf16.msra.mxu0 %v516
    %1356 = vmatprep.subr.bf16.mxu0 %v521
    %1357 = vmatpush1.bf16.msra.mxu0 %v520
    %1358 = vmatprep.subr.bf16.mxu0 %v525
    %1359 = vmatpush1.bf16.msra.mxu0 %v524
    %1360 = vmatprep.subr.bf16.mxu0 %v529
    %1361 = vmatpush1.bf16.msra.mxu0 %v528
    %1362 = vmatprep.subr.bf16.mxu0 %v533
    %1363 = vmatpush1.bf16.msra.mxu0 %v532
    %1364 = vmatprep.subr.bf16.mxu0 %v537
    %1365 = vmatpush1.bf16.msra.mxu0 %v536
    %1366 = vmatprep.subr.bf16.mxu0 %v541
    %1367 = vmatpush1.bf16.msra.mxu0 %v540
    %1368 = vmatprep.subr.bf16.mxu0 0
    %1369 = vmatpush1.bf16.msra.mxu0 0
    %1370 = vmatprep.subr.bf16.mxu0 0
    %1371 = vmatpush1.bf16.msra.mxu0 0
    %1372 = vmatprep.subr.bf16.mxu0 0
    %1373 = vmatpush1.bf16.msra.mxu0 0
    %1374 = vmatprep.subr.bf16.mxu0 0
    %1375 = vmatpush1.bf16.msra.mxu0 0
    %1376 = vmatprep.subr.bf16.mxu0 0
    %1377 = vmatpush1.bf16.msra.mxu0 0
    %1378 = vmatprep.subr.bf16.mxu0 0
    %1379 = vmatpush1.bf16.msra.mxu0 0
    %1380 = vmatprep.subr.bf16.mxu0 0
    %1381 = vmatpush1.bf16.msra.mxu0 0
    %1382 = vmatprep.subr.bf16.mxu0 0
    %1383 = vmatpush1.bf16.msra.mxu0 0
    %1384 = vmatprep.mubr.bf16.mxu0 0
    %1385 = vmatmul.mubr.bf16.gmra.mrb[0].mxu0 %v1310
    %v1386 = vpop.f32.mrb[0].mxu0
    %v1387 = vadd.f32 0.0, %v1386
    %v1388 = vpop.f32.mrb[0].mxu0
    %v1389 = vadd.f32 0.0, %v1388
    %v1390 = vpop.f32.mrb[0].mxu0
    %v1391 = vpop.f32.mrb[0].mxu0
    %1392 = vdwg.mxu0
    %v1393 = vadd.f32 %v1306, %v1346
    %v1394 = vadd.f32 %v1307, %v1348
    %v1395 = vadd.f32 %v1308, %v1387
    %v1396 = vadd.f32 %v1309, %v1389
    %v1397 = vmul.f32 %v1393, 0.5
    %v1398 = vtanh.pop %v1397
    %v1399 = vmul.f32 %v1398, 0.5
    %v1400 = vadd.f32 %v1399, 0.5
    %v1401 = vmul.f32 %v1394, 0.5
    %v1402 = vtanh.pop %v1401
    %v1403 = vmul.f32 %v1402, 0.5
    %v1404 = vadd.f32 %v1403, 0.5
    %v1405 = vtanh.pop %v1395
    %v1406 = vmul.f32 %v1396, 0.5
    %v1407 = vtanh.pop %v1406
    %v1408 = vmul.f32 %v1407, 0.5
    %v1409 = vadd.f32 %v1408, 0.5
    %v1410 = vmul.f32 %v1404, %v1176
    %v1411 = vmul.f32 %v1400, %v1405
    %v1412 = vadd.f32 %v1410, %v1411
    %v1413 = vtanh.pop %v1412
    %v1414 = vmul.f32 %v1409, %v1413
    %vm1415 = vcmp.gt.s32.totalorder %v127, 4
    %v1416 = vsel %vm1415, 1, 0
    %1417 = vset.pattern.permute.xlu0 0
    %1418 = vperm.xlu0 %1417, %v1416
    %v1419 = vpop.permute.xlu0 %1418
    %vm1420 = vcmp.eq.s32.totalorder %v1419, 1
    %v1421 = vsel %vm1420, %v1414, %v1175
    %v1422 = vsel %vm1420, %v1412, %v1176
    %v1423 = vsel %vm1420, %v1414, 0.0
    %s1424 = scalar_lea.vmem [#allocation8], 64
    %1425 = vst [vmem:[%s1424 + $0x8] sm:$0xff] %v1423
    %v1426 = vld [vmem:[%s1303] sm:$0xff]
    %v1427 = vld [vmem:[%s1303 + $0x8] sm:$0xff]
    %v1428 = vunpack.c.l.bf16 %v1426
    %v1429 = vunpack.c.h.bf16 %v1426
    %v1430 = vunpack.c.l.bf16 %v1427
    %v1431 = vunpack.c.h.bf16 %v1427
    %v1432 = vpack.c.bf16 %v1298, %v1298
    %1433 = vmatprep.subr.bf16.mxu0 %v231
    %1434 = vmatpush1.bf16.msra.mxu0 %v230
    %1435 = vmatprep.subr.bf16.mxu0 %v235
    %1436 = vmatpush1.bf16.msra.mxu0 %v234
    %1437 = vmatprep.subr.bf16.mxu0 %v239
    %1438 = vmatpush1.bf16.msra.mxu0 %v238
    %1439 = vmatprep.subr.bf16.mxu0 %v243
    %1440 = vmatpush1.bf16.msra.mxu0 %v242
    %1441 = vmatprep.subr.bf16.mxu0 %v247
    %1442 = vmatpush1.bf16.msra.mxu0 %v246
    %1443 = vmatprep.subr.bf16.mxu0 %v251
    %1444 = vmatpush1.bf16.msra.mxu0 %v250
    %1445 = vmatprep.subr.bf16.mxu0 %v255
    %1446 = vmatpush1.bf16.msra.mxu0 %v254
    %1447 = vmatprep.subr.bf16.mxu0 %v259
    %1448 = vmatpush1.bf16.msra.mxu0 %v258
    %1449 = vmatprep.subr.bf16.mxu0 0
    %1450 = vmatpush1.bf16.msra.mxu0 0
    %1451 = vmatprep.subr.bf16.mxu0 0
    %1452 = vmatpush1.bf16.msra.mxu0 0
    %1453 = vmatprep.subr.bf16.mxu0 0
    %1454 = vmatpush1.bf16.msra.mxu0 0
    %1455 = vmatprep.subr.bf16.mxu0 0
    %1456 = vmatpush1.bf16.msra.mxu0 0
    %1457 = vmatprep.subr.bf16.mxu0 0
    %1458 = vmatpush1.bf16.msra.mxu0 0
    %1459 = vmatprep.subr.bf16.mxu0 0
    %1460 = vmatpush1.bf16.msra.mxu0 0
    %1461 = vmatprep.subr.bf16.mxu0 0
    %1462 = vmatpush1.bf16.msra.mxu0 0
    %1463 = vmatprep.subr.bf16.mxu0 0
    %1464 = vmatpush1.bf16.msra.mxu0 0
    %1465 = vmatprep.mubr.bf16.mxu0 0
    %1466 = vmatmul.mubr.bf16.gmra.mrb[0].mxu0 %v1432
    %v1467 = vpop.f32.mrb[0].mxu0
    %v1468 = vadd.f32 0.0, %v1467
    %v1469 = vpop.f32.mrb[0].mxu0
    %v1470 = vadd.f32 0.0, %v1469
    %v1471 = vpop.f32.mrb[0].mxu0
    %v1472 = vpop.f32.mrb[0].mxu0
    %1473 = vdwg.mxu0
    %1474 = vmatprep.subr.bf16.mxu0 %v233
    %1475 = vmatpush1.bf16.msra.mxu0 %v232
    %1476 = vmatprep.subr.bf16.mxu0 %v237
    %1477 = vmatpush1.bf16.msra.mxu0 %v236
    %1478 = vmatprep.subr.bf16.mxu0 %v241
    %1479 = vmatpush1.bf16.msra.mxu0 %v240
    %1480 = vmatprep.subr.bf16.mxu0 %v245
    %1481 = vmatpush1.bf16.msra.mxu0 %v244
    %1482 = vmatprep.subr.bf16.mxu0 %v249
    %1483 = vmatpush1.bf16.msra.mxu0 %v248
    %1484 = vmatprep.subr.bf16.mxu0 %v253
    %1485 = vmatpush1.bf16.msra.mxu0 %v252
    %1486 = vmatprep.subr.bf16.mxu0 %v257
    %1487 = vmatpush1.bf16.msra.mxu0 %v256
    %1488 = vmatprep.subr.bf16.mxu0 %v261
    %1489 = vmatpush1.bf16.msra.mxu0 %v260
    %1490 = vmatprep.subr.bf16.mxu0 0
    %1491 = vmatpush1.bf16.msra.mxu0 0
    %1492 = vmatprep.subr.bf16.mxu0 0
    %1493 = vmatpush1.bf16.msra.mxu0 0
    %1494 = vmatprep.subr.bf16.mxu0 0
    %1495 = vmatpush1.bf16.msra.mxu0 0
    %1496 = vmatprep.subr.bf16.mxu0 0
    %1497 = vmatpush1.bf16.msra.mxu0 0
    %1498 = vmatprep.subr.bf16.mxu0 0
    %1499 = vmatpush1.bf16.msra.mxu0 0
    %1500 = vmatprep.subr.bf16.mxu0 0
    %1501 = vmatpush1.bf16.msra.mxu0 0
    %1502 = vmatprep.subr.bf16.mxu0 0
    %1503 = vmatpush1.bf16.msra.mxu0 0
    %1504 = vmatprep.subr.bf16.mxu0 0
    %1505 = vmatpush1.bf16.msra.mxu0 0
    %1506 = vmatprep.mubr.bf16.mxu0 0
    %1507 = vmatmul.mubr.bf16.gmra.mrb[0].mxu0 %v1432
    %v1508 = vpop.f32.mrb[0].mxu0
    %v1509 = vadd.f32 0.0, %v1508
    %v1510 = vpop.f32.mrb[0].mxu0
    %v1511 = vadd.f32 0.0, %v1510
    %v1512 = vpop.f32.mrb[0].mxu0
    %v1513 = vpop.f32.mrb[0].mxu0
    %1514 = vdwg.mxu0
    %v1515 = vadd.f32 %v1428, %v1468
    %v1516 = vadd.f32 %v1429, %v1470
    %v1517 = vadd.f32 %v1430, %v1509
    %v1518 = vadd.f32 %v1431, %v1511
    %v1519 = vmul.f32 %v1515, 0.5
    %v1520 = vtanh.pop %v1519
    %v1521 = vmul.f32 %v1520, 0.5
    %v1522 = vadd.f32 %v1521, 0.5
    %v1523 = vmul.f32 %v1516, 0.5
    %v1524 = vtanh.pop %v1523
    %v1525 = vmul.f32 %v1524, 0.5
    %v1526 = vadd.f32 %v1525, 0.5
    %v1527 = vtanh.pop %v1517
    %v1528 = vmul.f32 %v1518, 0.5
    %v1529 = vtanh.pop %v1528
    %v1530 = vmul.f32 %v1529, 0.5
    %v1531 = vadd.f32 %v1530, 0.5
    %v1532 = vmul.f32 %v1526, %v1299
    %v1533 = vmul.f32 %v1522, %v1527
    %v1534 = vadd.f32 %v1532, %v1533
    %v1535 = vtanh.pop %v1534
    %v1536 = vmul.f32 %v1531, %v1535
    %v1537 = vsel %vm1420, %v1536, %v1298
    %v1538 = vsel %vm1420, %v1534, %v1299
    %v1539 = vsel %vm1420, %v1536, 0.0
    %1540 = vst [vmem:[%s1424] sm:$0xff] %v1539
    %v1541 = vld [vmem:[%s1180 + $0x10] sm:$0xff]
    %v1542 = vld [vmem:[%s1180 + $0x18] sm:$0xff]
    %v1543 = vunpack.c.l.bf16 %v1541
    %v1544 = vunpack.c.h.bf16 %v1541
    %v1545 = vunpack.c.l.bf16 %v1542
    %v1546 = vunpack.c.h.bf16 %v1542
    %v1547 = vpack.c.bf16 %v1421, %v1421
    %1548 = vmatprep.subr.bf16.mxu0 %v511
    %1549 = vmatpush1.bf16.msra.mxu0 %v510
    %1550 = vmatprep.subr.bf16.mxu0 %v515
    %1551 = vmatpush1.bf16.msra.mxu0 %v514
    %1552 = vmatprep.subr.bf16.mxu0 %v519
    %1553 = vmatpush1.bf16.msra.mxu0 %v518
    %1554 = vmatprep.subr.bf16.mxu0 %v523
    %1555 = vmatpush1.bf16.msra.mxu0 %v522
    %1556 = vmatprep.subr.bf16.mxu0 %v527
    %1557 = vmatpush1.bf16.msra.mxu0 %v526
    %1558 = vmatprep.subr.bf16.mxu0 %v531
    %1559 = vmatpush1.bf16.msra.mxu0 %v530
    %1560 = vmatprep.subr.bf16.mxu0 %v535
    %1561 = vmatpush1.bf16.msra.mxu0 %v534
    %1562 = vmatprep.subr.bf16.mxu0 %v539
    %1563 = vmatpush1.bf16.msra.mxu0 %v538
    %1564 = vmatprep.subr.bf16.mxu0 0
    %1565 = vmatpush1.bf16.msra.mxu0 0
    %1566 = vmatprep.subr.bf16.mxu0 0
    %1567 = vmatpush1.bf16.msra.mxu0 0
    %1568 = vmatprep.subr.bf16.mxu0 0
    %1569 = vmatpush1.bf16.msra.mxu0 0
    %1570 = vmatprep.subr.bf16.mxu0 0
    %1571 = vmatpush1.bf16.msra.mxu0 0
    %1572 = vmatprep.subr.bf16.mxu0 0
    %1573 = vmatpush1.bf16.msra.mxu0 0
    %1574 = vmatprep.subr.bf16.mxu0 0
    %1575 = vmatpush1.bf16.msra.mxu0 0
    %1576 = vmatprep.subr.bf16.mxu0 0
    %1577 = vmatpush1.bf16.msra.mxu0 0
    %1578 = vmatprep.subr.bf16.mxu0 0
    %1579 = vmatpush1.bf16.msra.mxu0 0
    %1580 = vmatprep.mubr.bf16.mxu0 0
    %1581 = vmatmul.mubr.bf16.gmra.mrb[0].mxu0 %v1547
    %v1582 = vpop.f32.mrb[0].mxu0
    %v1583 = vadd.f32 0.0, %v1582
    %v1584 = vpop.f32.mrb[0].mxu0
    %v1585 = vadd.f32 0.0, %v1584
    %v1586 = vpop.f32.mrb[0].mxu0
    %v1587 = vpop.f32.mrb[0].mxu0
    %1588 = vdwg.mxu0
    %1589 = vmatprep.subr.bf16.mxu0 %v513
    %1590 = vmatpush1.bf16.msra.mxu0 %v512
    %1591 = vmatprep.subr.bf16.mxu0 %v517
    %1592 = vmatpush1.bf16.msra.mxu0 %v516
    %1593 = vmatprep.subr.bf16.mxu0 %v521
    %1594 = vmatpush1.bf16.msra.mxu0 %v520
    %1595 = vmatprep.subr.bf16.mxu0 %v525
    %1596 = vmatpush1.bf16.msra.mxu0 %v524
    %1597 = vmatprep.subr.bf16.mxu0 %v529
    %1598 = vmatpush1.bf16.msra.mxu0 %v528
    %1599 = vmatprep.subr.bf16.mxu0 %v533
    %1600 = vmatpush1.bf16.msra.mxu0 %v532
    %1601 = vmatprep.subr.bf16.mxu0 %v537
    %1602 = vmatpush1.bf16.msra.mxu0 %v536
    %1603 = vmatprep.subr.bf16.mxu0 %v541
    %1604 = vmatpush1.bf16.msra.mxu0 %v540
    %1605 = vmatprep.subr.bf16.mxu0 0
    %1606 = vmatpush1.bf16.msra.mxu0 0
    %1607 = vmatprep.subr.bf16.mxu0 0
    %1608 = vmatpush1.bf16.msra.mxu0 0
    %1609 = vmatprep.subr.bf16.mxu0 0
    %1610 = vmatpush1.bf16.msra.mxu0 0
    %1611 = vmatprep.subr.bf16.mxu0 0
    %1612 = vmatpush1.bf16.msra.mxu0 0
    %1613 = vmatprep.subr.bf16.mxu0 0
    %1614 = vmatpush1.bf16.msra.mxu0 0
    %1615 = vmatprep.subr.bf16.mxu0 0
    %1616 = vmatpush1.bf16.msra.mxu0 0
    %1617 = vmatprep.subr.bf16.mxu0 0
    %1618 = vmatpush1.bf16.msra.mxu0 0
    %1619 = vmatprep.subr.bf16.mxu0 0
    %1620 = vmatpush1.bf16.msra.mxu0 0
    %1621 = vmatprep.mubr.bf16.mxu0 0
    %1622 = vmatmul.mubr.bf16.gmra.mrb[0].mxu0 %v1547
    %v1623 = vpop.f32.mrb[0].mxu0
    %v1624 = vadd.f32 0.0, %v1623
    %v1625 = vpop.f32.mrb[0].mxu0
    %v1626 = vadd.f32 0.0, %v1625
    %v1627 = vpop.f32.mrb[0].mxu0
    %v1628 = vpop.f32.mrb[0].mxu0
    %1629 = vdwg.mxu0
    %v1630 = vadd.f32 %v1543, %v1583
    %v1631 = vadd.f32 %v1544, %v1585
    %v1632 = vadd.f32 %v1545, %v1624
    %v1633 = vadd.f32 %v1546, %v1626
    %v1634 = vmul.f32 %v1630, 0.5
    %v1635 = vtanh.pop %v1634
    %v1636 = vmul.f32 %v1635, 0.5
    %v1637 = vadd.f32 %v1636, 0.5
    %v1638 = vmul.f32 %v1631, 0.5
    %v1639 = vtanh.pop %v1638
    %v1640 = vmul.f32 %v1639, 0.5
    %v1641 = vadd.f32 %v1640, 0.5
    %v1642 = vtanh.pop %v1632
    %v1643 = vmul.f32 %v1633, 0.5
    %v1644 = vtanh.pop %v1643
    %v1645 = vmul.f32 %v1644, 0.5
    %v1646 = vadd.f32 %v1645, 0.5
    %v1647 = vmul.f32 %v1641, %v1422
    %v1648 = vmul.f32 %v1637, %v1642
    %v1649 = vadd.f32 %v1647, %v1648
    %v1650 = vtanh.pop %v1649
    %v1651 = vmul.f32 %v1646, %v1650
    %v1652 = vsel %vm1297, %v1651, %v1421
    %v1653 = vsel %vm1297, %v1649, %v1422
    %v1654 = vsel %vm1297, %v1651, 0.0
    %1655 = vst [vmem:[%s1301 + $0x8] sm:$0xff] %v1654
    %v1656 = vld [vmem:[%s1057] sm:$0xff]
    %v1657 = vld [vmem:[%s1057 + $0x8] sm:$0xff]
    %v1658 = vunpack.c.l.bf16 %v1656
    %v1659 = vunpack.c.h.bf16 %v1656
    %v1660 = vunpack.c.l.bf16 %v1657
    %v1661 = vunpack.c.h.bf16 %v1657
    %v1662 = vpack.c.bf16 %v1537, %v1537
    %1663 = vmatprep.subr.bf16.mxu0 %v231
    %1664 = vmatpush1.bf16.msra.mxu0 %v230
    %1665 = vmatprep.subr.bf16.mxu0 %v235
    %1666 = vmatpush1.bf16.msra.mxu0 %v234
    %1667 = vmatprep.subr.bf16.mxu0 %v239
    %1668 = vmatpush1.bf16.msra.mxu0 %v238
    %1669 = vmatprep.subr.bf16.mxu0 %v243
    %1670 = vmatpush1.bf16.msra.mxu0 %v242
    %1671 = vmatprep.subr.bf16.mxu0 %v247
    %1672 = vmatpush1.bf16.msra.mxu0 %v246
    %1673 = vmatprep.subr.bf16.mxu0 %v251
    %1674 = vmatpush1.bf16.msra.mxu0 %v250
    %1675 = vmatprep.subr.bf16.mxu0 %v255
    %1676 = vmatpush1.bf16.msra.mxu0 %v254
    %1677 = vmatprep.subr.bf16.mxu0 %v259
    %1678 = vmatpush1.bf16.msra.mxu0 %v258
    %1679 = vmatprep.subr.bf16.mxu0 0
    %1680 = vmatpush1.bf16.msra.mxu0 0
    %1681 = vmatprep.subr.bf16.mxu0 0
    %1682 = vmatpush1.bf16.msra.mxu0 0
    %1683 = vmatprep.subr.bf16.mxu0 0
    %1684 = vmatpush1.bf16.msra.mxu0 0
    %1685 = vmatprep.subr.bf16.mxu0 0
    %1686 = vmatpush1.bf16.msra.mxu0 0
    %1687 = vmatprep.subr.bf16.mxu0 0
    %1688 = vmatpush1.bf16.msra.mxu0 0
    %1689 = vmatprep.subr.bf16.mxu0 0
    %1690 = vmatpush1.bf16.msra.mxu0 0
    %1691 = vmatprep.subr.bf16.mxu0 0
    %1692 = vmatpush1.bf16.msra.mxu0 0
    %1693 = vmatprep.subr.bf16.mxu0 0
    %1694 = vmatpush1.bf16.msra.mxu0 0
    %1695 = vmatprep.mubr.bf16.mxu0 0
    %1696 = vmatmul.mubr.bf16.gmra.mrb[0].mxu0 %v1662
    %v1697 = vpop.f32.mrb[0].mxu0
    %v1698 = vadd.f32 0.0, %v1697
    %v1699 = vpop.f32.mrb[0].mxu0
    %v1700 = vadd.f32 0.0, %v1699
    %v1701 = vpop.f32.mrb[0].mxu0
    %v1702 = vpop.f32.mrb[0].mxu0
    %1703 = vdwg.mxu0
    %1704 = vmatprep.subr.bf16.mxu0 %v233
    %1705 = vmatpush1.bf16.msra.mxu0 %v232
    %1706 = vmatprep.subr.bf16.mxu0 %v237
    %1707 = vmatpush1.bf16.msra.mxu0 %v236
    %1708 = vmatprep.subr.bf16.mxu0 %v241
    %1709 = vmatpush1.bf16.msra.mxu0 %v240
    %1710 = vmatprep.subr.bf16.mxu0 %v245
    %1711 = vmatpush1.bf16.msra.mxu0 %v244
    %1712 = vmatprep.subr.bf16.mxu0 %v249
    %1713 = vmatpush1.bf16.msra.mxu0 %v248
    %1714 = vmatprep.subr.bf16.mxu0 %v253
    %1715 = vmatpush1.bf16.msra.mxu0 %v252
    %1716 = vmatprep.subr.bf16.mxu0 %v257
    %1717 = vmatpush1.bf16.msra.mxu0 %v256
    %1718 = vmatprep.subr.bf16.mxu0 %v261
    %1719 = vmatpush1.bf16.msra.mxu0 %v260
    %1720 = vmatprep.subr.bf16.mxu0 0
    %1721 = vmatpush1.bf16.msra.mxu0 0
    %1722 = vmatprep.subr.bf16.mxu0 0
    %1723 = vmatpush1.bf16.msra.mxu0 0
    %1724 = vmatprep.subr.bf16.mxu0 0
    %1725 = vmatpush1.bf16.msra.mxu0 0
    %1726 = vmatprep.subr.bf16.mxu0 0
    %1727 = vmatpush1.bf16.msra.mxu0 0
    %1728 = vmatprep.subr.bf16.mxu0 0
    %1729 = vmatpush1.bf16.msra.mxu0 0
    %1730 = vmatprep.subr.bf16.mxu0 0
    %1731 = vmatpush1.bf16.msra.mxu0 0
    %1732 = vmatprep.subr.bf16.mxu0 0
    %1733 = vmatpush1.bf16.msra.mxu0 0
    %1734 = vmatprep.subr.bf16.mxu0 0
    %1735 = vmatpush1.bf16.msra.mxu0 0
    %1736 = vmatprep.mubr.bf16.mxu0 0
    %1737 = vmatmul.mubr.bf16.gmra.mrb[0].mxu0 %v1662
    %v1738 = vpop.f32.mrb[0].mxu0
    %v1739 = vadd.f32 0.0, %v1738
    %v1740 = vpop.f32.mrb[0].mxu0
    %v1741 = vadd.f32 0.0, %v1740
    %v1742 = vpop.f32.mrb[0].mxu0
    %v1743 = vpop.f32.mrb[0].mxu0
    %1744 = vdwg.mxu0
    %v1745 = vadd.f32 %v1658, %v1698
    %v1746 = vadd.f32 %v1659, %v1700
    %v1747 = vadd.f32 %v1660, %v1739
    %v1748 = vadd.f32 %v1661, %v1741
    %v1749 = vmul.f32 %v1745, 0.5
    %v1750 = vtanh.pop %v1749
    %v1751 = vmul.f32 %v1750, 0.5
    %v1752 = vadd.f32 %v1751, 0.5
    %v1753 = vmul.f32 %v1746, 0.5
    %v1754 = vtanh.pop %v1753
    %v1755 = vmul.f32 %v1754, 0.5
    %v1756 = vadd.f32 %v1755, 0.5
    %v1757 = vtanh.pop %v1747
    %v1758 = vmul.f32 %v1748, 0.5
    %v1759 = vtanh.pop %v1758
    %v1760 = vmul.f32 %v1759, 0.5
    %v1761 = vadd.f32 %v1760, 0.5
    %v1762 = vmul.f32 %v1756, %v1538
    %v1763 = vmul.f32 %v1752, %v1757
    %v1764 = vadd.f32 %v1762, %v1763
    %v1765 = vtanh.pop %v1764
    %v1766 = vmul.f32 %v1761, %v1765
    %v1767 = vsel %vm1174, %v1766, %v1537
    %v1768 = vsel %vm1174, %v1764, %v1538
    %v1769 = vsel %vm1174, %v1766, 0.0
    %1770 = vst [vmem:[%s1178] sm:$0xff] %v1769
    %v1771 = vld [vmem:[%s934 + $0x10] sm:$0xff]
    %v1772 = vld [vmem:[%s934 + $0x18] sm:$0xff]
    %v1773 = vunpack.c.l.bf16 %v1771
    %v1774 = vunpack.c.h.bf16 %v1771
    %v1775 = vunpack.c.l.bf16 %v1772
    %v1776 = vunpack.c.h.bf16 %v1772
    %v1777 = vpack.c.bf16 %v1652, %v1652
    %1778 = vmatprep.subr.bf16.mxu0 %v511
    %1779 = vmatpush1.bf16.msra.mxu0 %v510
    %1780 = vmatprep.subr.bf16.mxu0 %v515
    %1781 = vmatpush1.bf16.msra.mxu0 %v514
    %1782 = vmatprep.subr.bf16.mxu0 %v519
    %1783 = vmatpush1.bf16.msra.mxu0 %v518
    %1784 = vmatprep.subr.bf16.mxu0 %v523
    %1785 = vmatpush1.bf16.msra.mxu0 %v522
    %1786 = vmatprep.subr.bf16.mxu0 %v527
    %1787 = vmatpush1.bf16.msra.mxu0 %v526
    %1788 = vmatprep.subr.bf16.mxu0 %v531
    %1789 = vmatpush1.bf16.msra.mxu0 %v530
    %1790 = vmatprep.subr.bf16.mxu0 %v535
    %1791 = vmatpush1.bf16.msra.mxu0 %v534
    %1792 = vmatprep.subr.bf16.mxu0 %v539
    %1793 = vmatpush1.bf16.msra.mxu0 %v538
    %1794 = vmatprep.subr.bf16.mxu0 0
    %1795 = vmatpush1.bf16.msra.mxu0 0
    %1796 = vmatprep.subr.bf16.mxu0 0
    %1797 = vmatpush1.bf16.msra.mxu0 0
    %1798 = vmatprep.subr.bf16.mxu0 0
    %1799 = vmatpush1.bf16.msra.mxu0 0
    %1800 = vmatprep.subr.bf16.mxu0 0
    %1801 = vmatpush1.bf16.msra.mxu0 0
    %1802 = vmatprep.subr.bf16.mxu0 0
    %1803 = vmatpush1.bf16.msra.mxu0 0
    %1804 = vmatprep.subr.bf16.mxu0 0
    %1805 = vmatpush1.bf16.msra.mxu0 0
    %1806 = vmatprep.subr.bf16.mxu0 0
    %1807 = vmatpush1.bf16.msra.mxu0 0
    %1808 = vmatprep.subr.bf16.mxu0 0
    %1809 = vmatpush1.bf16.msra.mxu0 0
    %1810 = vmatprep.mubr.bf16.mxu0 0
    %1811 = vmatmul.mubr.bf16.gmra.mrb[0].mxu0 %v1777
    %v1812 = vpop.f32.mrb[0].mxu0
    %v1813 = vadd.f32 0.0, %v1812
    %v1814 = vpop.f32.mrb[0].mxu0
    %v1815 = vadd.f32 0.0, %v1814
    %v1816 = vpop.f32.mrb[0].mxu0
    %v1817 = vpop.f32.mrb[0].mxu0
    %1818 = vdwg.mxu0
    %1819 = vmatprep.subr.bf16.mxu0 %v513
    %1820 = vmatpush1.bf16.msra.mxu0 %v512
    %1821 = vmatprep.subr.bf16.mxu0 %v517
    %1822 = vmatpush1.bf16.msra.mxu0 %v516
    %1823 = vmatprep.subr.bf16.mxu0 %v521
    %1824 = vmatpush1.bf16.msra.mxu0 %v520
    %1825 = vmatprep.subr.bf16.mxu0 %v525
    %1826 = vmatpush1.bf16.msra.mxu0 %v524
    %1827 = vmatprep.subr.bf16.mxu0 %v529
    %1828 = vmatpush1.bf16.msra.mxu0 %v528
    %1829 = vmatprep.subr.bf16.mxu0 %v533
    %1830 = vmatpush1.bf16.msra.mxu0 %v532
    %1831 = vmatprep.subr.bf16.mxu0 %v537
    %1832 = vmatpush1.bf16.msra.mxu0 %v536
    %1833 = vmatprep.subr.bf16.mxu0 %v541
    %1834 = vmatpush1.bf16.msra.mxu0 %v540
    %1835 = vmatprep.subr.bf16.mxu0 0
    %1836 = vmatpush1.bf16.msra.mxu0 0
    %1837 = vmatprep.subr.bf16.mxu0 0
    %1838 = vmatpush1.bf16.msra.mxu0 0
    %1839 = vmatprep.subr.bf16.mxu0 0
    %1840 = vmatpush1.bf16.msra.mxu0 0
    %1841 = vmatprep.subr.bf16.mxu0 0
    %1842 = vmatpush1.bf16.msra.mxu0 0
    %1843 = vmatprep.subr.bf16.mxu0 0
    %1844 = vmatpush1.bf16.msra.mxu0 0
    %1845 = vmatprep.subr.bf16.mxu0 0
    %1846 = vmatpush1.bf16.msra.mxu0 0
    %1847 = vmatprep.subr.bf16.mxu0 0
    %1848 = vmatpush1.bf16.msra.mxu0 0
    %1849 = vmatprep.subr.bf16.mxu0 0
    %1850 = vmatpush1.bf16.msra.mxu0 0
    %1851 = vmatprep.mubr.bf16.mxu0 0
    %1852 = vmatmul.mubr.bf16.gmra.mrb[0].mxu0 %v1777
    %v1853 = vpop.f32.mrb[0].mxu0
    %v1854 = vadd.f32 0.0, %v1853
    %v1855 = vpop.f32.mrb[0].mxu0
    %v1856 = vadd.f32 0.0, %v1855
    %v1857 = vpop.f32.mrb[0].mxu0
    %v1858 = vpop.f32.mrb[0].mxu0
    %1859 = vdwg.mxu0
    %v1860 = vadd.f32 %v1773, %v1813
    %v1861 = vadd.f32 %v1774, %v1815
    %v1862 = vadd.f32 %v1775, %v1854
    %v1863 = vadd.f32 %v1776, %v1856
    %v1864 = vmul.f32 %v1860, 0.5
    %v1865 = vtanh.pop %v1864
    %v1866 = vmul.f32 %v1865, 0.5
    %v1867 = vadd.f32 %v1866, 0.5
    %v1868 = vmul.f32 %v1861, 0.5
    %v1869 = vtanh.pop %v1868
    %v1870 = vmul.f32 %v1869, 0.5
    %v1871 = vadd.f32 %v1870, 0.5
    %v1872 = vtanh.pop %v1862
    %v1873 = vmul.f32 %v1863, 0.5
    %v1874 = vtanh.pop %v1873
    %v1875 = vmul.f32 %v1874, 0.5
    %v1876 = vadd.f32 %v1875, 0.5
    %v1877 = vmul.f32 %v1871, %v1653
    %v1878 = vmul.f32 %v1867, %v1872
    %v1879 = vadd.f32 %v1877, %v1878
    %v1880 = vtanh.pop %v1879
    %v1881 = vmul.f32 %v1876, %v1880
    %v1882 = vsel %vm1051, %v1881, %v1652
    %v1883 = vsel %vm1051, %v1879, %v1653
    %v1884 = vsel %vm1051, %v1881, 0.0
    %1885 = vst [vmem:[%s1055 + $0x8] sm:$0xff] %v1884
    %v1886 = vld [vmem:[%s811] sm:$0xff]
    %v1887 = vld [vmem:[%s811 + $0x8] sm:$0xff]
    %v1888 = vunpack.c.l.bf16 %v1886
    %v1889 = vunpack.c.h.bf16 %v1886
    %v1890 = vunpack.c.l.bf16 %v1887
    %v1891 = vunpack.c.h.bf16 %v1887
    %v1892 = vpack.c.bf16 %v1767, %v1767
    %1893 = vmatprep.subr.bf16.mxu0 %v231
    %1894 = vmatpush1.bf16.msra.mxu0 %v230
    %1895 = vmatprep.subr.bf16.mxu0 %v235
    %1896 = vmatpush1.bf16.msra.mxu0 %v234
    %1897 = vmatprep.subr.bf16.mxu0 %v239
    %1898 = vmatpush1.bf16.msra.mxu0 %v238
    %1899 = vmatprep.subr.bf16.mxu0 %v243
    %1900 = vmatpush1.bf16.msra.mxu0 %v242
    %1901 = vmatprep.subr.bf16.mxu0 %v247
    %1902 = vmatpush1.bf16.msra.mxu0 %v246
    %1903 = vmatprep.subr.bf16.mxu0 %v251
    %1904 = vmatpush1.bf16.msra.mxu0 %v250
    %1905 = vmatprep.subr.bf16.mxu0 %v255
    %1906 = vmatpush1.bf16.msra.mxu0 %v254
    %1907 = vmatprep.subr.bf16.mxu0 %v259
    %1908 = vmatpush1.bf16.msra.mxu0 %v258
    %1909 = vmatprep.subr.bf16.mxu0 0
    %1910 = vmatpush1.bf16.msra.mxu0 0
    %1911 = vmatprep.subr.bf16.mxu0 0
    %1912 = vmatpush1.bf16.msra.mxu0 0
    %1913 = vmatprep.subr.bf16.mxu0 0
    %1914 = vmatpush1.bf16.msra.mxu0 0
    %1915 = vmatprep.subr.bf16.mxu0 0
    %1916 = vmatpush1.bf16.msra.mxu0 0
    %1917 = vmatprep.subr.bf16.mxu0 0
    %1918 = vmatpush1.bf16.msra.mxu0 0
    %1919 = vmatprep.subr.bf16.mxu0 0
    %1920 = vmatpush1.bf16.msra.mxu0 0
    %1921 = vmatprep.subr.bf16.mxu0 0
    %1922 = vmatpush1.bf16.msra.mxu0 0
    %1923 = vmatprep.subr.bf16.mxu0 0
    %1924 = vmatpush1.bf16.msra.mxu0 0
    %1925 = vmatprep.mubr.bf16.mxu0 0
    %1926 = vmatmul.mubr.bf16.gmra.mrb[0].mxu0 %v1892
    %v1927 = vpop.f32.mrb[0].mxu0
    %v1928 = vadd.f32 0.0, %v1927
    %v1929 = vpop.f32.mrb[0].mxu0
    %v1930 = vadd.f32 0.0, %v1929
    %v1931 = vpop.f32.mrb[0].mxu0
    %v1932 = vpop.f32.mrb[0].mxu0
    %1933 = vdwg.mxu0
    %1934 = vmatprep.subr.bf16.mxu0 %v233
    %1935 = vmatpush1.bf16.msra.mxu0 %v232
    %1936 = vmatprep.subr.bf16.mxu0 %v237
    %1937 = vmatpush1.bf16.msra.mxu0 %v236
    %1938 = vmatprep.subr.bf16.mxu0 %v241
    %1939 = vmatpush1.bf16.msra.mxu0 %v240
    %1940 = vmatprep.subr.bf16.mxu0 %v245
    %1941 = vmatpush1.bf16.msra.mxu0 %v244
    %1942 = vmatprep.subr.bf16.mxu0 %v249
    %1943 = vmatpush1.bf16.msra.mxu0 %v248
    %1944 = vmatprep.subr.bf16.mxu0 %v253
    %1945 = vmatpush1.bf16.msra.mxu0 %v252
    %1946 = vmatprep.subr.bf16.mxu0 %v257
    %1947 = vmatpush1.bf16.msra.mxu0 %v256
    %1948 = vmatprep.subr.bf16.mxu0 %v261
    %1949 = vmatpush1.bf16.msra.mxu0 %v260
    %1950 = vmatprep.subr.bf16.mxu0 0
    %1951 = vmatpush1.bf16.msra.mxu0 0
    %1952 = vmatprep.subr.bf16.mxu0 0
    %1953 = vmatpush1.bf16.msra.mxu0 0
    %1954 = vmatprep.subr.bf16.mxu0 0
    %1955 = vmatpush1.bf16.msra.mxu0 0
    %1956 = vmatprep.subr.bf16.mxu0 0
    %1957 = vmatpush1.bf16.msra.mxu0 0
    %1958 = vmatprep.subr.bf16.mxu0 0
    %1959 = vmatpush1.bf16.msra.mxu0 0
    %1960 = vmatprep.subr.bf16.mxu0 0
    %1961 = vmatpush1.bf16.msra.mxu0 0
    %1962 = vmatprep.subr.bf16.mxu0 0
    %1963 = vmatpush1.bf16.msra.mxu0 0
    %1964 = vmatprep.subr.bf16.mxu0 0
    %1965 = vmatpush1.bf16.msra.mxu0 0
    %1966 = vmatprep.mubr.bf16.mxu0 0
    %1967 = vmatmul.mubr.bf16.gmra.mrb[0].mxu0 %v1892
    %v1968 = vpop.f32.mrb[0].mxu0
    %v1969 = vadd.f32 0.0, %v1968
    %v1970 = vpop.f32.mrb[0].mxu0
    %v1971 = vadd.f32 0.0, %v1970
    %v1972 = vpop.f32.mrb[0].mxu0
    %v1973 = vpop.f32.mrb[0].mxu0
    %1974 = vdwg.mxu0
    %v1975 = vadd.f32 %v1888, %v1928
    %v1976 = vadd.f32 %v1889, %v1930
    %v1977 = vadd.f32 %v1890, %v1969
    %v1978 = vadd.f32 %v1891, %v1971
    %v1979 = vmul.f32 %v1975, 0.5
    %v1980 = vtanh.pop %v1979
    %v1981 = vmul.f32 %v1980, 0.5
    %v1982 = vadd.f32 %v1981, 0.5
    %v1983 = vmul.f32 %v1976, 0.5
    %v1984 = vtanh.pop %v1983
    %v1985 = vmul.f32 %v1984, 0.5
    %v1986 = vadd.f32 %v1985, 0.5
    %v1987 = vtanh.pop %v1977
    %v1988 = vmul.f32 %v1978, 0.5
    %v1989 = vtanh.pop %v1988
    %v1990 = vmul.f32 %v1989, 0.5
    %v1991 = vadd.f32 %v1990, 0.5
    %v1992 = vmul.f32 %v1986, %v1768
    %v1993 = vmul.f32 %v1982, %v1987
    %v1994 = vadd.f32 %v1992, %v1993
    %v1995 = vtanh.pop %v1994
    %v1996 = vmul.f32 %v1991, %v1995
    %v1997 = vsel %vm928, %v1996, %v1767
    %v1998 = vsel %vm928, %v1994, %v1768
    %v1999 = vsel %vm928, %v1996, 0.0
    %2000 = vst [vmem:[%s932] sm:$0xff] %v1999
    %v2001 = vld [vmem:[%s688 + $0x10] sm:$0xff]
    %v2002 = vld [vmem:[%s688 + $0x18] sm:$0xff]
    %v2003 = vunpack.c.l.bf16 %v2001
    %v2004 = vunpack.c.h.bf16 %v2001
    %v2005 = vunpack.c.l.bf16 %v2002
    %v2006 = vunpack.c.h.bf16 %v2002
    %v2007 = vpack.c.bf16 %v1882, %v1882
    %2008 = vmatprep.subr.bf16.mxu0 %v511
    %2009 = vmatpush1.bf16.msra.mxu0 %v510
    %2010 = vmatprep.subr.bf16.mxu0 %v515
    %2011 = vmatpush1.bf16.msra.mxu0 %v514
    %2012 = vmatprep.subr.bf16.mxu0 %v519
    %2013 = vmatpush1.bf16.msra.mxu0 %v518
    %2014 = vmatprep.subr.bf16.mxu0 %v523
    %2015 = vmatpush1.bf16.msra.mxu0 %v522
    %2016 = vmatprep.subr.bf16.mxu0 %v527
    %2017 = vmatpush1.bf16.msra.mxu0 %v526
    %2018 = vmatprep.subr.bf16.mxu0 %v531
    %2019 = vmatpush1.bf16.msra.mxu0 %v530
    %2020 = vmatprep.subr.bf16.mxu0 %v535
    %2021 = vmatpush1.bf16.msra.mxu0 %v534
    %2022 = vmatprep.subr.bf16.mxu0 %v539
    %2023 = vmatpush1.bf16.msra.mxu0 %v538
    %2024 = vmatprep.subr.bf16.mxu0 0
    %2025 = vmatpush1.bf16.msra.mxu0 0
    %2026 = vmatprep.subr.bf16.mxu0 0
    %2027 = vmatpush1.bf16.msra.mxu0 0
    %2028 = vmatprep.subr.bf16.mxu0 0
    %2029 = vmatpush1.bf16.msra.mxu0 0
    %2030 = vmatprep.subr.bf16.mxu0 0
    %2031 = vmatpush1.bf16.msra.mxu0 0
    %2032 = vmatprep.subr.bf16.mxu0 0
    %2033 = vmatpush1.bf16.msra.mxu0 0
    %2034 = vmatprep.subr.bf16.mxu0 0
    %2035 = vmatpush1.bf16.msra.mxu0 0
    %2036 = vmatprep.subr.bf16.mxu0 0
    %2037 = vmatpush1.bf16.msra.mxu0 0
    %2038 = vmatprep.subr.bf16.mxu0 0
    %2039 = vmatpush1.bf16.msra.mxu0 0
    %2040 = vmatprep.mubr.bf16.mxu0 0
    %2041 = vmatmul.mubr.bf16.gmra.mrb[0].mxu0 %v2007
    %v2042 = vpop.f32.mrb[0].mxu0
    %v2043 = vadd.f32 0.0, %v2042
    %v2044 = vpop.f32.mrb[0].mxu0
    %v2045 = vadd.f32 0.0, %v2044
    %v2046 = vpop.f32.mrb[0].mxu0
    %v2047 = vpop.f32.mrb[0].mxu0
    %2048 = vdwg.mxu0
    %2049 = vmatprep.subr.bf16.mxu0 %v513
    %2050 = vmatpush1.bf16.msra.mxu0 %v512
    %2051 = vmatprep.subr.bf16.mxu0 %v517
    %2052 = vmatpush1.bf16.msra.mxu0 %v516
    %2053 = vmatprep.subr.bf16.mxu0 %v521
    %2054 = vmatpush1.bf16.msra.mxu0 %v520
    %2055 = vmatprep.subr.bf16.mxu0 %v525
    %2056 = vmatpush1.bf16.msra.mxu0 %v524
    %2057 = vmatprep.subr.bf16.mxu0 %v529
    %2058 = vmatpush1.bf16.msra.mxu0 %v528
    %2059 = vmatprep.subr.bf16.mxu0 %v533
    %2060 = vmatpush1.bf16.msra.mxu0 %v532
    %2061 = vmatprep.subr.bf16.mxu0 %v537
    %2062 = vmatpush1.bf16.msra.mxu0 %v536
    %2063 = vmatprep.subr.bf16.mxu0 %v541
    %2064 = vmatpush1.bf16.msra.mxu0 %v540
    %2065 = vmatprep.subr.bf16.mxu0 0
    %2066 = vmatpush1.bf16.msra.mxu0 0
    %2067 = vmatprep.subr.bf16.mxu0 0
    %2068 = vmatpush1.bf16.msra.mxu0 0
    %2069 = vmatprep.subr.bf16.mxu0 0
    %2070 = vmatpush1.bf16.msra.mxu0 0
    %2071 = vmatprep.subr.bf16.mxu0 0
    %2072 = vmatpush1.bf16.msra.mxu0 0
    %2073 = vmatprep.subr.bf16.mxu0 0
    %2074 = vmatpush1.bf16.msra.mxu0 0
    %2075 = vmatprep.subr.bf16.mxu0 0
    %2076 = vmatpush1.bf16.msra.mxu0 0
    %2077 = vmatprep.subr.bf16.mxu0 0
    %2078 = vmatpush1.bf16.msra.mxu0 0
    %2079 = vmatprep.subr.bf16.mxu0 0
    %2080 = vmatpush1.bf16.msra.mxu0 0
    %2081 = vmatprep.mubr.bf16.mxu0 0
    %2082 = vmatmul.mubr.bf16.gmra.mrb[0].mxu0 %v2007
    %v2083 = vpop.f32.mrb[0].mxu0
    %v2084 = vadd.f32 0.0, %v2083
    %v2085 = vpop.f32.mrb[0].mxu0
    %v2086 = vadd.f32 0.0, %v2085
    %v2087 = vpop.f32.mrb[0].mxu0
    %v2088 = vpop.f32.mrb[0].mxu0
    %2089 = vdwg.mxu0
    %v2090 = vadd.f32 %v2003, %v2043
    %v2091 = vadd.f32 %v2004, %v2045
    %v2092 = vadd.f32 %v2005, %v2084
    %v2093 = vadd.f32 %v2006, %v2086
    %v2094 = vmul.f32 %v2090, 0.5
    %v2095 = vtanh.pop %v2094
    %v2096 = vmul.f32 %v2095, 0.5
    %v2097 = vadd.f32 %v2096, 0.5
    %v2098 = vmul.f32 %v2091, 0.5
    %v2099 = vtanh.pop %v2098
    %v2100 = vmul.f32 %v2099, 0.5
    %v2101 = vadd.f32 %v2100, 0.5
    %v2102 = vtanh.pop %v2092
    %v2103 = vmul.f32 %v2093, 0.5
    %v2104 = vtanh.pop %v2103
    %v2105 = vmul.f32 %v2104, 0.5
    %v2106 = vadd.f32 %v2105, 0.5
    %v2107 = vmul.f32 %v2101, %v1883
    %v2108 = vmul.f32 %v2097, %v2102
    %v2109 = vadd.f32 %v2107, %v2108
    %v2110 = vtanh.pop %v2109
    %v2111 = vmul.f32 %v2106, %v2110
    %v2112 = vsel %vm805, %v2111, %v1882
    %v2113 = vsel %vm805, %v2109, %v1883
    %v2114 = vsel %vm805, %v2111, 0.0
    %2115 = vst [vmem:[%s809 + $0x8] sm:$0xff] %v2114
    %v2116 = vld [vmem:[%s407] sm:$0xff]
    %v2117 = vld [vmem:[%s407 + $0x8] sm:$0xff]
    %v2118 = vunpack.c.l.bf16 %v2116
    %v2119 = vunpack.c.h.bf16 %v2116
    %v2120 = vunpack.c.l.bf16 %v2117
    %v2121 = vunpack.c.h.bf16 %v2117
    %v2122 = vpack.c.bf16 %v1997, %v1997
    %2123 = vmatprep.subr.bf16.mxu0 %v231
    %2124 = vmatpush1.bf16.msra.mxu0 %v230
    %2125 = vmatprep.subr.bf16.mxu0 %v235
    %2126 = vmatpush1.bf16.msra.mxu0 %v234
    %2127 = vmatprep.subr.bf16.mxu0 %v239
    %2128 = vmatpush1.bf16.msra.mxu0 %v238
    %2129 = vmatprep.subr.bf16.mxu0 %v243
    %2130 = vmatpush1.bf16.msra.mxu0 %v242
    %2131 = vmatprep.subr.bf16.mxu0 %v247
    %2132 = vmatpush1.bf16.msra.mxu0 %v246
    %2133 = vmatprep.subr.bf16.mxu0 %v251
    %2134 = vmatpush1.bf16.msra.mxu0 %v250
    %2135 = vmatprep.subr.bf16.mxu0 %v255
    %2136 = vmatpush1.bf16.msra.mxu0 %v254
    %2137 = vmatprep.subr.bf16.mxu0 %v259
    %2138 = vmatpush1.bf16.msra.mxu0 %v258
    %2139 = vmatprep.subr.bf16.mxu0 0
    %2140 = vmatpush1.bf16.msra.mxu0 0
    %2141 = vmatprep.subr.bf16.mxu0 0
    %2142 = vmatpush1.bf16.msra.mxu0 0
    %2143 = vmatprep.subr.bf16.mxu0 0
    %2144 = vmatpush1.bf16.msra.mxu0 0
    %2145 = vmatprep.subr.bf16.mxu0 0
    %2146 = vmatpush1.bf16.msra.mxu0 0
    %2147 = vmatprep.subr.bf16.mxu0 0
    %2148 = vmatpush1.bf16.msra.mxu0 0
    %2149 = vmatprep.subr.bf16.mxu0 0
    %2150 = vmatpush1.bf16.msra.mxu0 0
    %2151 = vmatprep.subr.bf16.mxu0 0
    %2152 = vmatpush1.bf16.msra.mxu0 0
    %2153 = vmatprep.subr.bf16.mxu0 0
    %2154 = vmatpush1.bf16.msra.mxu0 0
    %2155 = vmatprep.mubr.bf16.mxu0 0
    %2156 = vmatmul.mubr.bf16.gmra.mrb[0].mxu0 %v2122
    %v2157 = vpop.f32.mrb[0].mxu0
    %v2158 = vadd.f32 0.0, %v2157
    %v2159 = vpop.f32.mrb[0].mxu0
    %v2160 = vadd.f32 0.0, %v2159
    %v2161 = vpop.f32.mrb[0].mxu0
    %v2162 = vpop.f32.mrb[0].mxu0
    %2163 = vdwg.mxu0
    %2164 = vmatprep.subr.bf16.mxu0 %v233
    %2165 = vmatpush1.bf16.msra.mxu0 %v232
    %2166 = vmatprep.subr.bf16.mxu0 %v237
    %2167 = vmatpush1.bf16.msra.mxu0 %v236
    %2168 = vmatprep.subr.bf16.mxu0 %v241
    %2169 = vmatpush1.bf16.msra.mxu0 %v240
    %2170 = vmatprep.subr.bf16.mxu0 %v245
    %2171 = vmatpush1.bf16.msra.mxu0 %v244
    %2172 = vmatprep.subr.bf16.mxu0 %v249
    %2173 = vmatpush1.bf16.msra.mxu0 %v248
    %2174 = vmatprep.subr.bf16.mxu0 %v253
    %2175 = vmatpush1.bf16.msra.mxu0 %v252
    %2176 = vmatprep.subr.bf16.mxu0 %v257
    %2177 = vmatpush1.bf16.msra.mxu0 %v256
    %2178 = vmatprep.subr.bf16.mxu0 %v261
    %2179 = vmatpush1.bf16.msra.mxu0 %v260
    %2180 = vmatprep.subr.bf16.mxu0 0
    %2181 = vmatpush1.bf16.msra.mxu0 0
    %2182 = vmatprep.subr.bf16.mxu0 0
    %2183 = vmatpush1.bf16.msra.mxu0 0
    %2184 = vmatprep.subr.bf16.mxu0 0
    %2185 = vmatpush1.bf16.msra.mxu0 0
    %2186 = vmatprep.subr.bf16.mxu0 0
    %2187 = vmatpush1.bf16.msra.mxu0 0
    %2188 = vmatprep.subr.bf16.mxu0 0
    %2189 = vmatpush1.bf16.msra.mxu0 0
    %2190 = vmatprep.subr.bf16.mxu0 0
    %2191 = vmatpush1.bf16.msra.mxu0 0
    %2192 = vmatprep.subr.bf16.mxu0 0
    %2193 = vmatpush1.bf16.msra.mxu0 0
    %2194 = vmatprep.subr.bf16.mxu0 0
    %2195 = vmatpush1.bf16.msra.mxu0 0
    %2196 = vmatprep.mubr.bf16.mxu0 0
    %2197 = vmatmul.mubr.bf16.gmra.mrb[0].mxu0 %v2122
    %v2198 = vpop.f32.mrb[0].mxu0
    %v2199 = vadd.f32 0.0, %v2198
    %v2200 = vpop.f32.mrb[0].mxu0
    %v2201 = vadd.f32 0.0, %v2200
    %v2202 = vpop.f32.mrb[0].mxu0
    %v2203 = vpop.f32.mrb[0].mxu0
    %2204 = vdwg.mxu0
    %v2205 = vadd.f32 %v2118, %v2158
    %v2206 = vadd.f32 %v2119, %v2160
    %v2207 = vadd.f32 %v2120, %v2199
    %v2208 = vadd.f32 %v2121, %v2201
    %v2209 = vmul.f32 %v2205, 0.5
    %v2210 = vtanh.pop %v2209
    %v2211 = vmul.f32 %v2210, 0.5
    %v2212 = vadd.f32 %v2211, 0.5
    %v2213 = vmul.f32 %v2206, 0.5
    %v2214 = vtanh.pop %v2213
    %v2215 = vmul.f32 %v2214, 0.5
    %v2216 = vadd.f32 %v2215, 0.5
    %v2217 = vtanh.pop %v2207
    %v2218 = vmul.f32 %v2208, 0.5
    %v2219 = vtanh.pop %v2218
    %v2220 = vmul.f32 %v2219, 0.5
    %v2221 = vadd.f32 %v2220, 0.5
    %v2222 = vmul.f32 %v2216, %v1998
    %v2223 = vmul.f32 %v2212, %v2217
    %v2224 = vadd.f32 %v2222, %v2223
    %v2225 = vtanh.pop %v2224
    %v2226 = vmul.f32 %v2221, %v2225
    %v2227 = vsel %vm683, %v2226, %v1997
    %v2228 = vsel %vm683, %v2226, 0.0
    %2229 = vst [vmem:[%s686] sm:$0xff] %v2228
    %v2230 = vld [vmem:[#allocation2 + $0x10] sm:$0xff]
    %v2231 = vld [vmem:[#allocation2 + $0x18] sm:$0xff]
    %v2232 = vunpack.c.l.bf16 %v2230
    %v2233 = vunpack.c.h.bf16 %v2230
    %v2234 = vunpack.c.l.bf16 %v2231
    %v2235 = vunpack.c.h.bf16 %v2231
    %v2236 = vpack.c.bf16 %v2112, %v2112
    %2237 = vmatprep.subr.bf16.mxu0 %v511
    %2238 = vmatpush1.bf16.msra.mxu0 %v510
    %2239 = vmatprep.subr.bf16.mxu0 %v515
    %2240 = vmatpush1.bf16.msra.mxu0 %v514
    %2241 = vmatprep.subr.bf16.mxu0 %v519
    %2242 = vmatpush1.bf16.msra.mxu0 %v518
    %2243 = vmatprep.subr.bf16.mxu0 %v523
    %2244 = vmatpush1.bf16.msra.mxu0 %v522
    %2245 = vmatprep.subr.bf16.mxu0 %v527
    %2246 = vmatpush1.bf16.msra.mxu0 %v526
    %2247 = vmatprep.subr.bf16.mxu0 %v531
    %2248 = vmatpush1.bf16.msra.mxu0 %v530
    %2249 = vmatprep.subr.bf16.mxu0 %v535
    %2250 = vmatpush1.bf16.msra.mxu0 %v534
    %2251 = vmatprep.subr.bf16.mxu0 %v539
    %2252 = vmatpush1.bf16.msra.mxu0 %v538
    %2253 = vmatprep.subr.bf16.mxu0 0
    %2254 = vmatpush1.bf16.msra.mxu0 0
    %2255 = vmatprep.subr.bf16.mxu0 0
    %2256 = vmatpush1.bf16.msra.mxu0 0
    %2257 = vmatprep.subr.bf16.mxu0 0
    %2258 = vmatpush1.bf16.msra.mxu0 0
    %2259 = vmatprep.subr.bf16.mxu0 0
    %2260 = vmatpush1.bf16.msra.mxu0 0
    %2261 = vmatprep.subr.bf16.mxu0 0
    %2262 = vmatpush1.bf16.msra.mxu0 0
    %2263 = vmatprep.subr.bf16.mxu0 0
    %2264 = vmatpush1.bf16.msra.mxu0 0
    %2265 = vmatprep.subr.bf16.mxu0 0
    %2266 = vmatpush1.bf16.msra.mxu0 0
    %2267 = vmatprep.subr.bf16.mxu0 0
    %2268 = vmatpush1.bf16.msra.mxu0 0
    %2269 = vmatprep.mubr.bf16.mxu0 0
    %2270 = vmatmul.mubr.bf16.gmra.mrb[0].mxu0 %v2236
    %v2271 = vpop.f32.mrb[0].mxu0
    %v2272 = vadd.f32 0.0, %v2271
    %v2273 = vpop.f32.mrb[0].mxu0
    %v2274 = vadd.f32 0.0, %v2273
    %v2275 = vpop.f32.mrb[0].mxu0
    %v2276 = vpop.f32.mrb[0].mxu0
    %2277 = vdwg.mxu0
    %2278 = vmatprep.subr.bf16.mxu0 %v513
    %2279 = vmatpush1.bf16.msra.mxu0 %v512
    %2280 = vmatprep.subr.bf16.mxu0 %v517
    %2281 = vmatpush1.bf16.msra.mxu0 %v516
    %2282 = vmatprep.subr.bf16.mxu0 %v521
    %2283 = vmatpush1.bf16.msra.mxu0 %v520
    %2284 = vmatprep.subr.bf16.mxu0 %v525
    %2285 = vmatpush1.bf16.msra.mxu0 %v524
    %2286 = vmatprep.subr.bf16.mxu0 %v529
    %2287 = vmatpush1.bf16.msra.mxu0 %v528
    %2288 = vmatprep.subr.bf16.mxu0 %v533
    %2289 = vmatpush1.bf16.msra.mxu0 %v532
    %2290 = vmatprep.subr.bf16.mxu0 %v537
    %2291 = vmatpush1.bf16.msra.mxu0 %v536
    %2292 = vmatprep.subr.bf16.mxu0 %v541
    %2293 = vmatpush1.bf16.msra.mxu0 %v540
    %2294 = vmatprep.subr.bf16.mxu0 0
    %2295 = vmatpush1.bf16.msra.mxu0 0
    %2296 = vmatprep.subr.bf16.mxu0 0
    %2297 = vmatpush1.bf16.msra.mxu0 0
    %2298 = vmatprep.subr.bf16.mxu0 0
    %2299 = vmatpush1.bf16.msra.mxu0 0
    %2300 = vmatprep.subr.bf16.mxu0 0
    %2301 = vmatpush1.bf16.msra.mxu0 0
    %2302 = vmatprep.subr.bf16.mxu0 0
    %2303 = vmatpush1.bf16.msra.mxu0 0
    %2304 = vmatprep.subr.bf16.mxu0 0
    %2305 = vmatpush1.bf16.msra.mxu0 0
    %2306 = vmatprep.subr.bf16.mxu0 0
    %2307 = vmatpush1.bf16.msra.mxu0 0
    %2308 = vmatprep.subr.bf16.mxu0 0
    %2309 = vmatpush1.bf16.msra.mxu0 0
    %2310 = vmatprep.mubr.bf16.mxu0 0
    %2311 = vmatmul.mubr.bf16.gmra.mrb[0].mxu0 %v2236
    %v2312 = vpop.f32.mrb[0].mxu0
    %v2313 = vadd.f32 0.0, %v2312
    %v2314 = vpop.f32.mrb[0].mxu0
    %v2315 = vadd.f32 0.0, %v2314
    %v2316 = vpop.f32.mrb[0].mxu0
    %v2317 = vpop.f32.mrb[0].mxu0
    %2318 = vdwg.mxu0
    %v2319 = vadd.f32 %v2232, %v2272
    %v2320 = vadd.f32 %v2233, %v2274
    %v2321 = vadd.f32 %v2234, %v2313
    %v2322 = vadd.f32 %v2235, %v2315
    %v2323 = vmul.f32 %v2319, 0.5
    %v2324 = vtanh.pop %v2323
    %v2325 = vmul.f32 %v2324, 0.5
    %v2326 = vadd.f32 %v2325, 0.5
    %v2327 = vmul.f32 %v2320, 0.5
    %v2328 = vtanh.pop %v2327
    %v2329 = vmul.f32 %v2328, 0.5
    %v2330 = vadd.f32 %v2329, 0.5
    %v2331 = vtanh.pop %v2321
    %v2332 = vmul.f32 %v2322, 0.5
    %v2333 = vtanh.pop %v2332
    %v2334 = vmul.f32 %v2333, 0.5
    %v2335 = vadd.f32 %v2334, 0.5
    %v2336 = vmul.f32 %v2330, %v2113
    %v2337 = vmul.f32 %v2326, %v2331
    %v2338 = vadd.f32 %v2336, %v2337
    %v2339 = vtanh.pop %v2338
    %v2340 = vmul.f32 %v2335, %v2339
    %v2341 = vsel %vm403, %v2340, %v2112
    %v2342 = vsel %vm403, %v2340, 0.0
    %2343 = vst [vmem:[#allocation8 + $0x8] sm:$0xff] %v2342
    %2344 = vst [vmem:[#allocation9] sm:$0xff] %v2227
    %2345 = vst [vmem:[#allocation9 + $0x8] sm:$0xff] %v2341
    // Predicated region
    $region30: #{tpu_custom_call.1} parent=1 // pred_check
      _
    $region31: #{tpu_custom_call.1} parent=1 // pred_check_branch
      %2347 = sbr.rel (0) target = $region33
    $region32: #{tpu_custom_call.1} parent=1 // pred_region
      %s2349 = ssub.s32 2048, 2048
      %2350 = vsyncadd [#allocation4], %s2349
      %s2351 = sshll.u32 [#allocation8], 4
      %s2352 = int_to_ptr.vmem [resolvable:$true] %s2351
      %2357 = dma.vmem_to_hbm [thread:$0]  %s2352, 2048, %s4, [#allocation4], 256, 256, 16
    $region33: #{tpu_custom_call.1} parent=1 // pred_fallthru
      _
    // Predicated region
    $region34: #{tpu_custom_call.1} parent=1 // pred_check
      _
    $region35: #{tpu_custom_call.1} parent=1 // pred_check_branch
      %2359 = sbr.rel (0) target = $region37
    $region36: #{tpu_custom_call.1} parent=1 // pred_region
      %s2361 = ssub.s32 256, 256
      %2362 = vsyncadd [#allocation10], %s2361
      %s2364 = sshll.u32 [#allocation9], 4
      %s2365 = int_to_ptr.vmem [resolvable:$true] %s2364
      %2367 = dma.vmem_to_hbm [thread:$0]  %s2365, 256, %s5, [#allocation10]
    $region37: #{tpu_custom_call.1} parent=1 // pred_fallthru
      _
    // Predicated region
    $region38: #{tpu_custom_call.1} parent=1 // pred_check
      _
    $region39: #{tpu_custom_call.1} parent=1 // pred_check_branch
      %2369 = sbr.rel (0) target = $region41
    $region40: #{tpu_custom_call.1} parent=1 // pred_region
      %2370 = dma.done [#allocation4], 2048
    $region41: #{tpu_custom_call.1} parent=1 // pred_fallthru
      _
    // Predicated region
    $region42: #{tpu_custom_call.1} parent=1 // pred_check
      _
    $region43: #{tpu_custom_call.1} parent=1 // pred_check_branch
      %2372 = sbr.rel (0) target = $region45
    $region44: #{tpu_custom_call.1} parent=1 // pred_region
      %2373 = dma.done [#allocation10], 256
    $region45: #{tpu_custom_call.1} parent=1 // pred_fallthru
      _
    %2374 = vsyncpa [#allocation3], 1
    %2375 = vsyncpa [#allocation6], 1
    %2376 = vsyncpa [#allocation4], 1
    %2377 = vsyncpa [#allocation10], 1

</llo_original>
